<compile_context>
chip_gen: v5e
topology: v5e:2x2
jax: 0.10.0
libtpu: 0.0.40
codegen_flags: <defaults>
</compile_context>

<pallas_src>
import functools
import math

import jax
import jax.numpy as jnp
from jax.experimental import pallas as pl
from jax.experimental.pallas import tpu as pltpu

LANE = 128


def bag_attention_kernel(rep_ref, w1_ref, b1_ref, w2_ref, b2_ref,
                         wfc_ref, bfc_ref, out_ref, *, bags_per_tile, bag_size):
    B, n = bags_per_tile, bag_size
    rep = rep_ref[...]                                   # (B*n, H) f32
    w1, b1 = w1_ref[...], b1_ref[...]
    w2, b2 = w2_ref[...], b2_ref[...]
    wfc, bfc = wfc_ref[...], bfc_ref[...]
    H = rep.shape[-1]
    Cp = wfc.shape[-1]                                   # lane-padded class dim

    def fc_front(x):
        h = jnp.maximum(
            jnp.dot(x, w1, preferred_element_type=jnp.float32) + b1, 0.0)
        return jnp.maximum(
            jnp.dot(h, w2, preferred_element_type=jnp.float32) + b2, 0.0)

    # Attention scores for every sentence in the tile (single big GEMMs).
    rep_for_att = fc_front(rep)                                          # (B*n, H2p)
    att = jnp.dot(rep_for_att, wfc,
                  preferred_element_type=jnp.float32)                    # (B*n, Cp)

    # Per-bag softmax over the bag (sentence) dimension, per relation class.
    att3 = att.reshape(B, n, Cp)
    att3 = att3 - jnp.max(att3, axis=1, keepdims=True)
    e = jnp.exp(att3)
    inv = pl.reciprocal(jnp.sum(e, axis=1, keepdims=True), approx=True)  # EUP
    s = e * inv                                                          # (B, n, Cp)

    # Per-relation bag representation: contract the bag dim -> (B, Cp, H).
    rep3 = rep.reshape(B, n, H)
    r = jnp.einsum('bnc,bnh->bch', s, rep3,
                   preferred_element_type=jnp.float32)

    # Classifier on every (bag, relation) rep as one (B*Cp, .) GEMM chain.
    h = fc_front(r.reshape(B * Cp, H))                                   # (B*Cp, H2p)
    logits = jnp.dot(h, wfc, preferred_element_type=jnp.float32) + bfc   # (B*Cp, Cp)
    logits3 = logits.reshape(B, Cp, Cp)

    # diag(softmax(logits, -1)) without materializing the full prob matrix.
    # Padded class columns carry a -1e30 bias -> exp underflows to 0 in the sum.
    row = jax.lax.broadcasted_iota(jnp.int32, (B, Cp, Cp), 1)
    col = jax.lax.broadcasted_iota(jnp.int32, (B, Cp, Cp), 2)
    diag = jnp.sum(jnp.where(row == col, logits3, 0.0), axis=-1)         # (B, Cp)
    rmax = jnp.max(logits3, axis=-1)                                     # (B, Cp)
    rsum = jnp.sum(jnp.exp(logits3 - rmax[..., None]), axis=-1)          # (B, Cp)
    probs_diag = jnp.exp(diag - rmax) * pl.reciprocal(rsum, approx=True)

    out_ref[0, :, :] = probs_diag.astype(out_ref.dtype)                  # lane-dense


def bag_attention_forward(rep, params, *, bag_size, bags_per_tile=None):
    """Pallas wrapper.  rep: (num_bags*bag_size, hidden) float32."""
    w1, b1, w2, b2, wfc, bfc = params
    N, H = rep.shape
    assert N % bag_size == 0
    num_bags = N // bag_size
    H2 = w1.shape[0]
    C = wfc.shape[0]

    H2p = ((H2 + LANE - 1) // LANE) * LANE
    Cp = ((C + LANE - 1) // LANE) * LANE

    # Pick bags-per-tile: aim for >= ~512 rows/step, but keep >= 2 grid steps so
    # v7x's two TensorCores both get work ("parallel" grid axis).
    if bags_per_tile is None:
        bpt = max(1, 512 // bag_size)
        if num_bags >= 2:
            bpt = min(bpt, -(-num_bags // 2))
        bpt = min(bpt, num_bags)
    else:
        bpt = bags_per_tile
    need = 8 // math.gcd(8, bag_size)        # keep rep-block rows a multiple of 8
    bpt = ((bpt + need - 1) // need) * need

    num_tiles = -(-num_bags // bpt)
    nb_pad = num_tiles * bpt
    if nb_pad != num_bags:                   # pad with all-zero bags; sliced off below
        rep = jnp.pad(rep, ((0, (nb_pad - num_bags) * bag_size), (0, 0)))

    f32 = jnp.float32
    rep = rep.astype(f32)
    # glue: pre-transpose weights to (in, out) and zero-pad H2/C up to 128 lanes.
    w1t = jnp.zeros((H, H2p), f32).at[:, :H2].set(w1.T.astype(f32))
    b1r = jnp.zeros((1, H2p), f32).at[:, :H2].set(b1.astype(f32))
    w2t = jnp.zeros((H2p, H2p), f32).at[:H2, :H2].set(w2.T.astype(f32))
    b2r = jnp.zeros((1, H2p), f32).at[:, :H2].set(b2.astype(f32))
    wfct = jnp.zeros((H2p, Cp), f32).at[:H2, :C].set(wfc.T.astype(f32))
    # Padded class columns get a huge negative bias so they drop out of the softmax.
    bfcr = jnp.full((1, Cp), -1e30, f32).at[:, :C].set(bfc.astype(f32))

    kernel = functools.partial(bag_attention_kernel,
                               bags_per_tile=bpt, bag_size=bag_size)
    rows = bpt * bag_size

    out = pl.pallas_call(
        kernel,
        out_shape=jax.ShapeDtypeStruct((num_tiles, bpt, Cp), f32),
        grid_spec=pltpu.PrefetchScalarGridSpec(
            num_scalar_prefetch=0,
            grid=(num_tiles,),
            in_specs=[
                pl.BlockSpec((rows, H), lambda i: (i, 0)),   # rep: many bags per step
                # Constant block index -> weights/biases DMA'd once, VMEM-resident.
                pl.BlockSpec((H, H2p), lambda i: (0, 0)),    # W1^T (lane-padded)
                pl.BlockSpec((1, H2p), lambda i: (0, 0)),    # b1
                pl.BlockSpec((H2p, H2p), lambda i: (0, 0)),  # W2^T
                pl.BlockSpec((1, H2p), lambda i: (0, 0)),    # b2
                pl.BlockSpec((H2p, Cp), lambda i: (0, 0)),   # Wfc^T
                pl.BlockSpec((1, Cp), lambda i: (0, 0)),     # bfc (padded cols = -1e30)
            ],
            out_specs=pl.BlockSpec((1, bpt, Cp), lambda i: (i, 0, 0)),  # lane-dense
        ),
        compiler_params=pltpu.CompilerParams(
            dimension_semantics=("parallel",)),
    )(rep, w1t, b1r, w2t, b2r, wfct, bfcr)

    return out.reshape(nb_pad, Cp)[:num_bags, :C]


def bag_attention_reference(rep, params, *, bag_size):
    """Plain-JAX reference mirroring the PyTorch eval-path semantics."""
    w1, b1, w2, b2, wfc, bfc = params

    def fc_front(x):
        h = jnp.maximum(x @ w1.T + b1, 0.0)
        return jnp.maximum(h @ w2.T + b2, 0.0)

    N, _ = rep.shape
    num_bags = N // bag_size
    rep_for_att = fc_front(rep)
    att_score = rep_for_att @ wfc.T                              # (N, C)
    outs = []
    for i in range(num_bags):
        bag = rep[i * bag_size:(i + 1) * bag_size]               # (n, H)
        a = att_score[i * bag_size:(i + 1) * bag_size].T         # (C, n)
        s = jax.nn.softmax(a, axis=-1)
        r = s @ bag                                              # (C, H)
        h = fc_front(r)
        logits = h @ wfc.T + bfc                                 # (C, C)
        p = jax.nn.softmax(logits, axis=-1)
        outs.append(jnp.diag(p))
    return jnp.stack(outs, 0)


def init_params(key, hidden, num_class):
    """Deterministic synthetic params matching nn.Linear shapes in __init__."""
    h2 = hidden // 2
    k1, k2, k3, k4, k5, k6 = jax.random.split(key, 6)

    def lin(kw, kb, out_f, in_f):
        bound = 1.0 / (in_f ** 0.5)
        w = jax.random.uniform(kw, (out_f, in_f), jnp.float32, -bound, bound)
        b = jax.random.uniform(kb, (out_f,), jnp.float32, -bound, bound)
        return w, b

    w1, b1 = lin(k1, k2, h2, hidden)       # fc_front[0]: hidden -> hidden//2
    w2, b2 = lin(k3, k4, h2, h2)           # fc_front[2]: hidden//2 -> hidden//2
    wfc, bfc = lin(k5, k6, num_class, h2)  # fc: hidden//2 -> num_class
    return (w1, b1, w2, b2, wfc, bfc)


if __name__ == "__main__":
    # TODO(synk): the sentence_encoder, dropout, and the stochastic training losses
    # (CrossEntropy / SupConLoss / mixup / contrastive cl / js_div gating) are
    # host-side training machinery with no clean single-kernel Pallas equivalent;
    # the kernel implements the bag-attention aggregation + classifier hot path.
    hidden = 64
    num_class = 16
    bag_size = 8
    num_bags = 16

    key = jax.random.PRNGKey(0)
    k_rep, k_par = jax.random.split(key)
    rep = jax.random.normal(k_rep, (num_bags * bag_size, hidden), jnp.float32)
    params = init_params(k_par, hidden, num_class)

    out = bag_attention_forward(rep, params, bag_size=bag_size)
    out = jax.block_until_ready(out)

    ref = bag_attention_reference(rep, params, bag_size=bag_size)
    ref = jax.block_until_ready(ref)

    assert out.shape == (num_bags, num_class)
    # Tolerance leaves headroom for the EUP approx-reciprocal softmax denominators.
    err = float(jnp.max(jnp.abs(out - ref)))
    assert err < 5e-3, f"mismatch vs reference: {err}"
    print("KERNEL_OK")
</pallas_src>

<mosaic_0001>
module attributes {stable_mosaic.version = 11 : i64} {
  func.func @bag_attention_kernel(%arg0: i32, %arg1: memref<64x64xf32, #tpu.memory_space<vmem>>, %arg2: memref<64x128xf32, #tpu.memory_space<vmem>>, %arg3: memref<1x128xf32, #tpu.memory_space<vmem>>, %arg4: memref<128x128xf32, #tpu.memory_space<vmem>>, %arg5: memref<1x128xf32, #tpu.memory_space<vmem>>, %arg6: memref<128x128xf32, #tpu.memory_space<vmem>>, %arg7: memref<1x128xf32, #tpu.memory_space<vmem>>, %arg8: memref<1x8x128xf32, #tpu.memory_space<vmem>>) attributes {dimension_semantics = [#tpu.dimension_semantics<parallel>], iteration_bounds = array<i64: 2>, scalar_prefetch = 0 : i64, scratch_operands = 0 : i64, tpu.core_type = #tpu.core_type<tc>, window_params = [{transform_indices = @transform_0, window_bounds = array<i64: 64, 64>}, {pipeline_mode = #tpu.pipeline_mode<synchronous>, transform_indices = @transform_1, window_bounds = array<i64: 64, 128>}, {pipeline_mode = #tpu.pipeline_mode<synchronous>, transform_indices = @transform_2, window_bounds = array<i64: 1, 128>}, {pipeline_mode = #tpu.pipeline_mode<synchronous>, transform_indices = @transform_3, window_bounds = array<i64: 128, 128>}, {pipeline_mode = #tpu.pipeline_mode<synchronous>, transform_indices = @transform_4, window_bounds = array<i64: 1, 128>}, {pipeline_mode = #tpu.pipeline_mode<synchronous>, transform_indices = @transform_5, window_bounds = array<i64: 128, 128>}, {pipeline_mode = #tpu.pipeline_mode<synchronous>, transform_indices = @transform_6, window_bounds = array<i64: 1, 128>}, {transform_indices = @transform_7, window_bounds = array<i64: 1, 8, 128>}]} {
    %c0 = arith.constant 0 : index
    %c0_0 = arith.constant 0 : index
    %0 = vector.load %arg1[%c0, %c0_0] : memref<64x64xf32, #tpu.memory_space<vmem>>, vector<64x64xf32>
    %c0_1 = arith.constant 0 : index
    %c0_2 = arith.constant 0 : index
    %1 = vector.load %arg2[%c0_1, %c0_2] : memref<64x128xf32, #tpu.memory_space<vmem>>, vector<64x128xf32>
    %c0_3 = arith.constant 0 : index
    %c0_4 = arith.constant 0 : index
    %2 = vector.load %arg3[%c0_3, %c0_4] : memref<1x128xf32, #tpu.memory_space<vmem>>, vector<1x128xf32>
    %c0_5 = arith.constant 0 : index
    %c0_6 = arith.constant 0 : index
    %3 = vector.load %arg4[%c0_5, %c0_6] : memref<128x128xf32, #tpu.memory_space<vmem>>, vector<128x128xf32>
    %c0_7 = arith.constant 0 : index
    %c0_8 = arith.constant 0 : index
    %4 = vector.load %arg5[%c0_7, %c0_8] : memref<1x128xf32, #tpu.memory_space<vmem>>, vector<1x128xf32>
    %c0_9 = arith.constant 0 : index
    %c0_10 = arith.constant 0 : index
    %5 = vector.load %arg6[%c0_9, %c0_10] : memref<128x128xf32, #tpu.memory_space<vmem>>, vector<128x128xf32>
    %c0_11 = arith.constant 0 : index
    %c0_12 = arith.constant 0 : index
    %6 = vector.load %arg7[%c0_11, %c0_12] : memref<1x128xf32, #tpu.memory_space<vmem>>, vector<1x128xf32>
    %cst = arith.constant dense<0.000000e+00> : vector<64x128xf32>
    %7 = tpu.matmul %0, %1, %cst {dimension_numbers = #tpu.dot_dimension_numbers<[1], [0], [0], [1], [0, 0, 1, 1], [], []>} : vector<64x64xf32>, vector<64x128xf32>, vector<64x128xf32> -> vector<64x128xf32>
    %8 = vector.broadcast %2 : vector<1x128xf32> to vector<64x128xf32>
    %9 = arith.addf %7, %8 : vector<64x128xf32>
    %cst_13 = arith.constant 0.000000e+00 : f32
    %10 = vector.broadcast %cst_13 : f32 to vector<64x128xf32>
    %11 = arith.maximumf %9, %10 : vector<64x128xf32>
    %cst_14 = arith.constant dense<0.000000e+00> : vector<64x128xf32>
    %12 = tpu.matmul %11, %3, %cst_14 {dimension_numbers = #tpu.dot_dimension_numbers<[1], [0], [0], [1], [0, 0, 1, 1], [], []>} : vector<64x128xf32>, vector<128x128xf32>, vector<64x128xf32> -> vector<64x128xf32>
    %13 = vector.broadcast %4 : vector<1x128xf32> to vector<64x128xf32>
    %14 = arith.addf %12, %13 : vector<64x128xf32>
    %cst_15 = arith.constant 0.000000e+00 : f32
    %15 = vector.broadcast %cst_15 : f32 to vector<64x128xf32>
    %16 = arith.maximumf %14, %15 : vector<64x128xf32>
    %cst_16 = arith.constant dense<0.000000e+00> : vector<64x128xf32>
    %17 = tpu.matmul %16, %5, %cst_16 {dimension_numbers = #tpu.dot_dimension_numbers<[1], [0], [0], [1], [0, 0, 1, 1], [], []>} : vector<64x128xf32>, vector<128x128xf32>, vector<64x128xf32> -> vector<64x128xf32>
    %18 = vector.shape_cast %17 : vector<64x128xf32> to vector<8x8x128xf32>
    %cst_17 = arith.constant dense<0xFF800000> : vector<8x128xf32>
    %19 = vector.multi_reduction <maximumf>, %18, %cst_17 [1] : vector<8x8x128xf32> to vector<8x128xf32>
    %20 = vector.shape_cast %19 : vector<8x128xf32> to vector<8x1x128xf32>
    %21 = vector.broadcast %20 : vector<8x1x128xf32> to vector<8x8x128xf32>
    %22 = arith.subf %18, %21 : vector<8x8x128xf32>
    %23 = math.exp %22 : vector<8x8x128xf32>
    %cst_18 = arith.constant dense<0.000000e+00> : vector<8x128xf32>
    %24 = vector.multi_reduction <add>, %23, %cst_18 [1] : vector<8x8x128xf32> to vector<8x128xf32>
    %25 = vector.shape_cast %24 : vector<8x128xf32> to vector<8x1x128xf32>
    %26 = tpu.reciprocal %25 {approx = true} : vector<8x1x128xf32> -> vector<8x1x128xf32>
    %27 = vector.broadcast %26 : vector<8x1x128xf32> to vector<8x8x128xf32>
    %28 = arith.mulf %23, %27 : vector<8x8x128xf32>
    %29 = vector.shape_cast %0 : vector<64x64xf32> to vector<8x8x64xf32>
    "tpu.trace_start"() <{level = 10 : i32, message = "bnc,bnh->bch"}> : () -> ()
    %cst_19 = arith.constant dense<0.000000e+00> : vector<8x128x64xf32>
    %30 = tpu.matmul %28, %29, %cst_19 {dimension_numbers = #tpu.dot_dimension_numbers<[1], [1], [2], [2], [0, 0, 0, 2, 1, 2], [0], [0]>} : vector<8x8x128xf32>, vector<8x8x64xf32>, vector<8x128x64xf32> -> vector<8x128x64xf32>
    "tpu.trace_stop"() : () -> ()
    %31 = vector.shape_cast %30 : vector<8x128x64xf32> to vector<1024x64xf32>
    %cst_20 = arith.constant dense<0.000000e+00> : vector<1024x128xf32>
    %32 = tpu.matmul %31, %1, %cst_20 {dimension_numbers = #tpu.dot_dimension_numbers<[1], [0], [0], [1], [0, 0, 1, 1], [], []>} : vector<1024x64xf32>, vector<64x128xf32>, vector<1024x128xf32> -> vector<1024x128xf32>
    %33 = vector.broadcast %2 : vector<1x128xf32> to vector<1024x128xf32>
    %34 = arith.addf %32, %33 : vector<1024x128xf32>
    %cst_21 = arith.constant 0.000000e+00 : f32
    %35 = vector.broadcast %cst_21 : f32 to vector<1024x128xf32>
    %36 = arith.maximumf %34, %35 : vector<1024x128xf32>
    %cst_22 = arith.constant dense<0.000000e+00> : vector<1024x128xf32>
    %37 = tpu.matmul %36, %3, %cst_22 {dimension_numbers = #tpu.dot_dimension_numbers<[1], [0], [0], [1], [0, 0, 1, 1], [], []>} : vector<1024x128xf32>, vector<128x128xf32>, vector<1024x128xf32> -> vector<1024x128xf32>
    %38 = vector.broadcast %4 : vector<1x128xf32> to vector<1024x128xf32>
    %39 = arith.addf %37, %38 : vector<1024x128xf32>
    %cst_23 = arith.constant 0.000000e+00 : f32
    %40 = vector.broadcast %cst_23 : f32 to vector<1024x128xf32>
    %41 = arith.maximumf %39, %40 : vector<1024x128xf32>
    %cst_24 = arith.constant dense<0.000000e+00> : vector<1024x128xf32>
    %42 = tpu.matmul %41, %5, %cst_24 {dimension_numbers = #tpu.dot_dimension_numbers<[1], [0], [0], [1], [0, 0, 1, 1], [], []>} : vector<1024x128xf32>, vector<128x128xf32>, vector<1024x128xf32> -> vector<1024x128xf32>
    %43 = vector.broadcast %6 : vector<1x128xf32> to vector<1024x128xf32>
    %44 = arith.addf %42, %43 : vector<1024x128xf32>
    %45 = vector.shape_cast %44 : vector<1024x128xf32> to vector<8x128x128xf32>
    %46 = tpu.iota {dimensions = array<i32: 1>} : vector<8x128x128xi32>
    %47 = tpu.iota {dimensions = array<i32: 2>} : vector<8x128x128xi32>
    %48 = arith.cmpi eq, %46, %47 : vector<8x128x128xi32>
    %cst_25 = arith.constant 0.000000e+00 : f32
    %49 = vector.broadcast %cst_25 : f32 to vector<8x128x128xf32>
    %50 = arith.select %48, %45, %49 : vector<8x128x128xi1>, vector<8x128x128xf32>
    %cst_26 = arith.constant dense<0.000000e+00> : vector<8x128xf32>
    %51 = vector.multi_reduction <add>, %50, %cst_26 [2] : vector<8x128x128xf32> to vector<8x128xf32>
    %cst_27 = arith.constant dense<0xFF800000> : vector<8x128xf32>
    %52 = vector.multi_reduction <maximumf>, %45, %cst_27 [2] : vector<8x128x128xf32> to vector<8x128xf32>
    %53 = vector.shape_cast %52 : vector<8x128xf32> to vector<8x128x1xf32>
    %54 = vector.broadcast %53 : vector<8x128x1xf32> to vector<8x128x128xf32>
    %55 = arith.subf %45, %54 : vector<8x128x128xf32>
    %56 = math.exp %55 : vector<8x128x128xf32>
    %cst_28 = arith.constant dense<0.000000e+00> : vector<8x128xf32>
    %57 = vector.multi_reduction <add>, %56, %cst_28 [2] : vector<8x128x128xf32> to vector<8x128xf32>
    %58 = arith.subf %51, %52 : vector<8x128xf32>
    %59 = math.exp %58 : vector<8x128xf32>
    %60 = tpu.reciprocal %57 {approx = true} : vector<8x128xf32> -> vector<8x128xf32>
    %61 = arith.mulf %59, %60 : vector<8x128xf32>
    %c0_29 = arith.constant 0 : index
    %c0_30 = arith.constant 0 : index
    %c0_31 = arith.constant 0 : index
    %62 = vector.load %arg8[%c0_29, %c0_30, %c0_31] : memref<1x8x128xf32, #tpu.memory_space<vmem>>, vector<1x8x128xf32>
    %63 = vector.shape_cast %62 : vector<1x8x128xf32> to vector<8x128xf32>
    %64 = vector.shape_cast %61 : vector<8x128xf32> to vector<1x8x128xf32>
    tpu.vector_store %arg8[%c0_29, %c0_30, %c0_31], %64 {strides = array<i32>} : memref<1x8x128xf32, #tpu.memory_space<vmem>>, vector<1x8x128xf32>,
    return
  }
  func.func @transform_0(%arg0: i32) -> (i32, i32) {
    %c0_i32 = arith.constant 0 : i32
    %c0_i32_0 = arith.constant 0 : i32
    return %arg0, %c0_i32 : i32, i32
  }
  func.func @transform_1(%arg0: i32) -> (i32, i32) {
    %c0_i32 = arith.constant 0 : i32
    %c0_i32_0 = arith.constant 0 : i32
    %c0_i32_1 = arith.constant 0 : i32
    return %c0_i32, %c0_i32_0 : i32, i32
  }
  func.func @transform_2(%arg0: i32) -> (i32, i32) {
    %c0_i32 = arith.constant 0 : i32
    %c0_i32_0 = arith.constant 0 : i32
    %c0_i32_1 = arith.constant 0 : i32
    return %c0_i32, %c0_i32_0 : i32, i32
  }
  func.func @transform_3(%arg0: i32) -> (i32, i32) {
    %c0_i32 = arith.constant 0 : i32
    %c0_i32_0 = arith.constant 0 : i32
    %c0_i32_1 = arith.constant 0 : i32
    return %c0_i32, %c0_i32_0 : i32, i32
  }
  func.func @transform_4(%arg0: i32) -> (i32, i32) {
    %c0_i32 = arith.constant 0 : i32
    %c0_i32_0 = arith.constant 0 : i32
    %c0_i32_1 = arith.constant 0 : i32
    return %c0_i32, %c0_i32_0 : i32, i32
  }
  func.func @transform_5(%arg0: i32) -> (i32, i32) {
    %c0_i32 = arith.constant 0 : i32
    %c0_i32_0 = arith.constant 0 : i32
    %c0_i32_1 = arith.constant 0 : i32
    return %c0_i32, %c0_i32_0 : i32, i32
  }
  func.func @transform_6(%arg0: i32) -> (i32, i32) {
    %c0_i32 = arith.constant 0 : i32
    %c0_i32_0 = arith.constant 0 : i32
    %c0_i32_1 = arith.constant 0 : i32
    return %c0_i32, %c0_i32_0 : i32, i32
  }
  func.func @transform_7(%arg0: i32) -> (i32, i32, i32) {
    %c0_i32 = arith.constant 0 : i32
    %c0_i32_0 = arith.constant 0 : i32
    %c0_i32_1 = arith.constant 0 : i32
    return %arg0, %c0_i32, %c0_i32_0 : i32, i32, i32
  }
}

</mosaic_0001>

<llo_original>
// kernel: tpu_custom_call.1
$region0: #{tpu_custom_call.1}
  #allocation0 [shape = 'u32[]', space=smem, size = 0x4, offset = 0x4, fixed_abs, tag = 'smem constant byte address 0x4 - core index']
  #allocation1 [shape = 'u32[72,128]{1,0:T(1,128)}', space=vmem, size = 0x9000, scoped, tag = 'internal scratch']
  %s0 = inlined_call_operand.vmem [shape: f32[128,64], index: 0, kind: input, shape index: {}]
  %s1 = inlined_call_operand.vmem [shape: f32[64,128], index: 1, kind: input, shape index: {}]
  %s2 = inlined_call_operand.vmem [shape: f32[1,128], index: 2, kind: input, shape index: {}]
  %s3 = inlined_call_operand.vmem [shape: f32[128,128], index: 3, kind: input, shape index: {}]
  %s4 = inlined_call_operand.vmem [shape: f32[1,128], index: 4, kind: input, shape index: {}]
  %s5 = inlined_call_operand.hbm [shape: f32[128,128], index: 5, kind: input, shape index: {}]
  %s6 = inlined_call_operand.vmem [shape: f32[1,128], index: 6, kind: input, shape index: {}]
  %s7 = inlined_call_operand.hbm [shape: f32[2,8,128], index: 7, kind: output, shape index: {}]
  %s8 = sld [smem:[#allocation0]]
  $region65: #{tpu_custom_call.1} parent=0
    _
  %s10 = ssub.s32 1, %s8
  %s11 = scalar_select 0, %s10, %s8
  $region1: #{tpu_custom_call.1} parent=0
    #allocation2 [shape = 'u8[65536]{0}', space=vmem, size = 0x10000, scoped, tag = 'input window, operand 5, single buffered']
    #allocation3 [shape = 's32[2]{0}', space=sflag, size = 0x8, scoped, tag = 'scoped memory for tpu_custom_call.1']
    #allocation4 [shape = 's32[2]{0}', space=sflag, size = 0x8, scoped, tag = 'scoped memory for tpu_custom_call.1']
    #allocation5 [shape = 'u8[8192]{0}', space=vmem, size = 0x2000, scoped, tag = 'output window, operand 0']
    %12 = vsyncpa [#allocation3], 0
    %13 = vsyncpa [#allocation4], 0
    %s14 = scalar_lea.sflag [#allocation4], 1
    %15 = vsyncpa %s14, 0
    loop: start=0, step=1, limit=4
    $region2: #{tpu_custom_call.1} parent=1 // loop_pre_header
      _
    $region3: #{tpu_custom_call.1} parent=1 // loop_header
      %s17 = sphi 0, %s21
      %p18 = scmp.ge.s32.totalorder %s17, 4
      %s27 = sphi 0, %s29
      %s30 = sphi 0, %s27
      %s31 = sphi 0, %s30
      %s47 = sphi 0, %s31
      %s51 = sphi 0, %s51
      %s53 = sphi 0, %s51
      %s54 = sphi 0, %s53
      %s68 = sphi 0, %s54
      %s72 = sphi 0, %s72
      %s74 = sphi 0, %s72
      %s75 = sphi 0, %s74
      %s89 = sphi 0, %s75
      %s93 = sphi 0, %s93
      %s95 = sphi 0, %s93
      %s96 = sphi 0, %s95
      %s110 = sphi 0, %s96
      %s114 = sphi 0, %s114
      %s116 = sphi 0, %s114
      %s117 = sphi 0, %s116
      %s131 = sphi 0, %s117
      %s135 = sphi 0, %s135
      %s137 = sphi 0, %s135
      %s138 = sphi 0, %s137
      %s152 = sphi 0, %s138
      %s156 = sphi 0, %s156
      %s158 = sphi 0, %s156
      %s159 = sphi 0, %s158
      %s173 = sphi 0, %s159
      %s179 = sphi 0, %s181
      %s182 = sphi 0, %s179
      %s183 = sphi 0, %s182
      %s199 = sphi 0, %s183
    $region4: #{tpu_custom_call.1} parent=1 // loop_header_branch
      %20 = sbr.rel (%p18) target = $region8
    $region5: #{tpu_custom_call.1} parent=1 // loop_body
      %s22 = ssub.s32 %s17, 1
      %s23 = ssub.s32 %s17, 2
      %s24 = sadd.s32 %s17, 1
      %s25 = ssub.s32 %s17, %s24
      %p26 = scmp.eq.s32.totalorder %s25, 0
      %s28 = sadd.s32 %s27, 1
      %s29 = scalar_select %p26, %s27, %s28
      %p32 = pneg %p26
      %p33 = scmp.eq.s32.totalorder %s17, 1
      %p34 = por %p32, %p33
      %p35 = scmp.ne.s32.totalorder %s27, %s30
      %p36 = scmp.eq.s32.totalorder %s17, 0
      %p37 = por %p35, %p36
      %p38 = scmp.ne.s32.totalorder %s27, %s30
      %p39 = scmp.eq.s32.totalorder %s22, 1
      %p40 = por %p38, %p39
      %p41 = scmp.ne.s32.totalorder %s30, %s31
      %p42 = scmp.eq.s32.totalorder %s22, 0
      %p43 = por %p41, %p42
      %p44 = scmp.ne.s32.totalorder %s30, %s31
      %p45 = scmp.eq.s32.totalorder %s23, 1
      %p46 = por %p44, %p45
      %p48 = scmp.ne.s32.totalorder %s31, %s47
      %p49 = scmp.eq.s32.totalorder %s23, 0
      %p50 = por %p48, %p49
      %s52 = sadd.s32 %s51, 1
      %p55 = scmp.eq.s32.totalorder %s17, 1
      %p56 = scmp.ne.s32.totalorder %s51, %s53
      %p57 = scmp.eq.s32.totalorder %s17, 0
      %p58 = por %p56, %p57
      %p59 = scmp.ne.s32.totalorder %s51, %s53
      %p60 = scmp.eq.s32.totalorder %s22, 1
      %p61 = por %p59, %p60
      %p62 = scmp.ne.s32.totalorder %s53, %s54
      %p63 = scmp.eq.s32.totalorder %s22, 0
      %p64 = por %p62, %p63
      %p65 = scmp.ne.s32.totalorder %s53, %s54
      %p66 = scmp.eq.s32.totalorder %s23, 1
      %p67 = por %p65, %p66
      %p69 = scmp.ne.s32.totalorder %s54, %s68
      %p70 = scmp.eq.s32.totalorder %s23, 0
      %p71 = por %p69, %p70
      %s73 = sadd.s32 %s72, 1
      %p76 = scmp.eq.s32.totalorder %s17, 1
      %p77 = scmp.ne.s32.totalorder %s72, %s74
      %p78 = scmp.eq.s32.totalorder %s17, 0
      %p79 = por %p77, %p78
      %p80 = scmp.ne.s32.totalorder %s72, %s74
      %p81 = scmp.eq.s32.totalorder %s22, 1
      %p82 = por %p80, %p81
      %p83 = scmp.ne.s32.totalorder %s74, %s75
      %p84 = scmp.eq.s32.totalorder %s22, 0
      %p85 = por %p83, %p84
      %p86 = scmp.ne.s32.totalorder %s74, %s75
      %p87 = scmp.eq.s32.totalorder %s23, 1
      %p88 = por %p86, %p87
      %p90 = scmp.ne.s32.totalorder %s75, %s89
      %p91 = scmp.eq.s32.totalorder %s23, 0
      %p92 = por %p90, %p91
      %s94 = sadd.s32 %s93, 1
      %p97 = scmp.eq.s32.totalorder %s17, 1
      %p98 = scmp.ne.s32.totalorder %s93, %s95
      %p99 = scmp.eq.s32.totalorder %s17, 0
      %p100 = por %p98, %p99
      %p101 = scmp.ne.s32.totalorder %s93, %s95
      %p102 = scmp.eq.s32.totalorder %s22, 1
      %p103 = por %p101, %p102
      %p104 = scmp.ne.s32.totalorder %s95, %s96
      %p105 = scmp.eq.s32.totalorder %s22, 0
      %p106 = por %p104, %p105
      %p107 = scmp.ne.s32.totalorder %s95, %s96
      %p108 = scmp.eq.s32.totalorder %s23, 1
      %p109 = por %p107, %p108
      %p111 = scmp.ne.s32.totalorder %s96, %s110
      %p112 = scmp.eq.s32.totalorder %s23, 0
      %p113 = por %p111, %p112
      %s115 = sadd.s32 %s114, 1
      %p118 = scmp.eq.s32.totalorder %s17, 1
      %p119 = scmp.ne.s32.totalorder %s114, %s116
      %p120 = scmp.eq.s32.totalorder %s17, 0
      %p121 = por %p119, %p120
      %p122 = scmp.ne.s32.totalorder %s114, %s116
      %p123 = scmp.eq.s32.totalorder %s22, 1
      %p124 = por %p122, %p123
      %p125 = scmp.ne.s32.totalorder %s116, %s117
      %p126 = scmp.eq.s32.totalorder %s22, 0
      %p127 = por %p125, %p126
      %p128 = scmp.ne.s32.totalorder %s116, %s117
      %p129 = scmp.eq.s32.totalorder %s23, 1
      %p130 = por %p128, %p129
      %p132 = scmp.ne.s32.totalorder %s117, %s131
      %p133 = scmp.eq.s32.totalorder %s23, 0
      %p134 = por %p132, %p133
      %s136 = sadd.s32 %s135, 1
      %p139 = scmp.eq.s32.totalorder %s17, 1
      %p140 = scmp.ne.s32.totalorder %s135, %s137
      %p141 = scmp.eq.s32.totalorder %s17, 0
      %p142 = por %p140, %p141
      %p143 = scmp.ne.s32.totalorder %s135, %s137
      %p144 = scmp.eq.s32.totalorder %s22, 1
      %p145 = por %p143, %p144
      %p146 = scmp.ne.s32.totalorder %s137, %s138
      %p147 = scmp.eq.s32.totalorder %s22, 0
      %p148 = por %p146, %p147
      %p149 = scmp.ne.s32.totalorder %s137, %s138
      %p150 = scmp.eq.s32.totalorder %s23, 1
      %p151 = por %p149, %p150
      %p153 = scmp.ne.s32.totalorder %s138, %s152
      %p154 = scmp.eq.s32.totalorder %s23, 0
      %p155 = por %p153, %p154
      %s157 = sadd.s32 %s156, 1
      %p160 = scmp.eq.s32.totalorder %s17, 1
      %p161 = scmp.ne.s32.totalorder %s156, %s158
      %p162 = scmp.eq.s32.totalorder %s17, 0
      %p163 = por %p161, %p162
      %p164 = scmp.ne.s32.totalorder %s156, %s158
      %p165 = scmp.eq.s32.totalorder %s22, 1
      %p166 = por %p164, %p165
      %p167 = scmp.ne.s32.totalorder %s158, %s159
      %p168 = scmp.eq.s32.totalorder %s22, 0
      %p169 = por %p167, %p168
      %p170 = scmp.ne.s32.totalorder %s158, %s159
      %p171 = scmp.eq.s32.totalorder %s23, 1
      %p172 = por %p170, %p171
      %p174 = scmp.ne.s32.totalorder %s159, %s173
      %p175 = scmp.eq.s32.totalorder %s23, 0
      %p176 = por %p174, %p175
      %s177 = ssub.s32 %s17, %s24
      %p178 = scmp.eq.s32.totalorder %s177, 0
      %s180 = sadd.s32 %s179, 1
      %s181 = scalar_select %p178, %s179, %s180
      %p184 = pneg %p178
      %p185 = scmp.eq.s32.totalorder %s17, 1
      %p186 = por %p184, %p185
      %p187 = scmp.ne.s32.totalorder %s179, %s182
      %p188 = scmp.eq.s32.totalorder %s17, 0
      %p189 = por %p187, %p188
      %p190 = scmp.ne.s32.totalorder %s179, %s182
      %p191 = scmp.eq.s32.totalorder %s22, 1
      %p192 = por %p190, %p191
      %p193 = scmp.ne.s32.totalorder %s182, %s183
      %p194 = scmp.eq.s32.totalorder %s22, 0
      %p195 = por %p193, %p194
      %p196 = scmp.ne.s32.totalorder %s182, %s183
      %p197 = scmp.eq.s32.totalorder %s23, 1
      %p198 = por %p196, %p197
      %p200 = scmp.ne.s32.totalorder %s183, %s199
      %p201 = scmp.eq.s32.totalorder %s23, 0
      %p202 = por %p200, %p201
      %p203 = scmp.le.s32.totalorder 1, %s17
      %p204 = scmp.lt.s32.totalorder %s17, 3
      %p205 = pnand %p203, %p204
      %p206 = pneg %p205
      // Predicated region
      $region9: #{tpu_custom_call.1} parent=5 // pred_check
        _
      $region10: #{tpu_custom_call.1} parent=5 // pred_check_branch
        %208 = sbr.rel (%p205) target = $region12
      $region11: #{tpu_custom_call.1} parent=5 // pred_region
        %s209 = ssub.s32 %s17, 1
        // Predicated region
        $region13: #{tpu_custom_call.1} parent=11 // pred_check
          %p210 = pneg %p64
        $region14: #{tpu_custom_call.1} parent=11 // pred_check_branch
          %212 = sbr.rel (%p210) target = $region16
        $region15: #{tpu_custom_call.1} parent=11 // pred_region
          _
        $region16: #{tpu_custom_call.1} parent=11 // pred_fallthru
          _
        // Predicated region
        $region17: #{tpu_custom_call.1} parent=11 // pred_check
          %p213 = pneg %p85
        $region18: #{tpu_custom_call.1} parent=11 // pred_check_branch
          %215 = sbr.rel (%p213) target = $region20
        $region19: #{tpu_custom_call.1} parent=11 // pred_region
          _
        $region20: #{tpu_custom_call.1} parent=11 // pred_fallthru
          _
        // Predicated region
        $region21: #{tpu_custom_call.1} parent=11 // pred_check
          %p216 = pneg %p106
        $region22: #{tpu_custom_call.1} parent=11 // pred_check_branch
          %218 = sbr.rel (%p216) target = $region24
        $region23: #{tpu_custom_call.1} parent=11 // pred_region
          _
        $region24: #{tpu_custom_call.1} parent=11 // pred_fallthru
          _
        // Predicated region
        $region25: #{tpu_custom_call.1} parent=11 // pred_check
          %p219 = pneg %p127
        $region26: #{tpu_custom_call.1} parent=11 // pred_check_branch
          %221 = sbr.rel (%p219) target = $region28
        $region27: #{tpu_custom_call.1} parent=11 // pred_region
          _
        $region28: #{tpu_custom_call.1} parent=11 // pred_fallthru
          _
        // Predicated region
        $region29: #{tpu_custom_call.1} parent=11 // pred_check
          %p222 = pneg %p148
        $region30: #{tpu_custom_call.1} parent=11 // pred_check_branch
          %224 = sbr.rel (%p222) target = $region32
        $region31: #{tpu_custom_call.1} parent=11 // pred_region
          %226 = vsyncadd [#allocation3], 0
          %s227 = sshll.u32 %s5, 4
          %s228 = int_to_ptr.hbm [resolvable:$true] %s227
          %s229 = sshll.u32 [#allocation2], 4
          %s230 = int_to_ptr.vmem [resolvable:$true] %s229
          %235 = dma.hbm_to_vmem [thread:$0]  %s228, 2048, %s230, [#allocation3], 128, 128, 8
        $region32: #{tpu_custom_call.1} parent=11 // pred_fallthru
          _
        // Predicated region
        $region33: #{tpu_custom_call.1} parent=11 // pred_check
          %p236 = pneg %p169
        $region34: #{tpu_custom_call.1} parent=11 // pred_check_branch
          %238 = sbr.rel (%p236) target = $region36
        $region35: #{tpu_custom_call.1} parent=11 // pred_region
          _
        $region36: #{tpu_custom_call.1} parent=11 // pred_fallthru
          _
      $region12: #{tpu_custom_call.1} parent=5 // pred_fallthru
        _
      %p239 = scmp.lt.s32.totalorder %s17, 2
      // Predicated region
      $region37: #{tpu_custom_call.1} parent=5 // pred_check
        %p240 = pneg %p239
      $region38: #{tpu_custom_call.1} parent=5 // pred_check_branch
        %242 = sbr.rel (%p240) target = $region40
      $region39: #{tpu_custom_call.1} parent=5 // pred_region
        // Predicated region
        $region41: #{tpu_custom_call.1} parent=39 // pred_check
          %p243 = pneg %p37
        $region42: #{tpu_custom_call.1} parent=39 // pred_check_branch
          %245 = sbr.rel (%p243) target = $region44
        $region43: #{tpu_custom_call.1} parent=39 // pred_region
          %s246 = smul.u32 8, %s17
          %p247 = scmp.lt.s32.totalorder %s246, 15
          %s248 = scalar_select %p247, %s246, 15
          %s249 = smul.addr %s248, 8
          %s250 = scalar_lea.vmem %s0, %s249
          %s251 = smul.u32 8, %s17
        $region44: #{tpu_custom_call.1} parent=39 // pred_fallthru
          _
      $region40: #{tpu_custom_call.1} parent=5 // pred_fallthru
        _
      %p252 = scmp.le.s32.totalorder 1, %s17
      %p253 = scmp.lt.s32.totalorder %s17, 3
      %p254 = pnand %p252, %p253
      %p255 = pneg %p254
      // Predicated region
      $region45: #{tpu_custom_call.1} parent=5 // pred_check
        _
      $region46: #{tpu_custom_call.1} parent=5 // pred_check_branch
        %257 = sbr.rel (%p254) target = $region48
      $region47: #{tpu_custom_call.1} parent=5 // pred_region
        %s258 = ssub.s32 %s17, 1
        // Predicated region
        $region49: #{tpu_custom_call.1} parent=47 // pred_check
          %p259 = pneg %p148
        $region50: #{tpu_custom_call.1} parent=47 // pred_check_branch
          %261 = sbr.rel (%p259) target = $region52
        $region51: #{tpu_custom_call.1} parent=47 // pred_region
          %263 = dma.done [#allocation3], 2048
        $region52: #{tpu_custom_call.1} parent=47 // pred_fallthru
          _
        %s264 = smul.u32 8, %s22
        %p265 = scmp.lt.s32.totalorder %s264, 15
        %s266 = scalar_select %p265, %s264, 15
        %s267 = smul.addr %s266, 8
        %s268 = scalar_lea.vmem %s0, %s267
        %p269 = pneg %p43
        %p270 = pneg %p40
        %p271 = pneg %p64
        %p272 = pneg %p61
        %p273 = pneg %p85
        %p274 = pneg %p82
        %p275 = pneg %p106
        %p276 = pneg %p103
        %p277 = pneg %p127
        %p278 = pneg %p124
        %p279 = pneg %p148
        %p280 = pneg %p145
        %p281 = pneg %p169
        %p282 = pneg %p166
        %p283 = pneg %p195
        %p284 = pneg %p192
        %s285 = sand.u32 %s182, 1
        %s286 = scalar_lea.sflag [#allocation4], %s285
        %s287 = sand.u32 %s182, 1
        %s288 = smul.addr %s287, 8
        %s289 = scalar_lea.vmem [#allocation5], %s288
        %s290 = smul.u32 8, %s22
        %p291 = scmp.lt.s32.totalorder %s290, 15
        %s292 = scalar_select %p291, %s290, 15
        %s293 = smul.addr %s292, 8
        %s294 = scalar_lea.vmem %s0, %s293
        %s295 = smul.u32 8, %s22
        %v296 = vld [vmem:[%s294] sm:$0xff]
        %v297 = vld [vmem:[%s294 + $0x8] sm:$0xff]
        %v298 = vld [vmem:[%s294 + $0x10] sm:$0xff]
        %v299 = vld [vmem:[%s294 + $0x18] sm:$0xff]
        %v300 = vld [vmem:[%s294 + $0x20] sm:$0xff]
        %v301 = vld [vmem:[%s294 + $0x28] sm:$0xff]
        %v302 = vld [vmem:[%s294 + $0x30] sm:$0xff]
        %v303 = vld [vmem:[%s294 + $0x38] sm:$0xff]
        %v304 = vld [vmem:[%s1] sm:$0xff]
        %v305 = vld [vmem:[%s1 + $0x8] sm:$0xff]
        %v306 = vld [vmem:[%s1 + $0x10] sm:$0xff]
        %v307 = vld [vmem:[%s1 + $0x18] sm:$0xff]
        %v308 = vld [vmem:[%s1 + $0x20] sm:$0xff]
        %v309 = vld [vmem:[%s1 + $0x28] sm:$0xff]
        %v310 = vld [vmem:[%s1 + $0x30] sm:$0xff]
        %v311 = vld [vmem:[%s1 + $0x38] sm:$0xff]
        %v312 = vld [vmem:[%s2] sm:$0x1]
        %v313 = vld [vmem:[%s3] sm:$0xff]
        %v314 = vld [vmem:[%s3 + $0x8] sm:$0xff]
        %v315 = vld [vmem:[%s3 + $0x10] sm:$0xff]
        %v316 = vld [vmem:[%s3 + $0x18] sm:$0xff]
        %v317 = vld [vmem:[%s3 + $0x20] sm:$0xff]
        %v318 = vld [vmem:[%s3 + $0x28] sm:$0xff]
        %v319 = vld [vmem:[%s3 + $0x30] sm:$0xff]
        %v320 = vld [vmem:[%s3 + $0x38] sm:$0xff]
        %v321 = vld [vmem:[%s3 + $0x40] sm:$0xff]
        %v322 = vld [vmem:[%s3 + $0x48] sm:$0xff]
        %v323 = vld [vmem:[%s3 + $0x50] sm:$0xff]
        %v324 = vld [vmem:[%s3 + $0x58] sm:$0xff]
        %v325 = vld [vmem:[%s3 + $0x60] sm:$0xff]
        %v326 = vld [vmem:[%s3 + $0x68] sm:$0xff]
        %v327 = vld [vmem:[%s3 + $0x70] sm:$0xff]
        %v328 = vld [vmem:[%s3 + $0x78] sm:$0xff]
        %v329 = vld [vmem:[%s4] sm:$0x1]
        %v330 = vld [vmem:[#allocation2] sm:$0xff]
        %v331 = vld [vmem:[#allocation2 + $0x8] sm:$0xff]
        %v332 = vld [vmem:[#allocation2 + $0x10] sm:$0xff]
        %v333 = vld [vmem:[#allocation2 + $0x18] sm:$0xff]
        %v334 = vld [vmem:[#allocation2 + $0x20] sm:$0xff]
        %v335 = vld [vmem:[#allocation2 + $0x28] sm:$0xff]
        %v336 = vld [vmem:[#allocation2 + $0x30] sm:$0xff]
        %v337 = vld [vmem:[#allocation2 + $0x38] sm:$0xff]
        %v338 = vld [vmem:[#allocation2 + $0x40] sm:$0xff]
        %v339 = vld [vmem:[#allocation2 + $0x48] sm:$0xff]
        %v340 = vld [vmem:[#allocation2 + $0x50] sm:$0xff]
        %v341 = vld [vmem:[#allocation2 + $0x58] sm:$0xff]
        %v342 = vld [vmem:[#allocation2 + $0x60] sm:$0xff]
        %v343 = vld [vmem:[#allocation2 + $0x68] sm:$0xff]
        %v344 = vld [vmem:[#allocation2 + $0x70] sm:$0xff]
        %v345 = vld [vmem:[#allocation2 + $0x78] sm:$0xff]
        %v346 = vld [vmem:[%s6] sm:$0x1]
        %v348 = vperm.slane %v312, 0
        %vm350 = vcmask 523264
        %v352 = vsel %vm350, %v296, 0
        %v355 = vsel %vm350, %v297, 0
        %v358 = vsel %vm350, %v298, 0
        %v361 = vsel %vm350, %v299, 0
        %v364 = vsel %vm350, %v300, 0
        %v367 = vsel %vm350, %v301, 0
        %v370 = vsel %vm350, %v302, 0
        %v373 = vsel %vm350, %v303, 0
        %375 = vmatpush.msra.mxu0 0.0
        %376 = vmatpush.msra.mxu0 0.0
        %377 = vmatpush.msra.mxu0 0.0
        %378 = vmatpush.msra.mxu0 0.0
        %379 = vmatpush.msra.mxu0 0.0
        %380 = vmatpush.msra.mxu0 0.0
        %381 = vmatpush.msra.mxu0 0.0
        %382 = vmatpush.msra.mxu0 0.0
        %383 = vmatpush.msra.mxu0 %v311
        %384 = vmatpush.msra.mxu0 %v310
        %385 = vmatpush.msra.mxu0 %v309
        %386 = vmatpush.msra.mxu0 %v308
        %387 = vmatpush.msra.mxu0 %v307
        %388 = vmatpush.msra.mxu0 %v306
        %389 = vmatpush.msra.mxu0 %v305
        %390 = vmatpush.msra.mxu0 %v304
        %391 = vmatmul.f32.gmra.mxu0 %v352
        %v392 = vpop.f32.mrf.mxu0
        %v393 = vadd.f32 %v348, %v392
        %394 = vmatmul.f32.gmra.mxu0 %v355
        %v395 = vpop.f32.mrf.mxu0
        %v396 = vadd.f32 %v348, %v395
        %397 = vmatmul.f32.gmra.mxu0 %v358
        %v398 = vpop.f32.mrf.mxu0
        %v399 = vadd.f32 %v348, %v398
        %400 = vmatmul.f32.gmra.mxu0 %v361
        %v401 = vpop.f32.mrf.mxu0
        %v402 = vadd.f32 %v348, %v401
        %403 = vmatmul.f32.gmra.mxu0 %v364
        %v404 = vpop.f32.mrf.mxu0
        %v405 = vadd.f32 %v348, %v404
        %406 = vmatmul.f32.gmra.mxu0 %v367
        %v407 = vpop.f32.mrf.mxu0
        %v408 = vadd.f32 %v348, %v407
        %409 = vmatmul.f32.gmra.mxu0 %v370
        %v410 = vpop.f32.mrf.mxu0
        %v411 = vadd.f32 %v348, %v410
        %412 = vmatmul.f32.gmra.mxu0 %v373
        %v413 = vpop.f32.mrf.mxu0
        %v414 = vadd.f32 %v348, %v413
        %415 = vdwg.mxu0
        %v416 = vmax.f32 %v393, 0.0
        %v417 = vmax.f32 %v396, 0.0
        %v418 = vmax.f32 %v399, 0.0
        %v419 = vmax.f32 %v402, 0.0
        %v420 = vmax.f32 %v405, 0.0
        %v421 = vmax.f32 %v408, 0.0
        %v422 = vmax.f32 %v411, 0.0
        %v423 = vmax.f32 %v414, 0.0
        %v425 = vperm.slane %v329, 0
        %427 = vmatpush.msra.mxu0 %v328
        %428 = vmatpush.msra.mxu0 %v327
        %429 = vmatpush.msra.mxu0 %v326
        %430 = vmatpush.msra.mxu0 %v325
        %431 = vmatpush.msra.mxu0 %v324
        %432 = vmatpush.msra.mxu0 %v323
        %433 = vmatpush.msra.mxu0 %v322
        %434 = vmatpush.msra.mxu0 %v321
        %435 = vmatpush.msra.mxu0 %v320
        %436 = vmatpush.msra.mxu0 %v319
        %437 = vmatpush.msra.mxu0 %v318
        %438 = vmatpush.msra.mxu0 %v317
        %439 = vmatpush.msra.mxu0 %v316
        %440 = vmatpush.msra.mxu0 %v315
        %441 = vmatpush.msra.mxu0 %v314
        %442 = vmatpush.msra.mxu0 %v313
        %443 = vmatmul.f32.gmra.mxu0 %v416
        %v444 = vpop.f32.mrf.mxu0
        %v445 = vadd.f32 %v425, %v444
        %446 = vmatmul.f32.gmra.mxu0 %v417
        %v447 = vpop.f32.mrf.mxu0
        %v448 = vadd.f32 %v425, %v447
        %449 = vmatmul.f32.gmra.mxu0 %v418
        %v450 = vpop.f32.mrf.mxu0
        %v451 = vadd.f32 %v425, %v450
        %452 = vmatmul.f32.gmra.mxu0 %v419
        %v453 = vpop.f32.mrf.mxu0
        %v454 = vadd.f32 %v425, %v453
        %455 = vmatmul.f32.gmra.mxu0 %v420
        %v456 = vpop.f32.mrf.mxu0
        %v457 = vadd.f32 %v425, %v456
        %458 = vmatmul.f32.gmra.mxu0 %v421
        %v459 = vpop.f32.mrf.mxu0
        %v460 = vadd.f32 %v425, %v459
        %461 = vmatmul.f32.gmra.mxu0 %v422
        %v462 = vpop.f32.mrf.mxu0
        %v463 = vadd.f32 %v425, %v462
        %464 = vmatmul.f32.gmra.mxu0 %v423
        %v465 = vpop.f32.mrf.mxu0
        %v466 = vadd.f32 %v425, %v465
        %467 = vdwg.mxu0
        %v468 = vmax.f32 %v445, 0.0
        %v469 = vmax.f32 %v448, 0.0
        %v470 = vmax.f32 %v451, 0.0
        %v471 = vmax.f32 %v454, 0.0
        %v472 = vmax.f32 %v457, 0.0
        %v473 = vmax.f32 %v460, 0.0
        %v474 = vmax.f32 %v463, 0.0
        %v475 = vmax.f32 %v466, 0.0
        %476 = vmatpush.msra.mxu0 %v345
        %477 = vmatpush.msra.mxu0 %v344
        %478 = vmatpush.msra.mxu0 %v343
        %479 = vmatpush.msra.mxu0 %v342
        %480 = vmatpush.msra.mxu0 %v341
        %481 = vmatpush.msra.mxu0 %v340
        %482 = vmatpush.msra.mxu0 %v339
        %483 = vmatpush.msra.mxu0 %v338
        %484 = vmatpush.msra.mxu0 %v337
        %485 = vmatpush.msra.mxu0 %v336
        %486 = vmatpush.msra.mxu0 %v335
        %487 = vmatpush.msra.mxu0 %v334
        %488 = vmatpush.msra.mxu0 %v333
        %489 = vmatpush.msra.mxu0 %v332
        %490 = vmatpush.msra.mxu0 %v331
        %491 = vmatpush.msra.mxu0 %v330
        %492 = vmatmul.f32.gmra.mxu0 %v468
        %v493 = vpop.f32.mrf.mxu0
        %v494 = vadd.f32 0.0, %v493
        %495 = vmatmul.f32.gmra.mxu0 %v469
        %v496 = vpop.f32.mrf.mxu0
        %v497 = vadd.f32 0.0, %v496
        %498 = vmatmul.f32.gmra.mxu0 %v470
        %v499 = vpop.f32.mrf.mxu0
        %v500 = vadd.f32 0.0, %v499
        %501 = vmatmul.f32.gmra.mxu0 %v471
        %v502 = vpop.f32.mrf.mxu0
        %v503 = vadd.f32 0.0, %v502
        %504 = vmatmul.f32.gmra.mxu0 %v472
        %v505 = vpop.f32.mrf.mxu0
        %v506 = vadd.f32 0.0, %v505
        %507 = vmatmul.f32.gmra.mxu0 %v473
        %v508 = vpop.f32.mrf.mxu0
        %v509 = vadd.f32 0.0, %v508
        %510 = vmatmul.f32.gmra.mxu0 %v474
        %v511 = vpop.f32.mrf.mxu0
        %v512 = vadd.f32 0.0, %v511
        %513 = vmatmul.f32.gmra.mxu0 %v475
        %v514 = vpop.f32.mrf.mxu0
        %v515 = vadd.f32 0.0, %v514
        %516 = vdwg.mxu0
        %v517 = vrot.slane %v494, 4
        %v518 = vmax.f32 %v494, %v517
        %v519 = vrot.slane %v518, 2
        %v520 = vmax.f32 %v518, %v519
        %v521 = vrot.slane %v520, 1
        %v522 = vmax.f32 %v520, %v521
        %v523 = vrot.slane %v497, 4
        %v524 = vmax.f32 %v497, %v523
        %v525 = vrot.slane %v524, 2
        %v526 = vmax.f32 %v524, %v525
        %v527 = vrot.slane %v526, 1
        %v528 = vmax.f32 %v526, %v527
        %v529 = vrot.slane %v500, 4
        %v530 = vmax.f32 %v500, %v529
        %v531 = vrot.slane %v530, 2
        %v532 = vmax.f32 %v530, %v531
        %v533 = vrot.slane %v532, 1
        %v534 = vmax.f32 %v532, %v533
        %v535 = vrot.slane %v503, 4
        %v536 = vmax.f32 %v503, %v535
        %v537 = vrot.slane %v536, 2
        %v538 = vmax.f32 %v536, %v537
        %v539 = vrot.slane %v538, 1
        %v540 = vmax.f32 %v538, %v539
        %v541 = vrot.slane %v506, 4
        %v542 = vmax.f32 %v506, %v541
        %v543 = vrot.slane %v542, 2
        %v544 = vmax.f32 %v542, %v543
        %v545 = vrot.slane %v544, 1
        %v546 = vmax.f32 %v544, %v545
        %v547 = vrot.slane %v509, 4
        %v548 = vmax.f32 %v509, %v547
        %v549 = vrot.slane %v548, 2
        %v550 = vmax.f32 %v548, %v549
        %v551 = vrot.slane %v550, 1
        %v552 = vmax.f32 %v550, %v551
        %v553 = vrot.slane %v512, 4
        %v554 = vmax.f32 %v512, %v553
        %v555 = vrot.slane %v554, 2
        %v556 = vmax.f32 %v554, %v555
        %v557 = vrot.slane %v556, 1
        %v558 = vmax.f32 %v556, %v557
        %v559 = vrot.slane %v515, 4
        %v560 = vmax.f32 %v515, %v559
        %v561 = vrot.slane %v560, 2
        %v562 = vmax.f32 %v560, %v561
        %v563 = vrot.slane %v562, 1
        %v564 = vmax.f32 %v562, %v563
        %v565 = vsub.f32 %v494, %v522
        %v566 = vsub.f32 %v497, %v528
        %v567 = vsub.f32 %v500, %v534
        %v568 = vsub.f32 %v503, %v540
        %v569 = vsub.f32 %v506, %v546
        %v570 = vsub.f32 %v509, %v552
        %v571 = vsub.f32 %v512, %v558
        %v572 = vsub.f32 %v515, %v564
        %v573 = vmul.f32 %v565, 1.442695
        %v574 = vpow.pop %v573
        %v575 = vmul.f32 %v566, 1.442695
        %v576 = vpow.pop %v575
        %v577 = vmul.f32 %v567, 1.442695
        %v578 = vpow.pop %v577
        %v579 = vmul.f32 %v568, 1.442695
        %v580 = vpow.pop %v579
        %v581 = vmul.f32 %v569, 1.442695
        %v582 = vpow.pop %v581
        %v583 = vmul.f32 %v570, 1.442695
        %v584 = vpow.pop %v583
        %v585 = vmul.f32 %v571, 1.442695
        %v586 = vpow.pop %v585
        %v587 = vmul.f32 %v572, 1.442695
        %v588 = vpow.pop %v587
        %v589 = vrot.slane %v574, 4
        %v590 = vadd.f32 %v574, %v589
        %v591 = vrot.slane %v590, 2
        %v592 = vadd.f32 %v590, %v591
        %v593 = vrot.slane %v592, 1
        %v594 = vadd.f32 %v592, %v593
        %v595 = vrot.slane %v576, 4
        %v596 = vadd.f32 %v576, %v595
        %v597 = vrot.slane %v596, 2
        %v598 = vadd.f32 %v596, %v597
        %v599 = vrot.slane %v598, 1
        %v600 = vadd.f32 %v598, %v599
        %v601 = vrot.slane %v578, 4
        %v602 = vadd.f32 %v578, %v601
        %v603 = vrot.slane %v602, 2
        %v604 = vadd.f32 %v602, %v603
        %v605 = vrot.slane %v604, 1
        %v606 = vadd.f32 %v604, %v605
        %v607 = vrot.slane %v580, 4
        %v608 = vadd.f32 %v580, %v607
        %v609 = vrot.slane %v608, 2
        %v610 = vadd.f32 %v608, %v609
        %v611 = vrot.slane %v610, 1
        %v612 = vadd.f32 %v610, %v611
        %v613 = vrot.slane %v582, 4
        %v614 = vadd.f32 %v582, %v613
        %v615 = vrot.slane %v614, 2
        %v616 = vadd.f32 %v614, %v615
        %v617 = vrot.slane %v616, 1
        %v618 = vadd.f32 %v616, %v617
        %v619 = vrot.slane %v584, 4
        %v620 = vadd.f32 %v584, %v619
        %v621 = vrot.slane %v620, 2
        %v622 = vadd.f32 %v620, %v621
        %v623 = vrot.slane %v622, 1
        %v624 = vadd.f32 %v622, %v623
        %v625 = vrot.slane %v586, 4
        %v626 = vadd.f32 %v586, %v625
        %v627 = vrot.slane %v626, 2
        %v628 = vadd.f32 %v626, %v627
        %v629 = vrot.slane %v628, 1
        %v630 = vadd.f32 %v628, %v629
        %v631 = vrot.slane %v588, 4
        %v632 = vadd.f32 %v588, %v631
        %v633 = vrot.slane %v632, 2
        %v634 = vadd.f32 %v632, %v633
        %v635 = vrot.slane %v634, 1
        %v636 = vadd.f32 %v634, %v635
        %v637 = vrcp.pop %v594
        %v638 = vrcp.pop %v600
        %v639 = vrcp.pop %v606
        %v640 = vrcp.pop %v612
        %v641 = vrcp.pop %v618
        %v642 = vrcp.pop %v624
        %v643 = vrcp.pop %v630
        %v644 = vrcp.pop %v636
        %v645 = vmul.f32 %v574, %v637
        %v646 = vmul.f32 %v576, %v638
        %v647 = vmul.f32 %v578, %v639
        %v648 = vmul.f32 %v580, %v640
        %v649 = vmul.f32 %v582, %v641
        %v650 = vmul.f32 %v584, %v642
        %v651 = vmul.f32 %v586, %v643
        %v652 = vmul.f32 %v588, %v644
        %653 = vxpose.xlu0.b32.start [1/16] %v645, 128
        %654 = vxpose.xlu0.b32.cont [2/16] 0.0, 128
        %655 = vxpose.xlu0.b32.cont [3/16] 0.0, 128
        %656 = vxpose.xlu0.b32.cont [4/16] 0.0, 128
        %657 = vxpose.xlu0.b32.cont [5/16] 0.0, 128
        %658 = vxpose.xlu0.b32.cont [6/16] 0.0, 128
        %659 = vxpose.xlu0.b32.cont [7/16] 0.0, 128
        %660 = vxpose.xlu0.b32.cont [8/16] 0.0, 128
        %661 = vxpose.xlu0.b32.cont [9/16] 0.0, 128
        %662 = vxpose.xlu0.b32.cont [10/16] 0.0, 128
        %663 = vxpose.xlu0.b32.cont [11/16] 0.0, 128
        %664 = vxpose.xlu0.b32.cont [12/16] 0.0, 128
        %665 = vxpose.xlu0.b32.cont [13/16] 0.0, 128
        %666 = vxpose.xlu0.b32.cont [14/16] 0.0, 128
        %667 = vxpose.xlu0.b32.cont [15/16] 0.0, 128
        %668 = vxpose.xlu0.b32.end [16/16] 0.0, 128
        %v669 = vpop.trf.xlu0
        %v670 = vpop.trf.xlu0
        %v671 = vpop.trf.xlu0
        %v672 = vpop.trf.xlu0
        %v673 = vpop.trf.xlu0
        %v674 = vpop.trf.xlu0
        %v675 = vpop.trf.xlu0
        %v676 = vpop.trf.xlu0
        %v677 = vpop.trf.xlu0
        %v678 = vpop.trf.xlu0
        %v679 = vpop.trf.xlu0
        %v680 = vpop.trf.xlu0
        %v681 = vpop.trf.xlu0
        %v682 = vpop.trf.xlu0
        %v683 = vpop.trf.xlu0
        %v684 = vpop.trf.xlu0
        %vm685 = vcmask 64512
        %v687 = vsel %vm685, %v669, 0
        %v690 = vsel %vm685, %v670, 0
        %v693 = vsel %vm685, %v671, 0
        %v696 = vsel %vm685, %v672, 0
        %v699 = vsel %vm685, %v673, 0
        %v702 = vsel %vm685, %v674, 0
        %v705 = vsel %vm685, %v675, 0
        %v708 = vsel %vm685, %v676, 0
        %v711 = vsel %vm685, %v677, 0
        %v714 = vsel %vm685, %v678, 0
        %v717 = vsel %vm685, %v679, 0
        %v720 = vsel %vm685, %v680, 0
        %v723 = vsel %vm685, %v681, 0
        %v726 = vsel %vm685, %v682, 0
        %v729 = vsel %vm685, %v683, 0
        %v732 = vsel %vm685, %v684, 0
        %734 = vmatpush.msra.mxu0 0.0
        %735 = vmatpush.msra.mxu0 0.0
        %736 = vmatpush.msra.mxu0 0.0
        %737 = vmatpush.msra.mxu0 0.0
        %738 = vmatpush.msra.mxu0 0.0
        %739 = vmatpush.msra.mxu0 0.0
        %740 = vmatpush.msra.mxu0 0.0
        %741 = vmatpush.msra.mxu0 0.0
        %742 = vmatpush.msra.mxu0 0.0
        %743 = vmatpush.msra.mxu0 0.0
        %744 = vmatpush.msra.mxu0 0.0
        %745 = vmatpush.msra.mxu0 0.0
        %746 = vmatpush.msra.mxu0 0.0
        %747 = vmatpush.msra.mxu0 0.0
        %748 = vmatpush.msra.mxu0 0.0
        %749 = vmatpush.msra.mxu0 %v296
        %750 = vmatmul.f32.gmra.mxu0 %v687
        %v751 = vpop.f32.mrf.mxu0
        %v752 = vadd.f32 0.0, %v751
        %753 = vmatmul.f32.gmra.mxu0 %v690
        %v754 = vpop.f32.mrf.mxu0
        %v755 = vadd.f32 0.0, %v754
        %756 = vmatmul.f32.gmra.mxu0 %v693
        %v757 = vpop.f32.mrf.mxu0
        %v758 = vadd.f32 0.0, %v757
        %759 = vmatmul.f32.gmra.mxu0 %v696
        %v760 = vpop.f32.mrf.mxu0
        %v761 = vadd.f32 0.0, %v760
        %762 = vmatmul.f32.gmra.mxu0 %v699
        %v763 = vpop.f32.mrf.mxu0
        %v764 = vadd.f32 0.0, %v763
        %765 = vmatmul.f32.gmra.mxu0 %v702
        %v766 = vpop.f32.mrf.mxu0
        %v767 = vadd.f32 0.0, %v766
        %768 = vmatmul.f32.gmra.mxu0 %v705
        %v769 = vpop.f32.mrf.mxu0
        %v770 = vadd.f32 0.0, %v769
        %771 = vmatmul.f32.gmra.mxu0 %v708
        %v772 = vpop.f32.mrf.mxu0
        %v773 = vadd.f32 0.0, %v772
        %774 = vmatmul.f32.gmra.mxu0 %v711
        %v775 = vpop.f32.mrf.mxu0
        %v776 = vadd.f32 0.0, %v775
        %777 = vmatmul.f32.gmra.mxu0 %v714
        %v778 = vpop.f32.mrf.mxu0
        %v779 = vadd.f32 0.0, %v778
        %780 = vmatmul.f32.gmra.mxu0 %v717
        %v781 = vpop.f32.mrf.mxu0
        %v782 = vadd.f32 0.0, %v781
        %783 = vmatmul.f32.gmra.mxu0 %v720
        %v784 = vpop.f32.mrf.mxu0
        %v785 = vadd.f32 0.0, %v784
        %786 = vmatmul.f32.gmra.mxu0 %v723
        %v787 = vpop.f32.mrf.mxu0
        %v788 = vadd.f32 0.0, %v787
        %789 = vmatmul.f32.gmra.mxu0 %v726
        %v790 = vpop.f32.mrf.mxu0
        %v791 = vadd.f32 0.0, %v790
        %792 = vmatmul.f32.gmra.mxu0 %v729
        %v793 = vpop.f32.mrf.mxu0
        %v794 = vadd.f32 0.0, %v793
        %795 = vmatmul.f32.gmra.mxu0 %v732
        %v796 = vpop.f32.mrf.mxu0
        %v797 = vadd.f32 0.0, %v796
        %798 = vdwg.mxu0
        %799 = vxpose.xlu0.b32.start [1/16] %v646, 128
        %800 = vxpose.xlu0.b32.cont [2/16] 0.0, 128
        %801 = vxpose.xlu0.b32.cont [3/16] 0.0, 128
        %802 = vxpose.xlu0.b32.cont [4/16] 0.0, 128
        %803 = vxpose.xlu0.b32.cont [5/16] 0.0, 128
        %804 = vxpose.xlu0.b32.cont [6/16] 0.0, 128
        %805 = vxpose.xlu0.b32.cont [7/16] 0.0, 128
        %806 = vxpose.xlu0.b32.cont [8/16] 0.0, 128
        %807 = vxpose.xlu0.b32.cont [9/16] 0.0, 128
        %808 = vxpose.xlu0.b32.cont [10/16] 0.0, 128
        %809 = vxpose.xlu0.b32.cont [11/16] 0.0, 128
        %810 = vxpose.xlu0.b32.cont [12/16] 0.0, 128
        %811 = vxpose.xlu0.b32.cont [13/16] 0.0, 128
        %812 = vxpose.xlu0.b32.cont [14/16] 0.0, 128
        %813 = vxpose.xlu0.b32.cont [15/16] 0.0, 128
        %814 = vxpose.xlu0.b32.end [16/16] 0.0, 128
        %v815 = vpop.trf.xlu0
        %v816 = vpop.trf.xlu0
        %v817 = vpop.trf.xlu0
        %v818 = vpop.trf.xlu0
        %v819 = vpop.trf.xlu0
        %v820 = vpop.trf.xlu0
        %v821 = vpop.trf.xlu0
        %v822 = vpop.trf.xlu0
        %v823 = vpop.trf.xlu0
        %v824 = vpop.trf.xlu0
        %v825 = vpop.trf.xlu0
        %v826 = vpop.trf.xlu0
        %v827 = vpop.trf.xlu0
        %v828 = vpop.trf.xlu0
        %v829 = vpop.trf.xlu0
        %v830 = vpop.trf.xlu0
        %v832 = vsel %vm685, %v815, 0
        %v835 = vsel %vm685, %v816, 0
        %v838 = vsel %vm685, %v817, 0
        %v841 = vsel %vm685, %v818, 0
        %v844 = vsel %vm685, %v819, 0
        %v847 = vsel %vm685, %v820, 0
        %v850 = vsel %vm685, %v821, 0
        %v853 = vsel %vm685, %v822, 0
        %v856 = vsel %vm685, %v823, 0
        %v859 = vsel %vm685, %v824, 0
        %v862 = vsel %vm685, %v825, 0
        %v865 = vsel %vm685, %v826, 0
        %v868 = vsel %vm685, %v827, 0
        %v871 = vsel %vm685, %v828, 0
        %v874 = vsel %vm685, %v829, 0
        %v877 = vsel %vm685, %v830, 0
        %879 = vmatpush.msra.mxu0 0.0
        %880 = vmatpush.msra.mxu0 0.0
        %881 = vmatpush.msra.mxu0 0.0
        %882 = vmatpush.msra.mxu0 0.0
        %883 = vmatpush.msra.mxu0 0.0
        %884 = vmatpush.msra.mxu0 0.0
        %885 = vmatpush.msra.mxu0 0.0
        %886 = vmatpush.msra.mxu0 0.0
        %887 = vmatpush.msra.mxu0 0.0
        %888 = vmatpush.msra.mxu0 0.0
        %889 = vmatpush.msra.mxu0 0.0
        %890 = vmatpush.msra.mxu0 0.0
        %891 = vmatpush.msra.mxu0 0.0
        %892 = vmatpush.msra.mxu0 0.0
        %893 = vmatpush.msra.mxu0 0.0
        %894 = vmatpush.msra.mxu0 %v297
        %895 = vmatmul.f32.gmra.mxu0 %v832
        %v896 = vpop.f32.mrf.mxu0
        %v897 = vadd.f32 0.0, %v896
        %898 = vmatmul.f32.gmra.mxu0 %v835
        %v899 = vpop.f32.mrf.mxu0
        %v900 = vadd.f32 0.0, %v899
        %901 = vmatmul.f32.gmra.mxu0 %v838
        %v902 = vpop.f32.mrf.mxu0
        %v903 = vadd.f32 0.0, %v902
        %904 = vmatmul.f32.gmra.mxu0 %v841
        %v905 = vpop.f32.mrf.mxu0
        %v906 = vadd.f32 0.0, %v905
        %907 = vmatmul.f32.gmra.mxu0 %v844
        %v908 = vpop.f32.mrf.mxu0
        %v909 = vadd.f32 0.0, %v908
        %910 = vmatmul.f32.gmra.mxu0 %v847
        %v911 = vpop.f32.mrf.mxu0
        %v912 = vadd.f32 0.0, %v911
        %913 = vmatmul.f32.gmra.mxu0 %v850
        %v914 = vpop.f32.mrf.mxu0
        %v915 = vadd.f32 0.0, %v914
        %916 = vmatmul.f32.gmra.mxu0 %v853
        %v917 = vpop.f32.mrf.mxu0
        %v918 = vadd.f32 0.0, %v917
        %919 = vmatmul.f32.gmra.mxu0 %v856
        %v920 = vpop.f32.mrf.mxu0
        %v921 = vadd.f32 0.0, %v920
        %922 = vmatmul.f32.gmra.mxu0 %v859
        %v923 = vpop.f32.mrf.mxu0
        %v924 = vadd.f32 0.0, %v923
        %925 = vmatmul.f32.gmra.mxu0 %v862
        %v926 = vpop.f32.mrf.mxu0
        %v927 = vadd.f32 0.0, %v926
        %928 = vmatmul.f32.gmra.mxu0 %v865
        %v929 = vpop.f32.mrf.mxu0
        %v930 = vadd.f32 0.0, %v929
        %931 = vmatmul.f32.gmra.mxu0 %v868
        %v932 = vpop.f32.mrf.mxu0
        %v933 = vadd.f32 0.0, %v932
        %934 = vmatmul.f32.gmra.mxu0 %v871
        %v935 = vpop.f32.mrf.mxu0
        %v936 = vadd.f32 0.0, %v935
        %937 = vmatmul.f32.gmra.mxu0 %v874
        %v938 = vpop.f32.mrf.mxu0
        %v939 = vadd.f32 0.0, %v938
        %940 = vmatmul.f32.gmra.mxu0 %v877
        %v941 = vpop.f32.mrf.mxu0
        %v942 = vadd.f32 0.0, %v941
        %943 = vdwg.mxu0
        %944 = vxpose.xlu0.b32.start [1/16] %v647, 128
        %945 = vxpose.xlu0.b32.cont [2/16] 0.0, 128
        %946 = vxpose.xlu0.b32.cont [3/16] 0.0, 128
        %947 = vxpose.xlu0.b32.cont [4/16] 0.0, 128
        %948 = vxpose.xlu0.b32.cont [5/16] 0.0, 128
        %949 = vxpose.xlu0.b32.cont [6/16] 0.0, 128
        %950 = vxpose.xlu0.b32.cont [7/16] 0.0, 128
        %951 = vxpose.xlu0.b32.cont [8/16] 0.0, 128
        %952 = vxpose.xlu0.b32.cont [9/16] 0.0, 128
        %953 = vxpose.xlu0.b32.cont [10/16] 0.0, 128
        %954 = vxpose.xlu0.b32.cont [11/16] 0.0, 128
        %955 = vxpose.xlu0.b32.cont [12/16] 0.0, 128
        %956 = vxpose.xlu0.b32.cont [13/16] 0.0, 128
        %957 = vxpose.xlu0.b32.cont [14/16] 0.0, 128
        %958 = vxpose.xlu0.b32.cont [15/16] 0.0, 128
        %959 = vxpose.xlu0.b32.end [16/16] 0.0, 128
        %v960 = vpop.trf.xlu0
        %v961 = vpop.trf.xlu0
        %v962 = vpop.trf.xlu0
        %v963 = vpop.trf.xlu0
        %v964 = vpop.trf.xlu0
        %v965 = vpop.trf.xlu0
        %v966 = vpop.trf.xlu0
        %v967 = vpop.trf.xlu0
        %v968 = vpop.trf.xlu0
        %v969 = vpop.trf.xlu0
        %v970 = vpop.trf.xlu0
        %v971 = vpop.trf.xlu0
        %v972 = vpop.trf.xlu0
        %v973 = vpop.trf.xlu0
        %v974 = vpop.trf.xlu0
        %v975 = vpop.trf.xlu0
        %v977 = vsel %vm685, %v960, 0
        %v980 = vsel %vm685, %v961, 0
        %v983 = vsel %vm685, %v962, 0
        %v986 = vsel %vm685, %v963, 0
        %v989 = vsel %vm685, %v964, 0
        %v992 = vsel %vm685, %v965, 0
        %v995 = vsel %vm685, %v966, 0
        %v998 = vsel %vm685, %v967, 0
        %v1001 = vsel %vm685, %v968, 0
        %v1004 = vsel %vm685, %v969, 0
        %v1007 = vsel %vm685, %v970, 0
        %v1010 = vsel %vm685, %v971, 0
        %v1013 = vsel %vm685, %v972, 0
        %v1016 = vsel %vm685, %v973, 0
        %v1019 = vsel %vm685, %v974, 0
        %v1022 = vsel %vm685, %v975, 0
        %1024 = vmatpush.msra.mxu0 0.0
        %1025 = vmatpush.msra.mxu0 0.0
        %1026 = vmatpush.msra.mxu0 0.0
        %1027 = vmatpush.msra.mxu0 0.0
        %1028 = vmatpush.msra.mxu0 0.0
        %1029 = vmatpush.msra.mxu0 0.0
        %1030 = vmatpush.msra.mxu0 0.0
        %1031 = vmatpush.msra.mxu0 0.0
        %1032 = vmatpush.msra.mxu0 0.0
        %1033 = vmatpush.msra.mxu0 0.0
        %1034 = vmatpush.msra.mxu0 0.0
        %1035 = vmatpush.msra.mxu0 0.0
        %1036 = vmatpush.msra.mxu0 0.0
        %1037 = vmatpush.msra.mxu0 0.0
        %1038 = vmatpush.msra.mxu0 0.0
        %1039 = vmatpush.msra.mxu0 %v298
        %1040 = vmatmul.f32.gmra.mxu0 %v977
        %v1041 = vpop.f32.mrf.mxu0
        %v1042 = vadd.f32 0.0, %v1041
        %1043 = vmatmul.f32.gmra.mxu0 %v980
        %v1044 = vpop.f32.mrf.mxu0
        %v1045 = vadd.f32 0.0, %v1044
        %1046 = vmatmul.f32.gmra.mxu0 %v983
        %v1047 = vpop.f32.mrf.mxu0
        %v1048 = vadd.f32 0.0, %v1047
        %1049 = vmatmul.f32.gmra.mxu0 %v986
        %v1050 = vpop.f32.mrf.mxu0
        %v1051 = vadd.f32 0.0, %v1050
        %1052 = vmatmul.f32.gmra.mxu0 %v989
        %v1053 = vpop.f32.mrf.mxu0
        %v1054 = vadd.f32 0.0, %v1053
        %1055 = vmatmul.f32.gmra.mxu0 %v992
        %v1056 = vpop.f32.mrf.mxu0
        %v1057 = vadd.f32 0.0, %v1056
        %1058 = vmatmul.f32.gmra.mxu0 %v995
        %v1059 = vpop.f32.mrf.mxu0
        %v1060 = vadd.f32 0.0, %v1059
        %1061 = vmatmul.f32.gmra.mxu0 %v998
        %v1062 = vpop.f32.mrf.mxu0
        %v1063 = vadd.f32 0.0, %v1062
        %1064 = vmatmul.f32.gmra.mxu0 %v1001
        %v1065 = vpop.f32.mrf.mxu0
        %v1066 = vadd.f32 0.0, %v1065
        %1067 = vmatmul.f32.gmra.mxu0 %v1004
        %v1068 = vpop.f32.mrf.mxu0
        %v1069 = vadd.f32 0.0, %v1068
        %1070 = vmatmul.f32.gmra.mxu0 %v1007
        %v1071 = vpop.f32.mrf.mxu0
        %v1072 = vadd.f32 0.0, %v1071
        %1073 = vmatmul.f32.gmra.mxu0 %v1010
        %v1074 = vpop.f32.mrf.mxu0
        %v1075 = vadd.f32 0.0, %v1074
        %1076 = vmatmul.f32.gmra.mxu0 %v1013
        %v1077 = vpop.f32.mrf.mxu0
        %v1078 = vadd.f32 0.0, %v1077
        %1079 = vmatmul.f32.gmra.mxu0 %v1016
        %v1080 = vpop.f32.mrf.mxu0
        %v1081 = vadd.f32 0.0, %v1080
        %1082 = vmatmul.f32.gmra.mxu0 %v1019
        %v1083 = vpop.f32.mrf.mxu0
        %v1084 = vadd.f32 0.0, %v1083
        %1085 = vmatmul.f32.gmra.mxu0 %v1022
        %v1086 = vpop.f32.mrf.mxu0
        %v1087 = vadd.f32 0.0, %v1086
        %1088 = vdwg.mxu0
        %1089 = vxpose.xlu0.b32.start [1/16] %v648, 128
        %1090 = vxpose.xlu0.b32.cont [2/16] 0.0, 128
        %1091 = vxpose.xlu0.b32.cont [3/16] 0.0, 128
        %1092 = vxpose.xlu0.b32.cont [4/16] 0.0, 128
        %1093 = vxpose.xlu0.b32.cont [5/16] 0.0, 128
        %1094 = vxpose.xlu0.b32.cont [6/16] 0.0, 128
        %1095 = vxpose.xlu0.b32.cont [7/16] 0.0, 128
        %1096 = vxpose.xlu0.b32.cont [8/16] 0.0, 128
        %1097 = vxpose.xlu0.b32.cont [9/16] 0.0, 128
        %1098 = vxpose.xlu0.b32.cont [10/16] 0.0, 128
        %1099 = vxpose.xlu0.b32.cont [11/16] 0.0, 128
        %1100 = vxpose.xlu0.b32.cont [12/16] 0.0, 128
        %1101 = vxpose.xlu0.b32.cont [13/16] 0.0, 128
        %1102 = vxpose.xlu0.b32.cont [14/16] 0.0, 128
        %1103 = vxpose.xlu0.b32.cont [15/16] 0.0, 128
        %1104 = vxpose.xlu0.b32.end [16/16] 0.0, 128
        %v1105 = vpop.trf.xlu0
        %v1106 = vpop.trf.xlu0
        %v1107 = vpop.trf.xlu0
        %v1108 = vpop.trf.xlu0
        %v1109 = vpop.trf.xlu0
        %v1110 = vpop.trf.xlu0
        %v1111 = vpop.trf.xlu0
        %v1112 = vpop.trf.xlu0
        %v1113 = vpop.trf.xlu0
        %v1114 = vpop.trf.xlu0
        %v1115 = vpop.trf.xlu0
        %v1116 = vpop.trf.xlu0
        %v1117 = vpop.trf.xlu0
        %v1118 = vpop.trf.xlu0
        %v1119 = vpop.trf.xlu0
        %v1120 = vpop.trf.xlu0
        %v1122 = vsel %vm685, %v1105, 0
        %v1125 = vsel %vm685, %v1106, 0
        %v1128 = vsel %vm685, %v1107, 0
        %v1131 = vsel %vm685, %v1108, 0
        %v1134 = vsel %vm685, %v1109, 0
        %v1137 = vsel %vm685, %v1110, 0
        %v1140 = vsel %vm685, %v1111, 0
        %v1143 = vsel %vm685, %v1112, 0
        %v1146 = vsel %vm685, %v1113, 0
        %v1149 = vsel %vm685, %v1114, 0
        %v1152 = vsel %vm685, %v1115, 0
        %v1155 = vsel %vm685, %v1116, 0
        %v1158 = vsel %vm685, %v1117, 0
        %v1161 = vsel %vm685, %v1118, 0
        %v1164 = vsel %vm685, %v1119, 0
        %v1167 = vsel %vm685, %v1120, 0
        %1169 = vmatpush.msra.mxu0 0.0
        %1170 = vmatpush.msra.mxu0 0.0
        %1171 = vmatpush.msra.mxu0 0.0
        %1172 = vmatpush.msra.mxu0 0.0
        %1173 = vmatpush.msra.mxu0 0.0
        %1174 = vmatpush.msra.mxu0 0.0
        %1175 = vmatpush.msra.mxu0 0.0
        %1176 = vmatpush.msra.mxu0 0.0
        %1177 = vmatpush.msra.mxu0 0.0
        %1178 = vmatpush.msra.mxu0 0.0
        %1179 = vmatpush.msra.mxu0 0.0
        %1180 = vmatpush.msra.mxu0 0.0
        %1181 = vmatpush.msra.mxu0 0.0
        %1182 = vmatpush.msra.mxu0 0.0
        %1183 = vmatpush.msra.mxu0 0.0
        %1184 = vmatpush.msra.mxu0 %v299
        %1185 = vmatmul.f32.gmra.mxu0 %v1122
        %v1186 = vpop.f32.mrf.mxu0
        %v1187 = vadd.f32 0.0, %v1186
        %1188 = vmatmul.f32.gmra.mxu0 %v1125
        %v1189 = vpop.f32.mrf.mxu0
        %v1190 = vadd.f32 0.0, %v1189
        %1191 = vmatmul.f32.gmra.mxu0 %v1128
        %v1192 = vpop.f32.mrf.mxu0
        %v1193 = vadd.f32 0.0, %v1192
        %1194 = vmatmul.f32.gmra.mxu0 %v1131
        %v1195 = vpop.f32.mrf.mxu0
        %v1196 = vadd.f32 0.0, %v1195
        %1197 = vmatmul.f32.gmra.mxu0 %v1134
        %v1198 = vpop.f32.mrf.mxu0
        %v1199 = vadd.f32 0.0, %v1198
        %1200 = vmatmul.f32.gmra.mxu0 %v1137
        %v1201 = vpop.f32.mrf.mxu0
        %v1202 = vadd.f32 0.0, %v1201
        %1203 = vmatmul.f32.gmra.mxu0 %v1140
        %v1204 = vpop.f32.mrf.mxu0
        %v1205 = vadd.f32 0.0, %v1204
        %1206 = vmatmul.f32.gmra.mxu0 %v1143
        %v1207 = vpop.f32.mrf.mxu0
        %v1208 = vadd.f32 0.0, %v1207
        %1209 = vmatmul.f32.gmra.mxu0 %v1146
        %v1210 = vpop.f32.mrf.mxu0
        %v1211 = vadd.f32 0.0, %v1210
        %1212 = vmatmul.f32.gmra.mxu0 %v1149
        %v1213 = vpop.f32.mrf.mxu0
        %v1214 = vadd.f32 0.0, %v1213
        %1215 = vmatmul.f32.gmra.mxu0 %v1152
        %v1216 = vpop.f32.mrf.mxu0
        %v1217 = vadd.f32 0.0, %v1216
        %1218 = vmatmul.f32.gmra.mxu0 %v1155
        %v1219 = vpop.f32.mrf.mxu0
        %v1220 = vadd.f32 0.0, %v1219
        %1221 = vmatmul.f32.gmra.mxu0 %v1158
        %v1222 = vpop.f32.mrf.mxu0
        %v1223 = vadd.f32 0.0, %v1222
        %1224 = vmatmul.f32.gmra.mxu0 %v1161
        %v1225 = vpop.f32.mrf.mxu0
        %v1226 = vadd.f32 0.0, %v1225
        %1227 = vmatmul.f32.gmra.mxu0 %v1164
        %v1228 = vpop.f32.mrf.mxu0
        %v1229 = vadd.f32 0.0, %v1228
        %1230 = vmatmul.f32.gmra.mxu0 %v1167
        %v1231 = vpop.f32.mrf.mxu0
        %v1232 = vadd.f32 0.0, %v1231
        %1233 = vdwg.mxu0
        %1234 = vxpose.xlu0.b32.start [1/16] %v649, 128
        %1235 = vxpose.xlu0.b32.cont [2/16] 0.0, 128
        %1236 = vxpose.xlu0.b32.cont [3/16] 0.0, 128
        %1237 = vxpose.xlu0.b32.cont [4/16] 0.0, 128
        %1238 = vxpose.xlu0.b32.cont [5/16] 0.0, 128
        %1239 = vxpose.xlu0.b32.cont [6/16] 0.0, 128
        %1240 = vxpose.xlu0.b32.cont [7/16] 0.0, 128
        %1241 = vxpose.xlu0.b32.cont [8/16] 0.0, 128
        %1242 = vxpose.xlu0.b32.cont [9/16] 0.0, 128
        %1243 = vxpose.xlu0.b32.cont [10/16] 0.0, 128
        %1244 = vxpose.xlu0.b32.cont [11/16] 0.0, 128
        %1245 = vxpose.xlu0.b32.cont [12/16] 0.0, 128
        %1246 = vxpose.xlu0.b32.cont [13/16] 0.0, 128
        %1247 = vxpose.xlu0.b32.cont [14/16] 0.0, 128
        %1248 = vxpose.xlu0.b32.cont [15/16] 0.0, 128
        %1249 = vxpose.xlu0.b32.end [16/16] 0.0, 128
        %v1250 = vpop.trf.xlu0
        %v1251 = vpop.trf.xlu0
        %v1252 = vpop.trf.xlu0
        %v1253 = vpop.trf.xlu0
        %v1254 = vpop.trf.xlu0
        %v1255 = vpop.trf.xlu0
        %v1256 = vpop.trf.xlu0
        %v1257 = vpop.trf.xlu0
        %v1258 = vpop.trf.xlu0
        %v1259 = vpop.trf.xlu0
        %v1260 = vpop.trf.xlu0
        %v1261 = vpop.trf.xlu0
        %v1262 = vpop.trf.xlu0
        %v1263 = vpop.trf.xlu0
        %v1264 = vpop.trf.xlu0
        %v1265 = vpop.trf.xlu0
        %v1267 = vsel %vm685, %v1250, 0
        %v1270 = vsel %vm685, %v1251, 0
        %v1273 = vsel %vm685, %v1252, 0
        %v1276 = vsel %vm685, %v1253, 0
        %v1279 = vsel %vm685, %v1254, 0
        %v1282 = vsel %vm685, %v1255, 0
        %v1285 = vsel %vm685, %v1256, 0
        %v1288 = vsel %vm685, %v1257, 0
        %v1291 = vsel %vm685, %v1258, 0
        %v1294 = vsel %vm685, %v1259, 0
        %v1297 = vsel %vm685, %v1260, 0
        %v1300 = vsel %vm685, %v1261, 0
        %v1303 = vsel %vm685, %v1262, 0
        %v1306 = vsel %vm685, %v1263, 0
        %v1309 = vsel %vm685, %v1264, 0
        %v1312 = vsel %vm685, %v1265, 0
        %1314 = vmatpush.msra.mxu0 0.0
        %1315 = vmatpush.msra.mxu0 0.0
        %1316 = vmatpush.msra.mxu0 0.0
        %1317 = vmatpush.msra.mxu0 0.0
        %1318 = vmatpush.msra.mxu0 0.0
        %1319 = vmatpush.msra.mxu0 0.0
        %1320 = vmatpush.msra.mxu0 0.0
        %1321 = vmatpush.msra.mxu0 0.0
        %1322 = vmatpush.msra.mxu0 0.0
        %1323 = vmatpush.msra.mxu0 0.0
        %1324 = vmatpush.msra.mxu0 0.0
        %1325 = vmatpush.msra.mxu0 0.0
        %1326 = vmatpush.msra.mxu0 0.0
        %1327 = vmatpush.msra.mxu0 0.0
        %1328 = vmatpush.msra.mxu0 0.0
        %1329 = vmatpush.msra.mxu0 %v300
        %1330 = vmatmul.f32.gmra.mxu0 %v1267
        %v1331 = vpop.f32.mrf.mxu0
        %v1332 = vadd.f32 0.0, %v1331
        %1333 = vmatmul.f32.gmra.mxu0 %v1270
        %v1334 = vpop.f32.mrf.mxu0
        %v1335 = vadd.f32 0.0, %v1334
        %1336 = vmatmul.f32.gmra.mxu0 %v1273
        %v1337 = vpop.f32.mrf.mxu0
        %v1338 = vadd.f32 0.0, %v1337
        %1339 = vmatmul.f32.gmra.mxu0 %v1276
        %v1340 = vpop.f32.mrf.mxu0
        %v1341 = vadd.f32 0.0, %v1340
        %1342 = vmatmul.f32.gmra.mxu0 %v1279
        %v1343 = vpop.f32.mrf.mxu0
        %v1344 = vadd.f32 0.0, %v1343
        %1345 = vmatmul.f32.gmra.mxu0 %v1282
        %v1346 = vpop.f32.mrf.mxu0
        %v1347 = vadd.f32 0.0, %v1346
        %1348 = vmatmul.f32.gmra.mxu0 %v1285
        %v1349 = vpop.f32.mrf.mxu0
        %v1350 = vadd.f32 0.0, %v1349
        %1351 = vmatmul.f32.gmra.mxu0 %v1288
        %v1352 = vpop.f32.mrf.mxu0
        %v1353 = vadd.f32 0.0, %v1352
        %1354 = vmatmul.f32.gmra.mxu0 %v1291
        %v1355 = vpop.f32.mrf.mxu0
        %v1356 = vadd.f32 0.0, %v1355
        %1357 = vmatmul.f32.gmra.mxu0 %v1294
        %v1358 = vpop.f32.mrf.mxu0
        %v1359 = vadd.f32 0.0, %v1358
        %1360 = vmatmul.f32.gmra.mxu0 %v1297
        %v1361 = vpop.f32.mrf.mxu0
        %v1362 = vadd.f32 0.0, %v1361
        %1363 = vmatmul.f32.gmra.mxu0 %v1300
        %v1364 = vpop.f32.mrf.mxu0
        %v1365 = vadd.f32 0.0, %v1364
        %1366 = vmatmul.f32.gmra.mxu0 %v1303
        %v1367 = vpop.f32.mrf.mxu0
        %v1368 = vadd.f32 0.0, %v1367
        %1369 = vmatmul.f32.gmra.mxu0 %v1306
        %v1370 = vpop.f32.mrf.mxu0
        %v1371 = vadd.f32 0.0, %v1370
        %1372 = vmatmul.f32.gmra.mxu0 %v1309
        %v1373 = vpop.f32.mrf.mxu0
        %v1374 = vadd.f32 0.0, %v1373
        %1375 = vmatmul.f32.gmra.mxu0 %v1312
        %v1376 = vpop.f32.mrf.mxu0
        %v1377 = vadd.f32 0.0, %v1376
        %1378 = vdwg.mxu0
        %1379 = vxpose.xlu0.b32.start [1/16] %v650, 128
        %1380 = vxpose.xlu0.b32.cont [2/16] 0.0, 128
        %1381 = vxpose.xlu0.b32.cont [3/16] 0.0, 128
        %1382 = vxpose.xlu0.b32.cont [4/16] 0.0, 128
        %1383 = vxpose.xlu0.b32.cont [5/16] 0.0, 128
        %1384 = vxpose.xlu0.b32.cont [6/16] 0.0, 128
        %1385 = vxpose.xlu0.b32.cont [7/16] 0.0, 128
        %1386 = vxpose.xlu0.b32.cont [8/16] 0.0, 128
        %1387 = vxpose.xlu0.b32.cont [9/16] 0.0, 128
        %1388 = vxpose.xlu0.b32.cont [10/16] 0.0, 128
        %1389 = vxpose.xlu0.b32.cont [11/16] 0.0, 128
        %1390 = vxpose.xlu0.b32.cont [12/16] 0.0, 128
        %1391 = vxpose.xlu0.b32.cont [13/16] 0.0, 128
        %1392 = vxpose.xlu0.b32.cont [14/16] 0.0, 128
        %1393 = vxpose.xlu0.b32.cont [15/16] 0.0, 128
        %1394 = vxpose.xlu0.b32.end [16/16] 0.0, 128
        %v1395 = vpop.trf.xlu0
        %v1396 = vpop.trf.xlu0
        %v1397 = vpop.trf.xlu0
        %v1398 = vpop.trf.xlu0
        %v1399 = vpop.trf.xlu0
        %v1400 = vpop.trf.xlu0
        %v1401 = vpop.trf.xlu0
        %v1402 = vpop.trf.xlu0
        %v1403 = vpop.trf.xlu0
        %v1404 = vpop.trf.xlu0
        %v1405 = vpop.trf.xlu0
        %v1406 = vpop.trf.xlu0
        %v1407 = vpop.trf.xlu0
        %v1408 = vpop.trf.xlu0
        %v1409 = vpop.trf.xlu0
        %v1410 = vpop.trf.xlu0
        %v1412 = vsel %vm685, %v1395, 0
        %v1415 = vsel %vm685, %v1396, 0
        %v1418 = vsel %vm685, %v1397, 0
        %v1421 = vsel %vm685, %v1398, 0
        %v1424 = vsel %vm685, %v1399, 0
        %v1427 = vsel %vm685, %v1400, 0
        %v1430 = vsel %vm685, %v1401, 0
        %v1433 = vsel %vm685, %v1402, 0
        %v1436 = vsel %vm685, %v1403, 0
        %v1439 = vsel %vm685, %v1404, 0
        %v1442 = vsel %vm685, %v1405, 0
        %v1445 = vsel %vm685, %v1406, 0
        %v1448 = vsel %vm685, %v1407, 0
        %v1451 = vsel %vm685, %v1408, 0
        %v1454 = vsel %vm685, %v1409, 0
        %v1457 = vsel %vm685, %v1410, 0
        %1459 = vmatpush.msra.mxu0 0.0
        %1460 = vmatpush.msra.mxu0 0.0
        %1461 = vmatpush.msra.mxu0 0.0
        %1462 = vmatpush.msra.mxu0 0.0
        %1463 = vmatpush.msra.mxu0 0.0
        %1464 = vmatpush.msra.mxu0 0.0
        %1465 = vmatpush.msra.mxu0 0.0
        %1466 = vmatpush.msra.mxu0 0.0
        %1467 = vmatpush.msra.mxu0 0.0
        %1468 = vmatpush.msra.mxu0 0.0
        %1469 = vmatpush.msra.mxu0 0.0
        %1470 = vmatpush.msra.mxu0 0.0
        %1471 = vmatpush.msra.mxu0 0.0
        %1472 = vmatpush.msra.mxu0 0.0
        %1473 = vmatpush.msra.mxu0 0.0
        %1474 = vmatpush.msra.mxu0 %v301
        %1475 = vmatmul.f32.gmra.mxu0 %v1412
        %v1476 = vpop.f32.mrf.mxu0
        %v1477 = vadd.f32 0.0, %v1476
        %1478 = vmatmul.f32.gmra.mxu0 %v1415
        %v1479 = vpop.f32.mrf.mxu0
        %v1480 = vadd.f32 0.0, %v1479
        %1481 = vmatmul.f32.gmra.mxu0 %v1418
        %v1482 = vpop.f32.mrf.mxu0
        %v1483 = vadd.f32 0.0, %v1482
        %1484 = vmatmul.f32.gmra.mxu0 %v1421
        %v1485 = vpop.f32.mrf.mxu0
        %v1486 = vadd.f32 0.0, %v1485
        %1487 = vmatmul.f32.gmra.mxu0 %v1424
        %v1488 = vpop.f32.mrf.mxu0
        %v1489 = vadd.f32 0.0, %v1488
        %1490 = vmatmul.f32.gmra.mxu0 %v1427
        %v1491 = vpop.f32.mrf.mxu0
        %v1492 = vadd.f32 0.0, %v1491
        %1493 = vmatmul.f32.gmra.mxu0 %v1430
        %v1494 = vpop.f32.mrf.mxu0
        %v1495 = vadd.f32 0.0, %v1494
        %1496 = vmatmul.f32.gmra.mxu0 %v1433
        %v1497 = vpop.f32.mrf.mxu0
        %v1498 = vadd.f32 0.0, %v1497
        %1499 = vmatmul.f32.gmra.mxu0 %v1436
        %v1500 = vpop.f32.mrf.mxu0
        %v1501 = vadd.f32 0.0, %v1500
        %1502 = vmatmul.f32.gmra.mxu0 %v1439
        %v1503 = vpop.f32.mrf.mxu0
        %v1504 = vadd.f32 0.0, %v1503
        %1505 = vmatmul.f32.gmra.mxu0 %v1442
        %v1506 = vpop.f32.mrf.mxu0
        %v1507 = vadd.f32 0.0, %v1506
        %1508 = vmatmul.f32.gmra.mxu0 %v1445
        %v1509 = vpop.f32.mrf.mxu0
        %v1510 = vadd.f32 0.0, %v1509
        %1511 = vmatmul.f32.gmra.mxu0 %v1448
        %v1512 = vpop.f32.mrf.mxu0
        %v1513 = vadd.f32 0.0, %v1512
        %1514 = vmatmul.f32.gmra.mxu0 %v1451
        %v1515 = vpop.f32.mrf.mxu0
        %v1516 = vadd.f32 0.0, %v1515
        %1517 = vmatmul.f32.gmra.mxu0 %v1454
        %v1518 = vpop.f32.mrf.mxu0
        %v1519 = vadd.f32 0.0, %v1518
        %1520 = vmatmul.f32.gmra.mxu0 %v1457
        %v1521 = vpop.f32.mrf.mxu0
        %v1522 = vadd.f32 0.0, %v1521
        %1523 = vdwg.mxu0
        %1524 = vxpose.xlu0.b32.start [1/16] %v651, 128
        %1525 = vxpose.xlu0.b32.cont [2/16] 0.0, 128
        %1526 = vxpose.xlu0.b32.cont [3/16] 0.0, 128
        %1527 = vxpose.xlu0.b32.cont [4/16] 0.0, 128
        %1528 = vxpose.xlu0.b32.cont [5/16] 0.0, 128
        %1529 = vxpose.xlu0.b32.cont [6/16] 0.0, 128
        %1530 = vxpose.xlu0.b32.cont [7/16] 0.0, 128
        %1531 = vxpose.xlu0.b32.cont [8/16] 0.0, 128
        %1532 = vxpose.xlu0.b32.cont [9/16] 0.0, 128
        %1533 = vxpose.xlu0.b32.cont [10/16] 0.0, 128
        %1534 = vxpose.xlu0.b32.cont [11/16] 0.0, 128
        %1535 = vxpose.xlu0.b32.cont [12/16] 0.0, 128
        %1536 = vxpose.xlu0.b32.cont [13/16] 0.0, 128
        %1537 = vxpose.xlu0.b32.cont [14/16] 0.0, 128
        %1538 = vxpose.xlu0.b32.cont [15/16] 0.0, 128
        %1539 = vxpose.xlu0.b32.end [16/16] 0.0, 128
        %v1540 = vpop.trf.xlu0
        %v1541 = vpop.trf.xlu0
        %v1542 = vpop.trf.xlu0
        %v1543 = vpop.trf.xlu0
        %v1544 = vpop.trf.xlu0
        %v1545 = vpop.trf.xlu0
        %v1546 = vpop.trf.xlu0
        %v1547 = vpop.trf.xlu0
        %v1548 = vpop.trf.xlu0
        %v1549 = vpop.trf.xlu0
        %v1550 = vpop.trf.xlu0
        %v1551 = vpop.trf.xlu0
        %v1552 = vpop.trf.xlu0
        %v1553 = vpop.trf.xlu0
        %v1554 = vpop.trf.xlu0
        %v1555 = vpop.trf.xlu0
        %v1557 = vsel %vm685, %v1540, 0
        %v1560 = vsel %vm685, %v1541, 0
        %v1563 = vsel %vm685, %v1542, 0
        %v1566 = vsel %vm685, %v1543, 0
        %v1569 = vsel %vm685, %v1544, 0
        %v1572 = vsel %vm685, %v1545, 0
        %v1575 = vsel %vm685, %v1546, 0
        %v1578 = vsel %vm685, %v1547, 0
        %v1581 = vsel %vm685, %v1548, 0
        %v1584 = vsel %vm685, %v1549, 0
        %v1587 = vsel %vm685, %v1550, 0
        %v1590 = vsel %vm685, %v1551, 0
        %v1593 = vsel %vm685, %v1552, 0
        %v1596 = vsel %vm685, %v1553, 0
        %v1599 = vsel %vm685, %v1554, 0
        %v1602 = vsel %vm685, %v1555, 0
        %1604 = vmatpush.msra.mxu0 0.0
        %1605 = vmatpush.msra.mxu0 0.0
        %1606 = vmatpush.msra.mxu0 0.0
        %1607 = vmatpush.msra.mxu0 0.0
        %1608 = vmatpush.msra.mxu0 0.0
        %1609 = vmatpush.msra.mxu0 0.0
        %1610 = vmatpush.msra.mxu0 0.0
        %1611 = vmatpush.msra.mxu0 0.0
        %1612 = vmatpush.msra.mxu0 0.0
        %1613 = vmatpush.msra.mxu0 0.0
        %1614 = vmatpush.msra.mxu0 0.0
        %1615 = vmatpush.msra.mxu0 0.0
        %1616 = vmatpush.msra.mxu0 0.0
        %1617 = vmatpush.msra.mxu0 0.0
        %1618 = vmatpush.msra.mxu0 0.0
        %1619 = vmatpush.msra.mxu0 %v302
        %1620 = vmatmul.f32.gmra.mxu0 %v1557
        %v1621 = vpop.f32.mrf.mxu0
        %v1622 = vadd.f32 0.0, %v1621
        %1623 = vmatmul.f32.gmra.mxu0 %v1560
        %v1624 = vpop.f32.mrf.mxu0
        %v1625 = vadd.f32 0.0, %v1624
        %1626 = vmatmul.f32.gmra.mxu0 %v1563
        %v1627 = vpop.f32.mrf.mxu0
        %v1628 = vadd.f32 0.0, %v1627
        %1629 = vmatmul.f32.gmra.mxu0 %v1566
        %v1630 = vpop.f32.mrf.mxu0
        %v1631 = vadd.f32 0.0, %v1630
        %1632 = vmatmul.f32.gmra.mxu0 %v1569
        %v1633 = vpop.f32.mrf.mxu0
        %v1634 = vadd.f32 0.0, %v1633
        %1635 = vmatmul.f32.gmra.mxu0 %v1572
        %v1636 = vpop.f32.mrf.mxu0
        %v1637 = vadd.f32 0.0, %v1636
        %1638 = vmatmul.f32.gmra.mxu0 %v1575
        %v1639 = vpop.f32.mrf.mxu0
        %v1640 = vadd.f32 0.0, %v1639
        %1641 = vmatmul.f32.gmra.mxu0 %v1578
        %v1642 = vpop.f32.mrf.mxu0
        %v1643 = vadd.f32 0.0, %v1642
        %1644 = vmatmul.f32.gmra.mxu0 %v1581
        %v1645 = vpop.f32.mrf.mxu0
        %v1646 = vadd.f32 0.0, %v1645
        %1647 = vmatmul.f32.gmra.mxu0 %v1584
        %v1648 = vpop.f32.mrf.mxu0
        %v1649 = vadd.f32 0.0, %v1648
        %1650 = vmatmul.f32.gmra.mxu0 %v1587
        %v1651 = vpop.f32.mrf.mxu0
        %v1652 = vadd.f32 0.0, %v1651
        %1653 = vmatmul.f32.gmra.mxu0 %v1590
        %v1654 = vpop.f32.mrf.mxu0
        %v1655 = vadd.f32 0.0, %v1654
        %1656 = vmatmul.f32.gmra.mxu0 %v1593
        %v1657 = vpop.f32.mrf.mxu0
        %v1658 = vadd.f32 0.0, %v1657
        %1659 = vmatmul.f32.gmra.mxu0 %v1596
        %v1660 = vpop.f32.mrf.mxu0
        %v1661 = vadd.f32 0.0, %v1660
        %1662 = vmatmul.f32.gmra.mxu0 %v1599
        %v1663 = vpop.f32.mrf.mxu0
        %v1664 = vadd.f32 0.0, %v1663
        %1665 = vmatmul.f32.gmra.mxu0 %v1602
        %v1666 = vpop.f32.mrf.mxu0
        %v1667 = vadd.f32 0.0, %v1666
        %1668 = vdwg.mxu0
        %1669 = vxpose.xlu0.b32.start [1/16] %v652, 128
        %1670 = vxpose.xlu0.b32.cont [2/16] 0.0, 128
        %1671 = vxpose.xlu0.b32.cont [3/16] 0.0, 128
        %1672 = vxpose.xlu0.b32.cont [4/16] 0.0, 128
        %1673 = vxpose.xlu0.b32.cont [5/16] 0.0, 128
        %1674 = vxpose.xlu0.b32.cont [6/16] 0.0, 128
        %1675 = vxpose.xlu0.b32.cont [7/16] 0.0, 128
        %1676 = vxpose.xlu0.b32.cont [8/16] 0.0, 128
        %1677 = vxpose.xlu0.b32.cont [9/16] 0.0, 128
        %1678 = vxpose.xlu0.b32.cont [10/16] 0.0, 128
        %1679 = vxpose.xlu0.b32.cont [11/16] 0.0, 128
        %1680 = vxpose.xlu0.b32.cont [12/16] 0.0, 128
        %1681 = vxpose.xlu0.b32.cont [13/16] 0.0, 128
        %1682 = vxpose.xlu0.b32.cont [14/16] 0.0, 128
        %1683 = vxpose.xlu0.b32.cont [15/16] 0.0, 128
        %1684 = vxpose.xlu0.b32.end [16/16] 0.0, 128
        %v1685 = vpop.trf.xlu0
        %v1686 = vpop.trf.xlu0
        %v1687 = vpop.trf.xlu0
        %v1688 = vpop.trf.xlu0
        %v1689 = vpop.trf.xlu0
        %v1690 = vpop.trf.xlu0
        %v1691 = vpop.trf.xlu0
        %v1692 = vpop.trf.xlu0
        %v1693 = vpop.trf.xlu0
        %v1694 = vpop.trf.xlu0
        %v1695 = vpop.trf.xlu0
        %v1696 = vpop.trf.xlu0
        %v1697 = vpop.trf.xlu0
        %v1698 = vpop.trf.xlu0
        %v1699 = vpop.trf.xlu0
        %v1700 = vpop.trf.xlu0
        %v1702 = vsel %vm685, %v1685, 0
        %v1705 = vsel %vm685, %v1686, 0
        %v1708 = vsel %vm685, %v1687, 0
        %v1711 = vsel %vm685, %v1688, 0
        %v1714 = vsel %vm685, %v1689, 0
        %v1717 = vsel %vm685, %v1690, 0
        %v1720 = vsel %vm685, %v1691, 0
        %v1723 = vsel %vm685, %v1692, 0
        %v1726 = vsel %vm685, %v1693, 0
        %v1729 = vsel %vm685, %v1694, 0
        %v1732 = vsel %vm685, %v1695, 0
        %v1735 = vsel %vm685, %v1696, 0
        %v1738 = vsel %vm685, %v1697, 0
        %v1741 = vsel %vm685, %v1698, 0
        %v1744 = vsel %vm685, %v1699, 0
        %v1747 = vsel %vm685, %v1700, 0
        %1749 = vmatpush.msra.mxu0 0.0
        %1750 = vmatpush.msra.mxu0 0.0
        %1751 = vmatpush.msra.mxu0 0.0
        %1752 = vmatpush.msra.mxu0 0.0
        %1753 = vmatpush.msra.mxu0 0.0
        %1754 = vmatpush.msra.mxu0 0.0
        %1755 = vmatpush.msra.mxu0 0.0
        %1756 = vmatpush.msra.mxu0 0.0
        %1757 = vmatpush.msra.mxu0 0.0
        %1758 = vmatpush.msra.mxu0 0.0
        %1759 = vmatpush.msra.mxu0 0.0
        %1760 = vmatpush.msra.mxu0 0.0
        %1761 = vmatpush.msra.mxu0 0.0
        %1762 = vmatpush.msra.mxu0 0.0
        %1763 = vmatpush.msra.mxu0 0.0
        %1764 = vmatpush.msra.mxu0 %v303
        %1765 = vmatmul.f32.gmra.mxu0 %v1702
        %v1766 = vpop.f32.mrf.mxu0
        %v1767 = vadd.f32 0.0, %v1766
        %1768 = vmatmul.f32.gmra.mxu0 %v1705
        %v1769 = vpop.f32.mrf.mxu0
        %v1770 = vadd.f32 0.0, %v1769
        %1771 = vmatmul.f32.gmra.mxu0 %v1708
        %v1772 = vpop.f32.mrf.mxu0
        %v1773 = vadd.f32 0.0, %v1772
        %1774 = vmatmul.f32.gmra.mxu0 %v1711
        %v1775 = vpop.f32.mrf.mxu0
        %v1776 = vadd.f32 0.0, %v1775
        %1777 = vmatmul.f32.gmra.mxu0 %v1714
        %v1778 = vpop.f32.mrf.mxu0
        %v1779 = vadd.f32 0.0, %v1778
        %1780 = vmatmul.f32.gmra.mxu0 %v1717
        %v1781 = vpop.f32.mrf.mxu0
        %v1782 = vadd.f32 0.0, %v1781
        %1783 = vmatmul.f32.gmra.mxu0 %v1720
        %v1784 = vpop.f32.mrf.mxu0
        %v1785 = vadd.f32 0.0, %v1784
        %1786 = vmatmul.f32.gmra.mxu0 %v1723
        %v1787 = vpop.f32.mrf.mxu0
        %v1788 = vadd.f32 0.0, %v1787
        %1789 = vmatmul.f32.gmra.mxu0 %v1726
        %v1790 = vpop.f32.mrf.mxu0
        %v1791 = vadd.f32 0.0, %v1790
        %1792 = vmatmul.f32.gmra.mxu0 %v1729
        %v1793 = vpop.f32.mrf.mxu0
        %v1794 = vadd.f32 0.0, %v1793
        %1795 = vmatmul.f32.gmra.mxu0 %v1732
        %v1796 = vpop.f32.mrf.mxu0
        %v1797 = vadd.f32 0.0, %v1796
        %1798 = vmatmul.f32.gmra.mxu0 %v1735
        %v1799 = vpop.f32.mrf.mxu0
        %v1800 = vadd.f32 0.0, %v1799
        %1801 = vmatmul.f32.gmra.mxu0 %v1738
        %v1802 = vpop.f32.mrf.mxu0
        %v1803 = vadd.f32 0.0, %v1802
        %1804 = vmatmul.f32.gmra.mxu0 %v1741
        %v1805 = vpop.f32.mrf.mxu0
        %v1806 = vadd.f32 0.0, %v1805
        %1807 = vmatmul.f32.gmra.mxu0 %v1744
        %v1808 = vpop.f32.mrf.mxu0
        %v1809 = vadd.f32 0.0, %v1808
        %1810 = vmatmul.f32.gmra.mxu0 %v1747
        %v1811 = vpop.f32.mrf.mxu0
        %v1812 = vadd.f32 0.0, %v1811
        %1813 = vdwg.mxu0
        %v1815 = vsel %vm350, %v752, 0
        %v1818 = vsel %vm350, %v755, 0
        %v1821 = vsel %vm350, %v758, 0
        %v1824 = vsel %vm350, %v761, 0
        %v1827 = vsel %vm350, %v764, 0
        %v1830 = vsel %vm350, %v767, 0
        %v1833 = vsel %vm350, %v770, 0
        %v1836 = vsel %vm350, %v773, 0
        %v1839 = vsel %vm350, %v776, 0
        %v1842 = vsel %vm350, %v779, 0
        %v1845 = vsel %vm350, %v782, 0
        %v1848 = vsel %vm350, %v785, 0
        %v1851 = vsel %vm350, %v788, 0
        %v1854 = vsel %vm350, %v791, 0
        %v1857 = vsel %vm350, %v794, 0
        %v1860 = vsel %vm350, %v797, 0
        %v1863 = vsel %vm350, %v897, 0
        %v1866 = vsel %vm350, %v900, 0
        %v1869 = vsel %vm350, %v903, 0
        %v1872 = vsel %vm350, %v906, 0
        %v1875 = vsel %vm350, %v909, 0
        %v1878 = vsel %vm350, %v912, 0
        %v1881 = vsel %vm350, %v915, 0
        %v1884 = vsel %vm350, %v918, 0
        %v1887 = vsel %vm350, %v921, 0
        %v1890 = vsel %vm350, %v924, 0
        %v1893 = vsel %vm350, %v927, 0
        %v1896 = vsel %vm350, %v930, 0
        %v1899 = vsel %vm350, %v933, 0
        %v1902 = vsel %vm350, %v936, 0
        %v1905 = vsel %vm350, %v939, 0
        %v1908 = vsel %vm350, %v942, 0
        %v1911 = vsel %vm350, %v1042, 0
        %v1914 = vsel %vm350, %v1045, 0
        %v1917 = vsel %vm350, %v1048, 0
        %v1920 = vsel %vm350, %v1051, 0
        %v1923 = vsel %vm350, %v1054, 0
        %v1926 = vsel %vm350, %v1057, 0
        %v1929 = vsel %vm350, %v1060, 0
        %v1932 = vsel %vm350, %v1063, 0
        %v1935 = vsel %vm350, %v1066, 0
        %v1938 = vsel %vm350, %v1069, 0
        %v1941 = vsel %vm350, %v1072, 0
        %v1944 = vsel %vm350, %v1075, 0
        %v1947 = vsel %vm350, %v1078, 0
        %v1950 = vsel %vm350, %v1081, 0
        %v1953 = vsel %vm350, %v1084, 0
        %v1956 = vsel %vm350, %v1087, 0
        %v1959 = vsel %vm350, %v1187, 0
        %v1962 = vsel %vm350, %v1190, 0
        %v1965 = vsel %vm350, %v1193, 0
        %v1968 = vsel %vm350, %v1196, 0
        %v1971 = vsel %vm350, %v1199, 0
        %v1974 = vsel %vm350, %v1202, 0
        %v1977 = vsel %vm350, %v1205, 0
        %v1980 = vsel %vm350, %v1208, 0
        %v1983 = vsel %vm350, %v1211, 0
        %v1986 = vsel %vm350, %v1214, 0
        %v1989 = vsel %vm350, %v1217, 0
        %v1992 = vsel %vm350, %v1220, 0
        %v1995 = vsel %vm350, %v1223, 0
        %v1998 = vsel %vm350, %v1226, 0
        %v2001 = vsel %vm350, %v1229, 0
        %v2004 = vsel %vm350, %v1232, 0
        %v2007 = vsel %vm350, %v1332, 0
        %v2010 = vsel %vm350, %v1335, 0
        %v2013 = vsel %vm350, %v1338, 0
        %v2016 = vsel %vm350, %v1341, 0
        %v2019 = vsel %vm350, %v1344, 0
        %v2022 = vsel %vm350, %v1347, 0
        %v2025 = vsel %vm350, %v1350, 0
        %v2028 = vsel %vm350, %v1353, 0
        %v2031 = vsel %vm350, %v1356, 0
        %v2034 = vsel %vm350, %v1359, 0
        %v2037 = vsel %vm350, %v1362, 0
        %v2040 = vsel %vm350, %v1365, 0
        %v2043 = vsel %vm350, %v1368, 0
        %v2046 = vsel %vm350, %v1371, 0
        %v2049 = vsel %vm350, %v1374, 0
        %v2052 = vsel %vm350, %v1377, 0
        %v2055 = vsel %vm350, %v1477, 0
        %v2058 = vsel %vm350, %v1480, 0
        %v2061 = vsel %vm350, %v1483, 0
        %v2064 = vsel %vm350, %v1486, 0
        %v2067 = vsel %vm350, %v1489, 0
        %v2070 = vsel %vm350, %v1492, 0
        %v2073 = vsel %vm350, %v1495, 0
        %v2076 = vsel %vm350, %v1498, 0
        %v2079 = vsel %vm350, %v1501, 0
        %v2082 = vsel %vm350, %v1504, 0
        %v2085 = vsel %vm350, %v1507, 0
        %v2088 = vsel %vm350, %v1510, 0
        %v2091 = vsel %vm350, %v1513, 0
        %v2094 = vsel %vm350, %v1516, 0
        %v2097 = vsel %vm350, %v1519, 0
        %v2100 = vsel %vm350, %v1522, 0
        %v2103 = vsel %vm350, %v1622, 0
        %v2106 = vsel %vm350, %v1625, 0
        %v2109 = vsel %vm350, %v1628, 0
        %v2112 = vsel %vm350, %v1631, 0
        %v2115 = vsel %vm350, %v1634, 0
        %v2118 = vsel %vm350, %v1637, 0
        %v2121 = vsel %vm350, %v1640, 0
        %v2124 = vsel %vm350, %v1643, 0
        %v2127 = vsel %vm350, %v1646, 0
        %v2130 = vsel %vm350, %v1649, 0
        %v2133 = vsel %vm350, %v1652, 0
        %v2136 = vsel %vm350, %v1655, 0
        %v2139 = vsel %vm350, %v1658, 0
        %v2142 = vsel %vm350, %v1661, 0
        %v2145 = vsel %vm350, %v1664, 0
        %v2148 = vsel %vm350, %v1667, 0
        %v2151 = vsel %vm350, %v1767, 0
        %v2154 = vsel %vm350, %v1770, 0
        %v2157 = vsel %vm350, %v1773, 0
        %v2160 = vsel %vm350, %v1776, 0
        %v2163 = vsel %vm350, %v1779, 0
        %v2166 = vsel %vm350, %v1782, 0
        %v2169 = vsel %vm350, %v1785, 0
        %v2172 = vsel %vm350, %v1788, 0
        %v2175 = vsel %vm350, %v1791, 0
        %v2178 = vsel %vm350, %v1794, 0
        %v2181 = vsel %vm350, %v1797, 0
        %v2184 = vsel %vm350, %v1800, 0
        %v2187 = vsel %vm350, %v1803, 0
        %v2190 = vsel %vm350, %v1806, 0
        %v2193 = vsel %vm350, %v1809, 0
        %v2196 = vsel %vm350, %v1812, 0
        %2198 = vmatpush.msra.mxu0 0.0
        %2199 = vmatpush.msra.mxu0 0.0
        %2200 = vmatpush.msra.mxu0 0.0
        %2201 = vmatpush.msra.mxu0 0.0
        %2202 = vmatpush.msra.mxu0 0.0
        %2203 = vmatpush.msra.mxu0 0.0
        %2204 = vmatpush.msra.mxu0 0.0
        %2205 = vmatpush.msra.mxu0 0.0
        %2206 = vmatpush.msra.mxu0 %v311
        %2207 = vmatpush.msra.mxu0 %v310
        %2208 = vmatpush.msra.mxu0 %v309
        %2209 = vmatpush.msra.mxu0 %v308
        %2210 = vmatpush.msra.mxu0 %v307
        %2211 = vmatpush.msra.mxu0 %v306
        %2212 = vmatpush.msra.mxu0 %v305
        %2213 = vmatpush.msra.mxu0 %v304
        %2214 = vmatmul.f32.gmra.mxu0 %v1815
        %v2215 = vpop.f32.mrf.mxu0
        %v2216 = vadd.f32 %v348, %v2215
        %2217 = vmatmul.f32.gmra.mxu0 %v1818
        %v2218 = vpop.f32.mrf.mxu0
        %v2219 = vadd.f32 %v348, %v2218
        %2220 = vmatmul.f32.gmra.mxu0 %v1821
        %v2221 = vpop.f32.mrf.mxu0
        %v2222 = vadd.f32 %v348, %v2221
        %2223 = vmatmul.f32.gmra.mxu0 %v1824
        %v2224 = vpop.f32.mrf.mxu0
        %v2225 = vadd.f32 %v348, %v2224
        %2226 = vmatmul.f32.gmra.mxu0 %v1827
        %v2227 = vpop.f32.mrf.mxu0
        %v2228 = vadd.f32 %v348, %v2227
        %2229 = vmatmul.f32.gmra.mxu0 %v1830
        %v2230 = vpop.f32.mrf.mxu0
        %v2231 = vadd.f32 %v348, %v2230
        %2232 = vmatmul.f32.gmra.mxu0 %v1833
        %v2233 = vpop.f32.mrf.mxu0
        %v2234 = vadd.f32 %v348, %v2233
        %2235 = vmatmul.f32.gmra.mxu0 %v1836
        %v2236 = vpop.f32.mrf.mxu0
        %v2237 = vadd.f32 %v348, %v2236
        %2238 = vmatmul.f32.gmra.mxu0 %v1839
        %v2239 = vpop.f32.mrf.mxu0
        %v2240 = vadd.f32 %v348, %v2239
        %2241 = vmatmul.f32.gmra.mxu0 %v1842
        %v2242 = vpop.f32.mrf.mxu0
        %v2243 = vadd.f32 %v348, %v2242
        %2244 = vmatmul.f32.gmra.mxu0 %v1845
        %v2245 = vpop.f32.mrf.mxu0
        %v2246 = vadd.f32 %v348, %v2245
        %2247 = vmatmul.f32.gmra.mxu0 %v1848
        %v2248 = vpop.f32.mrf.mxu0
        %v2249 = vadd.f32 %v348, %v2248
        %2250 = vmatmul.f32.gmra.mxu0 %v1851
        %v2251 = vpop.f32.mrf.mxu0
        %v2252 = vadd.f32 %v348, %v2251
        %2253 = vmatmul.f32.gmra.mxu0 %v1854
        %v2254 = vpop.f32.mrf.mxu0
        %v2255 = vadd.f32 %v348, %v2254
        %2256 = vmatmul.f32.gmra.mxu0 %v1857
        %v2257 = vpop.f32.mrf.mxu0
        %v2258 = vadd.f32 %v348, %v2257
        %2259 = vmatmul.f32.gmra.mxu0 %v1860
        %v2260 = vpop.f32.mrf.mxu0
        %v2261 = vadd.f32 %v348, %v2260
        %2262 = vmatmul.f32.gmra.mxu0 %v1863
        %v2263 = vpop.f32.mrf.mxu0
        %v2264 = vadd.f32 %v348, %v2263
        %2265 = vmatmul.f32.gmra.mxu0 %v1866
        %v2266 = vpop.f32.mrf.mxu0
        %v2267 = vadd.f32 %v348, %v2266
        %2268 = vmatmul.f32.gmra.mxu0 %v1869
        %v2269 = vpop.f32.mrf.mxu0
        %v2270 = vadd.f32 %v348, %v2269
        %2271 = vmatmul.f32.gmra.mxu0 %v1872
        %v2272 = vpop.f32.mrf.mxu0
        %v2273 = vadd.f32 %v348, %v2272
        %2274 = vmatmul.f32.gmra.mxu0 %v1875
        %v2275 = vpop.f32.mrf.mxu0
        %v2276 = vadd.f32 %v348, %v2275
        %2277 = vmatmul.f32.gmra.mxu0 %v1878
        %v2278 = vpop.f32.mrf.mxu0
        %v2279 = vadd.f32 %v348, %v2278
        %2280 = vmatmul.f32.gmra.mxu0 %v1881
        %v2281 = vpop.f32.mrf.mxu0
        %v2282 = vadd.f32 %v348, %v2281
        %2283 = vmatmul.f32.gmra.mxu0 %v1884
        %v2284 = vpop.f32.mrf.mxu0
        %v2285 = vadd.f32 %v348, %v2284
        %2286 = vmatmul.f32.gmra.mxu0 %v1887
        %v2287 = vpop.f32.mrf.mxu0
        %v2288 = vadd.f32 %v348, %v2287
        %2289 = vmatmul.f32.gmra.mxu0 %v1890
        %v2290 = vpop.f32.mrf.mxu0
        %v2291 = vadd.f32 %v348, %v2290
        %2292 = vmatmul.f32.gmra.mxu0 %v1893
        %v2293 = vpop.f32.mrf.mxu0
        %v2294 = vadd.f32 %v348, %v2293
        %2295 = vmatmul.f32.gmra.mxu0 %v1896
        %v2296 = vpop.f32.mrf.mxu0
        %v2297 = vadd.f32 %v348, %v2296
        %2298 = vmatmul.f32.gmra.mxu0 %v1899
        %v2299 = vpop.f32.mrf.mxu0
        %v2300 = vadd.f32 %v348, %v2299
        %2301 = vmatmul.f32.gmra.mxu0 %v1902
        %v2302 = vpop.f32.mrf.mxu0
        %v2303 = vadd.f32 %v348, %v2302
        %2304 = vmatmul.f32.gmra.mxu0 %v1905
        %v2305 = vpop.f32.mrf.mxu0
        %v2306 = vadd.f32 %v348, %v2305
        %2307 = vmatmul.f32.gmra.mxu0 %v1908
        %v2308 = vpop.f32.mrf.mxu0
        %v2309 = vadd.f32 %v348, %v2308
        %2310 = vmatmul.f32.gmra.mxu0 %v1911
        %v2311 = vpop.f32.mrf.mxu0
        %v2312 = vadd.f32 %v348, %v2311
        %2313 = vmatmul.f32.gmra.mxu0 %v1914
        %v2314 = vpop.f32.mrf.mxu0
        %v2315 = vadd.f32 %v348, %v2314
        %2316 = vmatmul.f32.gmra.mxu0 %v1917
        %v2317 = vpop.f32.mrf.mxu0
        %v2318 = vadd.f32 %v348, %v2317
        %2319 = vmatmul.f32.gmra.mxu0 %v1920
        %v2320 = vpop.f32.mrf.mxu0
        %v2321 = vadd.f32 %v348, %v2320
        %2322 = vmatmul.f32.gmra.mxu0 %v1923
        %v2323 = vpop.f32.mrf.mxu0
        %v2324 = vadd.f32 %v348, %v2323
        %2325 = vmatmul.f32.gmra.mxu0 %v1926
        %v2326 = vpop.f32.mrf.mxu0
        %v2327 = vadd.f32 %v348, %v2326
        %2328 = vmatmul.f32.gmra.mxu0 %v1929
        %v2329 = vpop.f32.mrf.mxu0
        %v2330 = vadd.f32 %v348, %v2329
        %2331 = vmatmul.f32.gmra.mxu0 %v1932
        %v2332 = vpop.f32.mrf.mxu0
        %v2333 = vadd.f32 %v348, %v2332
        %2334 = vmatmul.f32.gmra.mxu0 %v1935
        %v2335 = vpop.f32.mrf.mxu0
        %v2336 = vadd.f32 %v348, %v2335
        %2337 = vmatmul.f32.gmra.mxu0 %v1938
        %v2338 = vpop.f32.mrf.mxu0
        %v2339 = vadd.f32 %v348, %v2338
        %2340 = vmatmul.f32.gmra.mxu0 %v1941
        %v2341 = vpop.f32.mrf.mxu0
        %v2342 = vadd.f32 %v348, %v2341
        %2343 = vmatmul.f32.gmra.mxu0 %v1944
        %v2344 = vpop.f32.mrf.mxu0
        %v2345 = vadd.f32 %v348, %v2344
        %2346 = vmatmul.f32.gmra.mxu0 %v1947
        %v2347 = vpop.f32.mrf.mxu0
        %v2348 = vadd.f32 %v348, %v2347
        %2349 = vmatmul.f32.gmra.mxu0 %v1950
        %v2350 = vpop.f32.mrf.mxu0
        %v2351 = vadd.f32 %v348, %v2350
        %2352 = vmatmul.f32.gmra.mxu0 %v1953
        %v2353 = vpop.f32.mrf.mxu0
        %v2354 = vadd.f32 %v348, %v2353
        %2355 = vmatmul.f32.gmra.mxu0 %v1956
        %v2356 = vpop.f32.mrf.mxu0
        %v2357 = vadd.f32 %v348, %v2356
        %2358 = vmatmul.f32.gmra.mxu0 %v1959
        %v2359 = vpop.f32.mrf.mxu0
        %v2360 = vadd.f32 %v348, %v2359
        %2361 = vmatmul.f32.gmra.mxu0 %v1962
        %v2362 = vpop.f32.mrf.mxu0
        %v2363 = vadd.f32 %v348, %v2362
        %2364 = vmatmul.f32.gmra.mxu0 %v1965
        %v2365 = vpop.f32.mrf.mxu0
        %v2366 = vadd.f32 %v348, %v2365
        %2367 = vmatmul.f32.gmra.mxu0 %v1968
        %v2368 = vpop.f32.mrf.mxu0
        %v2369 = vadd.f32 %v348, %v2368
        %2370 = vmatmul.f32.gmra.mxu0 %v1971
        %v2371 = vpop.f32.mrf.mxu0
        %v2372 = vadd.f32 %v348, %v2371
        %2373 = vmatmul.f32.gmra.mxu0 %v1974
        %v2374 = vpop.f32.mrf.mxu0
        %v2375 = vadd.f32 %v348, %v2374
        %2376 = vmatmul.f32.gmra.mxu0 %v1977
        %v2377 = vpop.f32.mrf.mxu0
        %v2378 = vadd.f32 %v348, %v2377
        %2379 = vmatmul.f32.gmra.mxu0 %v1980
        %v2380 = vpop.f32.mrf.mxu0
        %v2381 = vadd.f32 %v348, %v2380
        %2382 = vmatmul.f32.gmra.mxu0 %v1983
        %v2383 = vpop.f32.mrf.mxu0
        %v2384 = vadd.f32 %v348, %v2383
        %2385 = vmatmul.f32.gmra.mxu0 %v1986
        %v2386 = vpop.f32.mrf.mxu0
        %v2387 = vadd.f32 %v348, %v2386
        %2388 = vmatmul.f32.gmra.mxu0 %v1989
        %v2389 = vpop.f32.mrf.mxu0
        %v2390 = vadd.f32 %v348, %v2389
        %2391 = vmatmul.f32.gmra.mxu0 %v1992
        %v2392 = vpop.f32.mrf.mxu0
        %v2393 = vadd.f32 %v348, %v2392
        %2394 = vmatmul.f32.gmra.mxu0 %v1995
        %v2395 = vpop.f32.mrf.mxu0
        %v2396 = vadd.f32 %v348, %v2395
        %2397 = vmatmul.f32.gmra.mxu0 %v1998
        %v2398 = vpop.f32.mrf.mxu0
        %v2399 = vadd.f32 %v348, %v2398
        %2400 = vmatmul.f32.gmra.mxu0 %v2001
        %v2401 = vpop.f32.mrf.mxu0
        %v2402 = vadd.f32 %v348, %v2401
        %2403 = vmatmul.f32.gmra.mxu0 %v2004
        %v2404 = vpop.f32.mrf.mxu0
        %v2405 = vadd.f32 %v348, %v2404
        %2406 = vmatmul.f32.gmra.mxu0 %v2007
        %v2407 = vpop.f32.mrf.mxu0
        %v2408 = vadd.f32 %v348, %v2407
        %2409 = vmatmul.f32.gmra.mxu0 %v2010
        %v2410 = vpop.f32.mrf.mxu0
        %v2411 = vadd.f32 %v348, %v2410
        %2412 = vmatmul.f32.gmra.mxu0 %v2013
        %v2413 = vpop.f32.mrf.mxu0
        %v2414 = vadd.f32 %v348, %v2413
        %2415 = vmatmul.f32.gmra.mxu0 %v2016
        %v2416 = vpop.f32.mrf.mxu0
        %v2417 = vadd.f32 %v348, %v2416
        %2418 = vmatmul.f32.gmra.mxu0 %v2019
        %v2419 = vpop.f32.mrf.mxu0
        %v2420 = vadd.f32 %v348, %v2419
        %2421 = vmatmul.f32.gmra.mxu0 %v2022
        %v2422 = vpop.f32.mrf.mxu0
        %v2423 = vadd.f32 %v348, %v2422
        %2424 = vmatmul.f32.gmra.mxu0 %v2025
        %v2425 = vpop.f32.mrf.mxu0
        %v2426 = vadd.f32 %v348, %v2425
        %2427 = vmatmul.f32.gmra.mxu0 %v2028
        %v2428 = vpop.f32.mrf.mxu0
        %v2429 = vadd.f32 %v348, %v2428
        %2430 = vmatmul.f32.gmra.mxu0 %v2031
        %v2431 = vpop.f32.mrf.mxu0
        %v2432 = vadd.f32 %v348, %v2431
        %2433 = vmatmul.f32.gmra.mxu0 %v2034
        %v2434 = vpop.f32.mrf.mxu0
        %v2435 = vadd.f32 %v348, %v2434
        %2436 = vmatmul.f32.gmra.mxu0 %v2037
        %v2437 = vpop.f32.mrf.mxu0
        %v2438 = vadd.f32 %v348, %v2437
        %2439 = vmatmul.f32.gmra.mxu0 %v2040
        %v2440 = vpop.f32.mrf.mxu0
        %v2441 = vadd.f32 %v348, %v2440
        %2442 = vmatmul.f32.gmra.mxu0 %v2043
        %v2443 = vpop.f32.mrf.mxu0
        %v2444 = vadd.f32 %v348, %v2443
        %2445 = vmatmul.f32.gmra.mxu0 %v2046
        %v2446 = vpop.f32.mrf.mxu0
        %v2447 = vadd.f32 %v348, %v2446
        %2448 = vmatmul.f32.gmra.mxu0 %v2049
        %v2449 = vpop.f32.mrf.mxu0
        %v2450 = vadd.f32 %v348, %v2449
        %2451 = vmatmul.f32.gmra.mxu0 %v2052
        %v2452 = vpop.f32.mrf.mxu0
        %v2453 = vadd.f32 %v348, %v2452
        %2454 = vmatmul.f32.gmra.mxu0 %v2055
        %v2455 = vpop.f32.mrf.mxu0
        %v2456 = vadd.f32 %v348, %v2455
        %2457 = vmatmul.f32.gmra.mxu0 %v2058
        %v2458 = vpop.f32.mrf.mxu0
        %v2459 = vadd.f32 %v348, %v2458
        %2460 = vmatmul.f32.gmra.mxu0 %v2061
        %v2461 = vpop.f32.mrf.mxu0
        %v2462 = vadd.f32 %v348, %v2461
        %2463 = vmatmul.f32.gmra.mxu0 %v2064
        %v2464 = vpop.f32.mrf.mxu0
        %v2465 = vadd.f32 %v348, %v2464
        %2466 = vmatmul.f32.gmra.mxu0 %v2067
        %v2467 = vpop.f32.mrf.mxu0
        %v2468 = vadd.f32 %v348, %v2467
        %2469 = vmatmul.f32.gmra.mxu0 %v2070
        %v2470 = vpop.f32.mrf.mxu0
        %v2471 = vadd.f32 %v348, %v2470
        %2472 = vmatmul.f32.gmra.mxu0 %v2073
        %v2473 = vpop.f32.mrf.mxu0
        %v2474 = vadd.f32 %v348, %v2473
        %2475 = vmatmul.f32.gmra.mxu0 %v2076
        %v2476 = vpop.f32.mrf.mxu0
        %v2477 = vadd.f32 %v348, %v2476
        %2478 = vmatmul.f32.gmra.mxu0 %v2079
        %v2479 = vpop.f32.mrf.mxu0
        %v2480 = vadd.f32 %v348, %v2479
        %2481 = vmatmul.f32.gmra.mxu0 %v2082
        %v2482 = vpop.f32.mrf.mxu0
        %v2483 = vadd.f32 %v348, %v2482
        %2484 = vmatmul.f32.gmra.mxu0 %v2085
        %v2485 = vpop.f32.mrf.mxu0
        %v2486 = vadd.f32 %v348, %v2485
        %2487 = vmatmul.f32.gmra.mxu0 %v2088
        %v2488 = vpop.f32.mrf.mxu0
        %v2489 = vadd.f32 %v348, %v2488
        %2490 = vmatmul.f32.gmra.mxu0 %v2091
        %v2491 = vpop.f32.mrf.mxu0
        %v2492 = vadd.f32 %v348, %v2491
        %2493 = vmatmul.f32.gmra.mxu0 %v2094
        %v2494 = vpop.f32.mrf.mxu0
        %v2495 = vadd.f32 %v348, %v2494
        %2496 = vmatmul.f32.gmra.mxu0 %v2097
        %v2497 = vpop.f32.mrf.mxu0
        %v2498 = vadd.f32 %v348, %v2497
        %2499 = vmatmul.f32.gmra.mxu0 %v2100
        %v2500 = vpop.f32.mrf.mxu0
        %v2501 = vadd.f32 %v348, %v2500
        %2502 = vmatmul.f32.gmra.mxu0 %v2103
        %v2503 = vpop.f32.mrf.mxu0
        %v2504 = vadd.f32 %v348, %v2503
        %2505 = vmatmul.f32.gmra.mxu0 %v2106
        %v2506 = vpop.f32.mrf.mxu0
        %v2507 = vadd.f32 %v348, %v2506
        %2508 = vmatmul.f32.gmra.mxu0 %v2109
        %v2509 = vpop.f32.mrf.mxu0
        %v2510 = vadd.f32 %v348, %v2509
        %2511 = vmatmul.f32.gmra.mxu0 %v2112
        %v2512 = vpop.f32.mrf.mxu0
        %v2513 = vadd.f32 %v348, %v2512
        %2514 = vmatmul.f32.gmra.mxu0 %v2115
        %v2515 = vpop.f32.mrf.mxu0
        %v2516 = vadd.f32 %v348, %v2515
        %2517 = vmatmul.f32.gmra.mxu0 %v2118
        %v2518 = vpop.f32.mrf.mxu0
        %v2519 = vadd.f32 %v348, %v2518
        %2520 = vmatmul.f32.gmra.mxu0 %v2121
        %v2521 = vpop.f32.mrf.mxu0
        %v2522 = vadd.f32 %v348, %v2521
        %2523 = vmatmul.f32.gmra.mxu0 %v2124
        %v2524 = vpop.f32.mrf.mxu0
        %v2525 = vadd.f32 %v348, %v2524
        %2526 = vmatmul.f32.gmra.mxu0 %v2127
        %v2527 = vpop.f32.mrf.mxu0
        %v2528 = vadd.f32 %v348, %v2527
        %2529 = vmatmul.f32.gmra.mxu0 %v2130
        %v2530 = vpop.f32.mrf.mxu0
        %v2531 = vadd.f32 %v348, %v2530
        %2532 = vmatmul.f32.gmra.mxu0 %v2133
        %v2533 = vpop.f32.mrf.mxu0
        %v2534 = vadd.f32 %v348, %v2533
        %2535 = vmatmul.f32.gmra.mxu0 %v2136
        %v2536 = vpop.f32.mrf.mxu0
        %v2537 = vadd.f32 %v348, %v2536
        %2538 = vmatmul.f32.gmra.mxu0 %v2139
        %v2539 = vpop.f32.mrf.mxu0
        %v2540 = vadd.f32 %v348, %v2539
        %2541 = vmatmul.f32.gmra.mxu0 %v2142
        %v2542 = vpop.f32.mrf.mxu0
        %v2543 = vadd.f32 %v348, %v2542
        %2544 = vmatmul.f32.gmra.mxu0 %v2145
        %v2545 = vpop.f32.mrf.mxu0
        %v2546 = vadd.f32 %v348, %v2545
        %2547 = vmatmul.f32.gmra.mxu0 %v2148
        %v2548 = vpop.f32.mrf.mxu0
        %v2549 = vadd.f32 %v348, %v2548
        %2550 = vmatmul.f32.gmra.mxu0 %v2151
        %v2551 = vpop.f32.mrf.mxu0
        %v2552 = vadd.f32 %v348, %v2551
        %2553 = vmatmul.f32.gmra.mxu0 %v2154
        %v2554 = vpop.f32.mrf.mxu0
        %v2555 = vadd.f32 %v348, %v2554
        %2556 = vmatmul.f32.gmra.mxu0 %v2157
        %v2557 = vpop.f32.mrf.mxu0
        %v2558 = vadd.f32 %v348, %v2557
        %2559 = vmatmul.f32.gmra.mxu0 %v2160
        %v2560 = vpop.f32.mrf.mxu0
        %v2561 = vadd.f32 %v348, %v2560
        %2562 = vmatmul.f32.gmra.mxu0 %v2163
        %v2563 = vpop.f32.mrf.mxu0
        %v2564 = vadd.f32 %v348, %v2563
        %2565 = vmatmul.f32.gmra.mxu0 %v2166
        %v2566 = vpop.f32.mrf.mxu0
        %v2567 = vadd.f32 %v348, %v2566
        %2568 = vmatmul.f32.gmra.mxu0 %v2169
        %v2569 = vpop.f32.mrf.mxu0
        %v2570 = vadd.f32 %v348, %v2569
        %2571 = vmatmul.f32.gmra.mxu0 %v2172
        %v2572 = vpop.f32.mrf.mxu0
        %v2573 = vadd.f32 %v348, %v2572
        %2574 = vmatmul.f32.gmra.mxu0 %v2175
        %v2575 = vpop.f32.mrf.mxu0
        %v2576 = vadd.f32 %v348, %v2575
        %2577 = vmatmul.f32.gmra.mxu0 %v2178
        %v2578 = vpop.f32.mrf.mxu0
        %v2579 = vadd.f32 %v348, %v2578
        %2580 = vmatmul.f32.gmra.mxu0 %v2181
        %v2581 = vpop.f32.mrf.mxu0
        %v2582 = vadd.f32 %v348, %v2581
        %2583 = vmatmul.f32.gmra.mxu0 %v2184
        %v2584 = vpop.f32.mrf.mxu0
        %v2585 = vadd.f32 %v348, %v2584
        %2586 = vmatmul.f32.gmra.mxu0 %v2187
        %v2587 = vpop.f32.mrf.mxu0
        %v2588 = vadd.f32 %v348, %v2587
        %2589 = vmatmul.f32.gmra.mxu0 %v2190
        %v2590 = vpop.f32.mrf.mxu0
        %v2591 = vadd.f32 %v348, %v2590
        %2592 = vmatmul.f32.gmra.mxu0 %v2193
        %v2593 = vpop.f32.mrf.mxu0
        %v2594 = vadd.f32 %v348, %v2593
        %2595 = vmatmul.f32.gmra.mxu0 %v2196
        %v2596 = vpop.f32.mrf.mxu0
        %v2597 = vadd.f32 %v348, %v2596
        %2598 = vdwg.mxu0
        %v2599 = vmax.f32 %v2216, 0.0
        %v2600 = vmax.f32 %v2219, 0.0
        %v2601 = vmax.f32 %v2222, 0.0
        %v2602 = vmax.f32 %v2225, 0.0
        %v2603 = vmax.f32 %v2228, 0.0
        %v2604 = vmax.f32 %v2231, 0.0
        %v2605 = vmax.f32 %v2234, 0.0
        %v2606 = vmax.f32 %v2237, 0.0
        %v2607 = vmax.f32 %v2240, 0.0
        %v2608 = vmax.f32 %v2243, 0.0
        %v2609 = vmax.f32 %v2246, 0.0
        %v2610 = vmax.f32 %v2249, 0.0
        %v2611 = vmax.f32 %v2252, 0.0
        %v2612 = vmax.f32 %v2255, 0.0
        %v2613 = vmax.f32 %v2258, 0.0
        %v2614 = vmax.f32 %v2261, 0.0
        %v2615 = vmax.f32 %v2264, 0.0
        %v2616 = vmax.f32 %v2267, 0.0
        %v2617 = vmax.f32 %v2270, 0.0
        %v2618 = vmax.f32 %v2273, 0.0
        %v2619 = vmax.f32 %v2276, 0.0
        %v2620 = vmax.f32 %v2279, 0.0
        %v2621 = vmax.f32 %v2282, 0.0
        %v2622 = vmax.f32 %v2285, 0.0
        %v2623 = vmax.f32 %v2288, 0.0
        %v2624 = vmax.f32 %v2291, 0.0
        %v2625 = vmax.f32 %v2294, 0.0
        %v2626 = vmax.f32 %v2297, 0.0
        %v2627 = vmax.f32 %v2300, 0.0
        %v2628 = vmax.f32 %v2303, 0.0
        %v2629 = vmax.f32 %v2306, 0.0
        %v2630 = vmax.f32 %v2309, 0.0
        %v2631 = vmax.f32 %v2312, 0.0
        %v2632 = vmax.f32 %v2315, 0.0
        %v2633 = vmax.f32 %v2318, 0.0
        %v2634 = vmax.f32 %v2321, 0.0
        %v2635 = vmax.f32 %v2324, 0.0
        %v2636 = vmax.f32 %v2327, 0.0
        %v2637 = vmax.f32 %v2330, 0.0
        %v2638 = vmax.f32 %v2333, 0.0
        %v2639 = vmax.f32 %v2336, 0.0
        %v2640 = vmax.f32 %v2339, 0.0
        %v2641 = vmax.f32 %v2342, 0.0
        %v2642 = vmax.f32 %v2345, 0.0
        %v2643 = vmax.f32 %v2348, 0.0
        %v2644 = vmax.f32 %v2351, 0.0
        %v2645 = vmax.f32 %v2354, 0.0
        %v2646 = vmax.f32 %v2357, 0.0
        %v2647 = vmax.f32 %v2360, 0.0
        %v2648 = vmax.f32 %v2363, 0.0
        %v2649 = vmax.f32 %v2366, 0.0
        %v2650 = vmax.f32 %v2369, 0.0
        %v2651 = vmax.f32 %v2372, 0.0
        %v2652 = vmax.f32 %v2375, 0.0
        %v2653 = vmax.f32 %v2378, 0.0
        %v2654 = vmax.f32 %v2381, 0.0
        %v2655 = vmax.f32 %v2384, 0.0
        %v2656 = vmax.f32 %v2387, 0.0
        %v2657 = vmax.f32 %v2390, 0.0
        %v2658 = vmax.f32 %v2393, 0.0
        %v2659 = vmax.f32 %v2396, 0.0
        %v2660 = vmax.f32 %v2399, 0.0
        %v2661 = vmax.f32 %v2402, 0.0
        %v2662 = vmax.f32 %v2405, 0.0
        %v2663 = vmax.f32 %v2408, 0.0
        %v2664 = vmax.f32 %v2411, 0.0
        %v2665 = vmax.f32 %v2414, 0.0
        %v2666 = vmax.f32 %v2417, 0.0
        %v2667 = vmax.f32 %v2420, 0.0
        %v2668 = vmax.f32 %v2423, 0.0
        %v2669 = vmax.f32 %v2426, 0.0
        %v2670 = vmax.f32 %v2429, 0.0
        %v2671 = vmax.f32 %v2432, 0.0
        %v2672 = vmax.f32 %v2435, 0.0
        %v2673 = vmax.f32 %v2438, 0.0
        %v2674 = vmax.f32 %v2441, 0.0
        %v2675 = vmax.f32 %v2444, 0.0
        %v2676 = vmax.f32 %v2447, 0.0
        %v2677 = vmax.f32 %v2450, 0.0
        %v2678 = vmax.f32 %v2453, 0.0
        %v2679 = vmax.f32 %v2456, 0.0
        %v2680 = vmax.f32 %v2459, 0.0
        %v2681 = vmax.f32 %v2462, 0.0
        %v2682 = vmax.f32 %v2465, 0.0
        %v2683 = vmax.f32 %v2468, 0.0
        %v2684 = vmax.f32 %v2471, 0.0
        %v2685 = vmax.f32 %v2474, 0.0
        %v2686 = vmax.f32 %v2477, 0.0
        %v2687 = vmax.f32 %v2480, 0.0
        %v2688 = vmax.f32 %v2483, 0.0
        %v2689 = vmax.f32 %v2486, 0.0
        %v2690 = vmax.f32 %v2489, 0.0
        %v2691 = vmax.f32 %v2492, 0.0
        %v2692 = vmax.f32 %v2495, 0.0
        %v2693 = vmax.f32 %v2498, 0.0
        %v2694 = vmax.f32 %v2501, 0.0
        %v2695 = vmax.f32 %v2504, 0.0
        %v2696 = vmax.f32 %v2507, 0.0
        %v2697 = vmax.f32 %v2510, 0.0
        %v2698 = vmax.f32 %v2513, 0.0
        %v2699 = vmax.f32 %v2516, 0.0
        %v2700 = vmax.f32 %v2519, 0.0
        %v2701 = vmax.f32 %v2522, 0.0
        %v2702 = vmax.f32 %v2525, 0.0
        %v2703 = vmax.f32 %v2528, 0.0
        %v2704 = vmax.f32 %v2531, 0.0
        %v2705 = vmax.f32 %v2534, 0.0
        %v2706 = vmax.f32 %v2537, 0.0
        %v2707 = vmax.f32 %v2540, 0.0
        %v2708 = vmax.f32 %v2543, 0.0
        %v2709 = vmax.f32 %v2546, 0.0
        %v2710 = vmax.f32 %v2549, 0.0
        %v2711 = vmax.f32 %v2552, 0.0
        %v2712 = vmax.f32 %v2555, 0.0
        %v2713 = vmax.f32 %v2558, 0.0
        %v2714 = vmax.f32 %v2561, 0.0
        %v2715 = vmax.f32 %v2564, 0.0
        %v2716 = vmax.f32 %v2567, 0.0
        %v2717 = vmax.f32 %v2570, 0.0
        %v2718 = vmax.f32 %v2573, 0.0
        %v2719 = vmax.f32 %v2576, 0.0
        %v2720 = vmax.f32 %v2579, 0.0
        %v2721 = vmax.f32 %v2582, 0.0
        %v2722 = vmax.f32 %v2585, 0.0
        %v2723 = vmax.f32 %v2588, 0.0
        %v2724 = vmax.f32 %v2591, 0.0
        %v2725 = vmax.f32 %v2594, 0.0
        %v2726 = vmax.f32 %v2597, 0.0
        %2727 = vmatpush.msra.mxu0 %v328
        %2728 = vmatpush.msra.mxu0 %v327
        %2729 = vmatpush.msra.mxu0 %v326
        %2730 = vmatpush.msra.mxu0 %v325
        %2731 = vmatpush.msra.mxu0 %v324
        %2732 = vmatpush.msra.mxu0 %v323
        %2733 = vmatpush.msra.mxu0 %v322
        %2734 = vmatpush.msra.mxu0 %v321
        %2735 = vmatpush.msra.mxu0 %v320
        %2736 = vmatpush.msra.mxu0 %v319
        %2737 = vmatpush.msra.mxu0 %v318
        %2738 = vmatpush.msra.mxu0 %v317
        %2739 = vmatpush.msra.mxu0 %v316
        %2740 = vmatpush.msra.mxu0 %v315
        %2741 = vmatpush.msra.mxu0 %v314
        %2742 = vmatpush.msra.mxu0 %v313
        %2743 = vmatmul.f32.gmra.mxu0 %v2599
        %v2744 = vpop.f32.mrf.mxu0
        %v2745 = vadd.f32 %v425, %v2744
        %2746 = vmatmul.f32.gmra.mxu0 %v2600
        %v2747 = vpop.f32.mrf.mxu0
        %v2748 = vadd.f32 %v425, %v2747
        %2749 = vmatmul.f32.gmra.mxu0 %v2601
        %v2750 = vpop.f32.mrf.mxu0
        %v2751 = vadd.f32 %v425, %v2750
        %2752 = vmatmul.f32.gmra.mxu0 %v2602
        %v2753 = vpop.f32.mrf.mxu0
        %v2754 = vadd.f32 %v425, %v2753
        %2755 = vmatmul.f32.gmra.mxu0 %v2603
        %v2756 = vpop.f32.mrf.mxu0
        %v2757 = vadd.f32 %v425, %v2756
        %2758 = vmatmul.f32.gmra.mxu0 %v2604
        %v2759 = vpop.f32.mrf.mxu0
        %v2760 = vadd.f32 %v425, %v2759
        %2761 = vmatmul.f32.gmra.mxu0 %v2605
        %v2762 = vpop.f32.mrf.mxu0
        %v2763 = vadd.f32 %v425, %v2762
        %2764 = vmatmul.f32.gmra.mxu0 %v2606
        %v2765 = vpop.f32.mrf.mxu0
        %v2766 = vadd.f32 %v425, %v2765
        %2767 = vmatmul.f32.gmra.mxu0 %v2607
        %v2768 = vpop.f32.mrf.mxu0
        %v2769 = vadd.f32 %v425, %v2768
        %2770 = vmatmul.f32.gmra.mxu0 %v2608
        %v2771 = vpop.f32.mrf.mxu0
        %v2772 = vadd.f32 %v425, %v2771
        %2773 = vmatmul.f32.gmra.mxu0 %v2609
        %v2774 = vpop.f32.mrf.mxu0
        %v2775 = vadd.f32 %v425, %v2774
        %2776 = vmatmul.f32.gmra.mxu0 %v2610
        %v2777 = vpop.f32.mrf.mxu0
        %v2778 = vadd.f32 %v425, %v2777
        %2779 = vmatmul.f32.gmra.mxu0 %v2611
        %v2780 = vpop.f32.mrf.mxu0
        %v2781 = vadd.f32 %v425, %v2780
        %2782 = vmatmul.f32.gmra.mxu0 %v2612
        %v2783 = vpop.f32.mrf.mxu0
        %v2784 = vadd.f32 %v425, %v2783
        %2785 = vmatmul.f32.gmra.mxu0 %v2613
        %v2786 = vpop.f32.mrf.mxu0
        %v2787 = vadd.f32 %v425, %v2786
        %2788 = vmatmul.f32.gmra.mxu0 %v2614
        %v2789 = vpop.f32.mrf.mxu0
        %v2790 = vadd.f32 %v425, %v2789
        %2791 = vmatmul.f32.gmra.mxu0 %v2615
        %v2792 = vpop.f32.mrf.mxu0
        %v2793 = vadd.f32 %v425, %v2792
        %2794 = vmatmul.f32.gmra.mxu0 %v2616
        %v2795 = vpop.f32.mrf.mxu0
        %v2796 = vadd.f32 %v425, %v2795
        %2797 = vmatmul.f32.gmra.mxu0 %v2617
        %v2798 = vpop.f32.mrf.mxu0
        %v2799 = vadd.f32 %v425, %v2798
        %2800 = vmatmul.f32.gmra.mxu0 %v2618
        %v2801 = vpop.f32.mrf.mxu0
        %v2802 = vadd.f32 %v425, %v2801
        %2803 = vmatmul.f32.gmra.mxu0 %v2619
        %v2804 = vpop.f32.mrf.mxu0
        %v2805 = vadd.f32 %v425, %v2804
        %2806 = vmatmul.f32.gmra.mxu0 %v2620
        %v2807 = vpop.f32.mrf.mxu0
        %v2808 = vadd.f32 %v425, %v2807
        %2809 = vmatmul.f32.gmra.mxu0 %v2621
        %v2810 = vpop.f32.mrf.mxu0
        %v2811 = vadd.f32 %v425, %v2810
        %2812 = vmatmul.f32.gmra.mxu0 %v2622
        %v2813 = vpop.f32.mrf.mxu0
        %v2814 = vadd.f32 %v425, %v2813
        %2815 = vmatmul.f32.gmra.mxu0 %v2623
        %v2816 = vpop.f32.mrf.mxu0
        %v2817 = vadd.f32 %v425, %v2816
        %2818 = vmatmul.f32.gmra.mxu0 %v2624
        %v2819 = vpop.f32.mrf.mxu0
        %v2820 = vadd.f32 %v425, %v2819
        %2821 = vmatmul.f32.gmra.mxu0 %v2625
        %v2822 = vpop.f32.mrf.mxu0
        %v2823 = vadd.f32 %v425, %v2822
        %2824 = vmatmul.f32.gmra.mxu0 %v2626
        %v2825 = vpop.f32.mrf.mxu0
        %v2826 = vadd.f32 %v425, %v2825
        %2827 = vmatmul.f32.gmra.mxu0 %v2627
        %v2828 = vpop.f32.mrf.mxu0
        %v2829 = vadd.f32 %v425, %v2828
        %2830 = vmatmul.f32.gmra.mxu0 %v2628
        %v2831 = vpop.f32.mrf.mxu0
        %v2832 = vadd.f32 %v425, %v2831
        %2833 = vmatmul.f32.gmra.mxu0 %v2629
        %v2834 = vpop.f32.mrf.mxu0
        %v2835 = vadd.f32 %v425, %v2834
        %2836 = vmatmul.f32.gmra.mxu0 %v2630
        %v2837 = vpop.f32.mrf.mxu0
        %v2838 = vadd.f32 %v425, %v2837
        %2839 = vmatmul.f32.gmra.mxu0 %v2631
        %v2840 = vpop.f32.mrf.mxu0
        %v2841 = vadd.f32 %v425, %v2840
        %2842 = vmatmul.f32.gmra.mxu0 %v2632
        %v2843 = vpop.f32.mrf.mxu0
        %v2844 = vadd.f32 %v425, %v2843
        %2845 = vmatmul.f32.gmra.mxu0 %v2633
        %v2846 = vpop.f32.mrf.mxu0
        %v2847 = vadd.f32 %v425, %v2846
        %2848 = vmatmul.f32.gmra.mxu0 %v2634
        %v2849 = vpop.f32.mrf.mxu0
        %v2850 = vadd.f32 %v425, %v2849
        %2851 = vmatmul.f32.gmra.mxu0 %v2635
        %v2852 = vpop.f32.mrf.mxu0
        %v2853 = vadd.f32 %v425, %v2852
        %2854 = vmatmul.f32.gmra.mxu0 %v2636
        %v2855 = vpop.f32.mrf.mxu0
        %v2856 = vadd.f32 %v425, %v2855
        %2857 = vmatmul.f32.gmra.mxu0 %v2637
        %v2858 = vpop.f32.mrf.mxu0
        %v2859 = vadd.f32 %v425, %v2858
        %2860 = vmatmul.f32.gmra.mxu0 %v2638
        %v2861 = vpop.f32.mrf.mxu0
        %v2862 = vadd.f32 %v425, %v2861
        %2863 = vmatmul.f32.gmra.mxu0 %v2639
        %v2864 = vpop.f32.mrf.mxu0
        %v2865 = vadd.f32 %v425, %v2864
        %2866 = vmatmul.f32.gmra.mxu0 %v2640
        %v2867 = vpop.f32.mrf.mxu0
        %v2868 = vadd.f32 %v425, %v2867
        %2869 = vmatmul.f32.gmra.mxu0 %v2641
        %v2870 = vpop.f32.mrf.mxu0
        %v2871 = vadd.f32 %v425, %v2870
        %2872 = vmatmul.f32.gmra.mxu0 %v2642
        %v2873 = vpop.f32.mrf.mxu0
        %v2874 = vadd.f32 %v425, %v2873
        %2875 = vmatmul.f32.gmra.mxu0 %v2643
        %v2876 = vpop.f32.mrf.mxu0
        %v2877 = vadd.f32 %v425, %v2876
        %2878 = vmatmul.f32.gmra.mxu0 %v2644
        %v2879 = vpop.f32.mrf.mxu0
        %v2880 = vadd.f32 %v425, %v2879
        %2881 = vmatmul.f32.gmra.mxu0 %v2645
        %v2882 = vpop.f32.mrf.mxu0
        %v2883 = vadd.f32 %v425, %v2882
        %2884 = vmatmul.f32.gmra.mxu0 %v2646
        %v2885 = vpop.f32.mrf.mxu0
        %v2886 = vadd.f32 %v425, %v2885
        %2887 = vmatmul.f32.gmra.mxu0 %v2647
        %v2888 = vpop.f32.mrf.mxu0
        %v2889 = vadd.f32 %v425, %v2888
        %2890 = vmatmul.f32.gmra.mxu0 %v2648
        %v2891 = vpop.f32.mrf.mxu0
        %v2892 = vadd.f32 %v425, %v2891
        %2893 = vmatmul.f32.gmra.mxu0 %v2649
        %v2894 = vpop.f32.mrf.mxu0
        %v2895 = vadd.f32 %v425, %v2894
        %2896 = vmatmul.f32.gmra.mxu0 %v2650
        %v2897 = vpop.f32.mrf.mxu0
        %v2898 = vadd.f32 %v425, %v2897
        %2899 = vmatmul.f32.gmra.mxu0 %v2651
        %v2900 = vpop.f32.mrf.mxu0
        %v2901 = vadd.f32 %v425, %v2900
        %2902 = vmatmul.f32.gmra.mxu0 %v2652
        %v2903 = vpop.f32.mrf.mxu0
        %v2904 = vadd.f32 %v425, %v2903
        %2905 = vmatmul.f32.gmra.mxu0 %v2653
        %v2906 = vpop.f32.mrf.mxu0
        %v2907 = vadd.f32 %v425, %v2906
        %2908 = vmatmul.f32.gmra.mxu0 %v2654
        %v2909 = vpop.f32.mrf.mxu0
        %v2910 = vadd.f32 %v425, %v2909
        %2911 = vmatmul.f32.gmra.mxu0 %v2655
        %v2912 = vpop.f32.mrf.mxu0
        %v2913 = vadd.f32 %v425, %v2912
        %2914 = vmatmul.f32.gmra.mxu0 %v2656
        %v2915 = vpop.f32.mrf.mxu0
        %v2916 = vadd.f32 %v425, %v2915
        %2917 = vmatmul.f32.gmra.mxu0 %v2657
        %v2918 = vpop.f32.mrf.mxu0
        %v2919 = vadd.f32 %v425, %v2918
        %2920 = vmatmul.f32.gmra.mxu0 %v2658
        %v2921 = vpop.f32.mrf.mxu0
        %v2922 = vadd.f32 %v425, %v2921
        %2923 = vmatmul.f32.gmra.mxu0 %v2659
        %v2924 = vpop.f32.mrf.mxu0
        %v2925 = vadd.f32 %v425, %v2924
        %2926 = vmatmul.f32.gmra.mxu0 %v2660
        %v2927 = vpop.f32.mrf.mxu0
        %v2928 = vadd.f32 %v425, %v2927
        %2929 = vmatmul.f32.gmra.mxu0 %v2661
        %v2930 = vpop.f32.mrf.mxu0
        %v2931 = vadd.f32 %v425, %v2930
        %2932 = vmatmul.f32.gmra.mxu0 %v2662
        %v2933 = vpop.f32.mrf.mxu0
        %v2934 = vadd.f32 %v425, %v2933
        %2935 = vmatmul.f32.gmra.mxu0 %v2663
        %v2936 = vpop.f32.mrf.mxu0
        %v2937 = vadd.f32 %v425, %v2936
        %2938 = vmatmul.f32.gmra.mxu0 %v2664
        %v2939 = vpop.f32.mrf.mxu0
        %v2940 = vadd.f32 %v425, %v2939
        %2941 = vmatmul.f32.gmra.mxu0 %v2665
        %v2942 = vpop.f32.mrf.mxu0
        %v2943 = vadd.f32 %v425, %v2942
        %2944 = vmatmul.f32.gmra.mxu0 %v2666
        %v2945 = vpop.f32.mrf.mxu0
        %v2946 = vadd.f32 %v425, %v2945
        %2947 = vmatmul.f32.gmra.mxu0 %v2667
        %v2948 = vpop.f32.mrf.mxu0
        %v2949 = vadd.f32 %v425, %v2948
        %2950 = vmatmul.f32.gmra.mxu0 %v2668
        %v2951 = vpop.f32.mrf.mxu0
        %v2952 = vadd.f32 %v425, %v2951
        %2953 = vmatmul.f32.gmra.mxu0 %v2669
        %v2954 = vpop.f32.mrf.mxu0
        %v2955 = vadd.f32 %v425, %v2954
        %2956 = vmatmul.f32.gmra.mxu0 %v2670
        %v2957 = vpop.f32.mrf.mxu0
        %v2958 = vadd.f32 %v425, %v2957
        %2959 = vmatmul.f32.gmra.mxu0 %v2671
        %v2960 = vpop.f32.mrf.mxu0
        %v2961 = vadd.f32 %v425, %v2960
        %2962 = vmatmul.f32.gmra.mxu0 %v2672
        %v2963 = vpop.f32.mrf.mxu0
        %v2964 = vadd.f32 %v425, %v2963
        %2965 = vmatmul.f32.gmra.mxu0 %v2673
        %v2966 = vpop.f32.mrf.mxu0
        %v2967 = vadd.f32 %v425, %v2966
        %2968 = vmatmul.f32.gmra.mxu0 %v2674
        %v2969 = vpop.f32.mrf.mxu0
        %v2970 = vadd.f32 %v425, %v2969
        %2971 = vmatmul.f32.gmra.mxu0 %v2675
        %v2972 = vpop.f32.mrf.mxu0
        %v2973 = vadd.f32 %v425, %v2972
        %2974 = vmatmul.f32.gmra.mxu0 %v2676
        %v2975 = vpop.f32.mrf.mxu0
        %v2976 = vadd.f32 %v425, %v2975
        %2977 = vmatmul.f32.gmra.mxu0 %v2677
        %v2978 = vpop.f32.mrf.mxu0
        %v2979 = vadd.f32 %v425, %v2978
        %2980 = vmatmul.f32.gmra.mxu0 %v2678
        %v2981 = vpop.f32.mrf.mxu0
        %v2982 = vadd.f32 %v425, %v2981
        %2983 = vmatmul.f32.gmra.mxu0 %v2679
        %v2984 = vpop.f32.mrf.mxu0
        %v2985 = vadd.f32 %v425, %v2984
        %2986 = vmatmul.f32.gmra.mxu0 %v2680
        %v2987 = vpop.f32.mrf.mxu0
        %v2988 = vadd.f32 %v425, %v2987
        %2989 = vmatmul.f32.gmra.mxu0 %v2681
        %v2990 = vpop.f32.mrf.mxu0
        %v2991 = vadd.f32 %v425, %v2990
        %2992 = vmatmul.f32.gmra.mxu0 %v2682
        %v2993 = vpop.f32.mrf.mxu0
        %v2994 = vadd.f32 %v425, %v2993
        %2995 = vmatmul.f32.gmra.mxu0 %v2683
        %v2996 = vpop.f32.mrf.mxu0
        %v2997 = vadd.f32 %v425, %v2996
        %2998 = vmatmul.f32.gmra.mxu0 %v2684
        %v2999 = vpop.f32.mrf.mxu0
        %v3000 = vadd.f32 %v425, %v2999
        %3001 = vmatmul.f32.gmra.mxu0 %v2685
        %v3002 = vpop.f32.mrf.mxu0
        %v3003 = vadd.f32 %v425, %v3002
        %3004 = vmatmul.f32.gmra.mxu0 %v2686
        %v3005 = vpop.f32.mrf.mxu0
        %v3006 = vadd.f32 %v425, %v3005
        %3007 = vmatmul.f32.gmra.mxu0 %v2687
        %v3008 = vpop.f32.mrf.mxu0
        %v3009 = vadd.f32 %v425, %v3008
        %3010 = vmatmul.f32.gmra.mxu0 %v2688
        %v3011 = vpop.f32.mrf.mxu0
        %v3012 = vadd.f32 %v425, %v3011
        %3013 = vmatmul.f32.gmra.mxu0 %v2689
        %v3014 = vpop.f32.mrf.mxu0
        %v3015 = vadd.f32 %v425, %v3014
        %3016 = vmatmul.f32.gmra.mxu0 %v2690
        %v3017 = vpop.f32.mrf.mxu0
        %v3018 = vadd.f32 %v425, %v3017
        %3019 = vmatmul.f32.gmra.mxu0 %v2691
        %v3020 = vpop.f32.mrf.mxu0
        %v3021 = vadd.f32 %v425, %v3020
        %3022 = vmatmul.f32.gmra.mxu0 %v2692
        %v3023 = vpop.f32.mrf.mxu0
        %v3024 = vadd.f32 %v425, %v3023
        %3025 = vmatmul.f32.gmra.mxu0 %v2693
        %v3026 = vpop.f32.mrf.mxu0
        %v3027 = vadd.f32 %v425, %v3026
        %3028 = vmatmul.f32.gmra.mxu0 %v2694
        %v3029 = vpop.f32.mrf.mxu0
        %v3030 = vadd.f32 %v425, %v3029
        %3031 = vmatmul.f32.gmra.mxu0 %v2695
        %v3032 = vpop.f32.mrf.mxu0
        %v3033 = vadd.f32 %v425, %v3032
        %3034 = vmatmul.f32.gmra.mxu0 %v2696
        %v3035 = vpop.f32.mrf.mxu0
        %v3036 = vadd.f32 %v425, %v3035
        %3037 = vmatmul.f32.gmra.mxu0 %v2697
        %v3038 = vpop.f32.mrf.mxu0
        %v3039 = vadd.f32 %v425, %v3038
        %3040 = vmatmul.f32.gmra.mxu0 %v2698
        %v3041 = vpop.f32.mrf.mxu0
        %v3042 = vadd.f32 %v425, %v3041
        %3043 = vmatmul.f32.gmra.mxu0 %v2699
        %v3044 = vpop.f32.mrf.mxu0
        %v3045 = vadd.f32 %v425, %v3044
        %3046 = vmatmul.f32.gmra.mxu0 %v2700
        %v3047 = vpop.f32.mrf.mxu0
        %v3048 = vadd.f32 %v425, %v3047
        %3049 = vmatmul.f32.gmra.mxu0 %v2701
        %v3050 = vpop.f32.mrf.mxu0
        %v3051 = vadd.f32 %v425, %v3050
        %3052 = vmatmul.f32.gmra.mxu0 %v2702
        %v3053 = vpop.f32.mrf.mxu0
        %v3054 = vadd.f32 %v425, %v3053
        %3055 = vmatmul.f32.gmra.mxu0 %v2703
        %v3056 = vpop.f32.mrf.mxu0
        %v3057 = vadd.f32 %v425, %v3056
        %3058 = vmatmul.f32.gmra.mxu0 %v2704
        %v3059 = vpop.f32.mrf.mxu0
        %v3060 = vadd.f32 %v425, %v3059
        %3061 = vmatmul.f32.gmra.mxu0 %v2705
        %v3062 = vpop.f32.mrf.mxu0
        %v3063 = vadd.f32 %v425, %v3062
        %3064 = vmatmul.f32.gmra.mxu0 %v2706
        %v3065 = vpop.f32.mrf.mxu0
        %v3066 = vadd.f32 %v425, %v3065
        %3067 = vmatmul.f32.gmra.mxu0 %v2707
        %v3068 = vpop.f32.mrf.mxu0
        %v3069 = vadd.f32 %v425, %v3068
        %3070 = vmatmul.f32.gmra.mxu0 %v2708
        %v3071 = vpop.f32.mrf.mxu0
        %v3072 = vadd.f32 %v425, %v3071
        %3073 = vmatmul.f32.gmra.mxu0 %v2709
        %v3074 = vpop.f32.mrf.mxu0
        %v3075 = vadd.f32 %v425, %v3074
        %3076 = vmatmul.f32.gmra.mxu0 %v2710
        %v3077 = vpop.f32.mrf.mxu0
        %v3078 = vadd.f32 %v425, %v3077
        %3079 = vmatmul.f32.gmra.mxu0 %v2711
        %v3080 = vpop.f32.mrf.mxu0
        %v3081 = vadd.f32 %v425, %v3080
        %3082 = vmatmul.f32.gmra.mxu0 %v2712
        %v3083 = vpop.f32.mrf.mxu0
        %v3084 = vadd.f32 %v425, %v3083
        %3085 = vmatmul.f32.gmra.mxu0 %v2713
        %v3086 = vpop.f32.mrf.mxu0
        %v3087 = vadd.f32 %v425, %v3086
        %3088 = vmatmul.f32.gmra.mxu0 %v2714
        %v3089 = vpop.f32.mrf.mxu0
        %v3090 = vadd.f32 %v425, %v3089
        %3091 = vmatmul.f32.gmra.mxu0 %v2715
        %v3092 = vpop.f32.mrf.mxu0
        %v3093 = vadd.f32 %v425, %v3092
        %3094 = vmatmul.f32.gmra.mxu0 %v2716
        %v3095 = vpop.f32.mrf.mxu0
        %v3096 = vadd.f32 %v425, %v3095
        %3097 = vmatmul.f32.gmra.mxu0 %v2717
        %v3098 = vpop.f32.mrf.mxu0
        %v3099 = vadd.f32 %v425, %v3098
        %3100 = vmatmul.f32.gmra.mxu0 %v2718
        %v3101 = vpop.f32.mrf.mxu0
        %v3102 = vadd.f32 %v425, %v3101
        %3103 = vmatmul.f32.gmra.mxu0 %v2719
        %v3104 = vpop.f32.mrf.mxu0
        %v3105 = vadd.f32 %v425, %v3104
        %3106 = vmatmul.f32.gmra.mxu0 %v2720
        %v3107 = vpop.f32.mrf.mxu0
        %v3108 = vadd.f32 %v425, %v3107
        %3109 = vmatmul.f32.gmra.mxu0 %v2721
        %v3110 = vpop.f32.mrf.mxu0
        %v3111 = vadd.f32 %v425, %v3110
        %3112 = vmatmul.f32.gmra.mxu0 %v2722
        %v3113 = vpop.f32.mrf.mxu0
        %v3114 = vadd.f32 %v425, %v3113
        %3115 = vmatmul.f32.gmra.mxu0 %v2723
        %v3116 = vpop.f32.mrf.mxu0
        %v3117 = vadd.f32 %v425, %v3116
        %3118 = vmatmul.f32.gmra.mxu0 %v2724
        %v3119 = vpop.f32.mrf.mxu0
        %v3120 = vadd.f32 %v425, %v3119
        %3121 = vmatmul.f32.gmra.mxu0 %v2725
        %v3122 = vpop.f32.mrf.mxu0
        %v3123 = vadd.f32 %v425, %v3122
        %3124 = vmatmul.f32.gmra.mxu0 %v2726
        %v3125 = vpop.f32.mrf.mxu0
        %v3126 = vadd.f32 %v425, %v3125
        %3127 = vdwg.mxu0
        %v3128 = vmax.f32 %v2745, 0.0
        %v3129 = vmax.f32 %v2748, 0.0
        %v3130 = vmax.f32 %v2751, 0.0
        %v3131 = vmax.f32 %v2754, 0.0
        %v3132 = vmax.f32 %v2757, 0.0
        %v3133 = vmax.f32 %v2760, 0.0
        %v3134 = vmax.f32 %v2763, 0.0
        %v3135 = vmax.f32 %v2766, 0.0
        %v3136 = vmax.f32 %v2769, 0.0
        %v3137 = vmax.f32 %v2772, 0.0
        %v3138 = vmax.f32 %v2775, 0.0
        %v3139 = vmax.f32 %v2778, 0.0
        %v3140 = vmax.f32 %v2781, 0.0
        %v3141 = vmax.f32 %v2784, 0.0
        %v3142 = vmax.f32 %v2787, 0.0
        %v3143 = vmax.f32 %v2790, 0.0
        %v3144 = vmax.f32 %v2793, 0.0
        %v3145 = vmax.f32 %v2796, 0.0
        %v3146 = vmax.f32 %v2799, 0.0
        %v3147 = vmax.f32 %v2802, 0.0
        %v3148 = vmax.f32 %v2805, 0.0
        %v3149 = vmax.f32 %v2808, 0.0
        %v3150 = vmax.f32 %v2811, 0.0
        %v3151 = vmax.f32 %v2814, 0.0
        %v3152 = vmax.f32 %v2817, 0.0
        %v3153 = vmax.f32 %v2820, 0.0
        %v3154 = vmax.f32 %v2823, 0.0
        %v3155 = vmax.f32 %v2826, 0.0
        %v3156 = vmax.f32 %v2829, 0.0
        %v3157 = vmax.f32 %v2832, 0.0
        %v3158 = vmax.f32 %v2835, 0.0
        %v3159 = vmax.f32 %v2838, 0.0
        %v3160 = vmax.f32 %v2841, 0.0
        %v3161 = vmax.f32 %v2844, 0.0
        %v3162 = vmax.f32 %v2847, 0.0
        %v3163 = vmax.f32 %v2850, 0.0
        %v3164 = vmax.f32 %v2853, 0.0
        %v3165 = vmax.f32 %v2856, 0.0
        %v3166 = vmax.f32 %v2859, 0.0
        %v3167 = vmax.f32 %v2862, 0.0
        %v3168 = vmax.f32 %v2865, 0.0
        %v3169 = vmax.f32 %v2868, 0.0
        %v3170 = vmax.f32 %v2871, 0.0
        %v3171 = vmax.f32 %v2874, 0.0
        %v3172 = vmax.f32 %v2877, 0.0
        %v3173 = vmax.f32 %v2880, 0.0
        %v3174 = vmax.f32 %v2883, 0.0
        %v3175 = vmax.f32 %v2886, 0.0
        %v3176 = vmax.f32 %v2889, 0.0
        %v3177 = vmax.f32 %v2892, 0.0
        %v3178 = vmax.f32 %v2895, 0.0
        %v3179 = vmax.f32 %v2898, 0.0
        %v3180 = vmax.f32 %v2901, 0.0
        %v3181 = vmax.f32 %v2904, 0.0
        %v3182 = vmax.f32 %v2907, 0.0
        %v3183 = vmax.f32 %v2910, 0.0
        %v3184 = vmax.f32 %v2913, 0.0
        %v3185 = vmax.f32 %v2916, 0.0
        %v3186 = vmax.f32 %v2919, 0.0
        %v3187 = vmax.f32 %v2922, 0.0
        %v3188 = vmax.f32 %v2925, 0.0
        %v3189 = vmax.f32 %v2928, 0.0
        %v3190 = vmax.f32 %v2931, 0.0
        %v3191 = vmax.f32 %v2934, 0.0
        %v3192 = vmax.f32 %v2937, 0.0
        %v3193 = vmax.f32 %v2940, 0.0
        %v3194 = vmax.f32 %v2943, 0.0
        %v3195 = vmax.f32 %v2946, 0.0
        %v3196 = vmax.f32 %v2949, 0.0
        %v3197 = vmax.f32 %v2952, 0.0
        %v3198 = vmax.f32 %v2955, 0.0
        %v3199 = vmax.f32 %v2958, 0.0
        %v3200 = vmax.f32 %v2961, 0.0
        %v3201 = vmax.f32 %v2964, 0.0
        %v3202 = vmax.f32 %v2967, 0.0
        %v3203 = vmax.f32 %v2970, 0.0
        %v3204 = vmax.f32 %v2973, 0.0
        %v3205 = vmax.f32 %v2976, 0.0
        %v3206 = vmax.f32 %v2979, 0.0
        %v3207 = vmax.f32 %v2982, 0.0
        %v3208 = vmax.f32 %v2985, 0.0
        %v3209 = vmax.f32 %v2988, 0.0
        %v3210 = vmax.f32 %v2991, 0.0
        %v3211 = vmax.f32 %v2994, 0.0
        %v3212 = vmax.f32 %v2997, 0.0
        %v3213 = vmax.f32 %v3000, 0.0
        %v3214 = vmax.f32 %v3003, 0.0
        %v3215 = vmax.f32 %v3006, 0.0
        %v3216 = vmax.f32 %v3009, 0.0
        %v3217 = vmax.f32 %v3012, 0.0
        %v3218 = vmax.f32 %v3015, 0.0
        %v3219 = vmax.f32 %v3018, 0.0
        %v3220 = vmax.f32 %v3021, 0.0
        %v3221 = vmax.f32 %v3024, 0.0
        %v3222 = vmax.f32 %v3027, 0.0
        %v3223 = vmax.f32 %v3030, 0.0
        %v3224 = vmax.f32 %v3033, 0.0
        %v3225 = vmax.f32 %v3036, 0.0
        %v3226 = vmax.f32 %v3039, 0.0
        %v3227 = vmax.f32 %v3042, 0.0
        %v3228 = vmax.f32 %v3045, 0.0
        %v3229 = vmax.f32 %v3048, 0.0
        %v3230 = vmax.f32 %v3051, 0.0
        %v3231 = vmax.f32 %v3054, 0.0
        %v3232 = vmax.f32 %v3057, 0.0
        %v3233 = vmax.f32 %v3060, 0.0
        %v3234 = vmax.f32 %v3063, 0.0
        %v3235 = vmax.f32 %v3066, 0.0
        %v3236 = vmax.f32 %v3069, 0.0
        %v3237 = vmax.f32 %v3072, 0.0
        %v3238 = vmax.f32 %v3075, 0.0
        %v3239 = vmax.f32 %v3078, 0.0
        %v3240 = vmax.f32 %v3081, 0.0
        %v3241 = vmax.f32 %v3084, 0.0
        %v3242 = vmax.f32 %v3087, 0.0
        %v3243 = vmax.f32 %v3090, 0.0
        %v3244 = vmax.f32 %v3093, 0.0
        %v3245 = vmax.f32 %v3096, 0.0
        %v3246 = vmax.f32 %v3099, 0.0
        %v3247 = vmax.f32 %v3102, 0.0
        %v3248 = vmax.f32 %v3105, 0.0
        %v3249 = vmax.f32 %v3108, 0.0
        %v3250 = vmax.f32 %v3111, 0.0
        %v3251 = vmax.f32 %v3114, 0.0
        %v3252 = vmax.f32 %v3117, 0.0
        %v3253 = vmax.f32 %v3120, 0.0
        %v3254 = vmax.f32 %v3123, 0.0
        %v3255 = vmax.f32 %v3126, 0.0
        %v3257 = vperm.slane %v346, 0
        %3259 = vmatpush.msra.mxu0 %v345
        %3260 = vmatpush.msra.mxu0 %v344
        %3261 = vmatpush.msra.mxu0 %v343
        %3262 = vmatpush.msra.mxu0 %v342
        %3263 = vmatpush.msra.mxu0 %v341
        %3264 = vmatpush.msra.mxu0 %v340
        %3265 = vmatpush.msra.mxu0 %v339
        %3266 = vmatpush.msra.mxu0 %v338
        %3267 = vmatpush.msra.mxu0 %v337
        %3268 = vmatpush.msra.mxu0 %v336
        %3269 = vmatpush.msra.mxu0 %v335
        %3270 = vmatpush.msra.mxu0 %v334
        %3271 = vmatpush.msra.mxu0 %v333
        %3272 = vmatpush.msra.mxu0 %v332
        %3273 = vmatpush.msra.mxu0 %v331
        %3274 = vmatpush.msra.mxu0 %v330
        %3275 = vmatmul.f32.gmra.mxu0 %v3128
        %v3276 = vpop.f32.mrf.mxu0
        %v3277 = vadd.f32 %v3257, %v3276
        %3278 = vmatmul.f32.gmra.mxu0 %v3129
        %v3279 = vpop.f32.mrf.mxu0
        %v3280 = vadd.f32 %v3257, %v3279
        %3281 = vmatmul.f32.gmra.mxu0 %v3130
        %v3282 = vpop.f32.mrf.mxu0
        %v3283 = vadd.f32 %v3257, %v3282
        %3284 = vmatmul.f32.gmra.mxu0 %v3131
        %v3285 = vpop.f32.mrf.mxu0
        %v3286 = vadd.f32 %v3257, %v3285
        %3287 = vmatmul.f32.gmra.mxu0 %v3132
        %v3288 = vpop.f32.mrf.mxu0
        %v3289 = vadd.f32 %v3257, %v3288
        %3290 = vmatmul.f32.gmra.mxu0 %v3133
        %v3291 = vpop.f32.mrf.mxu0
        %v3292 = vadd.f32 %v3257, %v3291
        %3293 = vmatmul.f32.gmra.mxu0 %v3134
        %v3294 = vpop.f32.mrf.mxu0
        %v3295 = vadd.f32 %v3257, %v3294
        %3296 = vmatmul.f32.gmra.mxu0 %v3135
        %v3297 = vpop.f32.mrf.mxu0
        %v3298 = vadd.f32 %v3257, %v3297
        %3299 = vmatmul.f32.gmra.mxu0 %v3136
        %v3300 = vpop.f32.mrf.mxu0
        %v3301 = vadd.f32 %v3257, %v3300
        %3302 = vmatmul.f32.gmra.mxu0 %v3137
        %v3303 = vpop.f32.mrf.mxu0
        %v3304 = vadd.f32 %v3257, %v3303
        %3305 = vmatmul.f32.gmra.mxu0 %v3138
        %v3306 = vpop.f32.mrf.mxu0
        %v3307 = vadd.f32 %v3257, %v3306
        %3308 = vmatmul.f32.gmra.mxu0 %v3139
        %v3309 = vpop.f32.mrf.mxu0
        %v3310 = vadd.f32 %v3257, %v3309
        %3311 = vmatmul.f32.gmra.mxu0 %v3140
        %v3312 = vpop.f32.mrf.mxu0
        %v3313 = vadd.f32 %v3257, %v3312
        %3314 = vmatmul.f32.gmra.mxu0 %v3141
        %v3315 = vpop.f32.mrf.mxu0
        %v3316 = vadd.f32 %v3257, %v3315
        %3317 = vmatmul.f32.gmra.mxu0 %v3142
        %v3318 = vpop.f32.mrf.mxu0
        %v3319 = vadd.f32 %v3257, %v3318
        %3320 = vmatmul.f32.gmra.mxu0 %v3143
        %v3321 = vpop.f32.mrf.mxu0
        %v3322 = vadd.f32 %v3257, %v3321
        %3323 = vmatmul.f32.gmra.mxu0 %v3144
        %v3324 = vpop.f32.mrf.mxu0
        %v3325 = vadd.f32 %v3257, %v3324
        %3326 = vmatmul.f32.gmra.mxu0 %v3145
        %v3327 = vpop.f32.mrf.mxu0
        %v3328 = vadd.f32 %v3257, %v3327
        %3329 = vmatmul.f32.gmra.mxu0 %v3146
        %v3330 = vpop.f32.mrf.mxu0
        %v3331 = vadd.f32 %v3257, %v3330
        %3332 = vmatmul.f32.gmra.mxu0 %v3147
        %v3333 = vpop.f32.mrf.mxu0
        %v3334 = vadd.f32 %v3257, %v3333
        %3335 = vmatmul.f32.gmra.mxu0 %v3148
        %v3336 = vpop.f32.mrf.mxu0
        %v3337 = vadd.f32 %v3257, %v3336
        %3338 = vmatmul.f32.gmra.mxu0 %v3149
        %v3339 = vpop.f32.mrf.mxu0
        %v3340 = vadd.f32 %v3257, %v3339
        %3341 = vmatmul.f32.gmra.mxu0 %v3150
        %v3342 = vpop.f32.mrf.mxu0
        %v3343 = vadd.f32 %v3257, %v3342
        %3344 = vmatmul.f32.gmra.mxu0 %v3151
        %v3345 = vpop.f32.mrf.mxu0
        %v3346 = vadd.f32 %v3257, %v3345
        %3347 = vmatmul.f32.gmra.mxu0 %v3152
        %v3348 = vpop.f32.mrf.mxu0
        %v3349 = vadd.f32 %v3257, %v3348
        %3350 = vmatmul.f32.gmra.mxu0 %v3153
        %v3351 = vpop.f32.mrf.mxu0
        %v3352 = vadd.f32 %v3257, %v3351
        %3353 = vmatmul.f32.gmra.mxu0 %v3154
        %v3354 = vpop.f32.mrf.mxu0
        %v3355 = vadd.f32 %v3257, %v3354
        %3356 = vmatmul.f32.gmra.mxu0 %v3155
        %v3357 = vpop.f32.mrf.mxu0
        %v3358 = vadd.f32 %v3257, %v3357
        %3359 = vmatmul.f32.gmra.mxu0 %v3156
        %v3360 = vpop.f32.mrf.mxu0
        %v3361 = vadd.f32 %v3257, %v3360
        %3362 = vmatmul.f32.gmra.mxu0 %v3157
        %v3363 = vpop.f32.mrf.mxu0
        %v3364 = vadd.f32 %v3257, %v3363
        %3365 = vmatmul.f32.gmra.mxu0 %v3158
        %v3366 = vpop.f32.mrf.mxu0
        %v3367 = vadd.f32 %v3257, %v3366
        %3368 = vmatmul.f32.gmra.mxu0 %v3159
        %v3369 = vpop.f32.mrf.mxu0
        %v3370 = vadd.f32 %v3257, %v3369
        %3371 = vmatmul.f32.gmra.mxu0 %v3160
        %v3372 = vpop.f32.mrf.mxu0
        %v3373 = vadd.f32 %v3257, %v3372
        %3374 = vmatmul.f32.gmra.mxu0 %v3161
        %v3375 = vpop.f32.mrf.mxu0
        %v3376 = vadd.f32 %v3257, %v3375
        %3377 = vmatmul.f32.gmra.mxu0 %v3162
        %v3378 = vpop.f32.mrf.mxu0
        %v3379 = vadd.f32 %v3257, %v3378
        %3380 = vmatmul.f32.gmra.mxu0 %v3163
        %v3381 = vpop.f32.mrf.mxu0
        %v3382 = vadd.f32 %v3257, %v3381
        %3383 = vmatmul.f32.gmra.mxu0 %v3164
        %v3384 = vpop.f32.mrf.mxu0
        %v3385 = vadd.f32 %v3257, %v3384
        %3386 = vmatmul.f32.gmra.mxu0 %v3165
        %v3387 = vpop.f32.mrf.mxu0
        %v3388 = vadd.f32 %v3257, %v3387
        %3389 = vmatmul.f32.gmra.mxu0 %v3166
        %v3390 = vpop.f32.mrf.mxu0
        %v3391 = vadd.f32 %v3257, %v3390
        %3392 = vmatmul.f32.gmra.mxu0 %v3167
        %v3393 = vpop.f32.mrf.mxu0
        %v3394 = vadd.f32 %v3257, %v3393
        %3395 = vmatmul.f32.gmra.mxu0 %v3168
        %v3396 = vpop.f32.mrf.mxu0
        %v3397 = vadd.f32 %v3257, %v3396
        %3398 = vmatmul.f32.gmra.mxu0 %v3169
        %v3399 = vpop.f32.mrf.mxu0
        %v3400 = vadd.f32 %v3257, %v3399
        %3401 = vmatmul.f32.gmra.mxu0 %v3170
        %v3402 = vpop.f32.mrf.mxu0
        %v3403 = vadd.f32 %v3257, %v3402
        %3404 = vmatmul.f32.gmra.mxu0 %v3171
        %v3405 = vpop.f32.mrf.mxu0
        %v3406 = vadd.f32 %v3257, %v3405
        %3407 = vmatmul.f32.gmra.mxu0 %v3172
        %v3408 = vpop.f32.mrf.mxu0
        %v3409 = vadd.f32 %v3257, %v3408
        %3410 = vmatmul.f32.gmra.mxu0 %v3173
        %v3411 = vpop.f32.mrf.mxu0
        %v3412 = vadd.f32 %v3257, %v3411
        %3413 = vmatmul.f32.gmra.mxu0 %v3174
        %v3414 = vpop.f32.mrf.mxu0
        %v3415 = vadd.f32 %v3257, %v3414
        %3416 = vmatmul.f32.gmra.mxu0 %v3175
        %v3417 = vpop.f32.mrf.mxu0
        %v3418 = vadd.f32 %v3257, %v3417
        %3419 = vmatmul.f32.gmra.mxu0 %v3176
        %v3420 = vpop.f32.mrf.mxu0
        %v3421 = vadd.f32 %v3257, %v3420
        %3422 = vmatmul.f32.gmra.mxu0 %v3177
        %v3423 = vpop.f32.mrf.mxu0
        %v3424 = vadd.f32 %v3257, %v3423
        %3425 = vmatmul.f32.gmra.mxu0 %v3178
        %v3426 = vpop.f32.mrf.mxu0
        %v3427 = vadd.f32 %v3257, %v3426
        %3428 = vmatmul.f32.gmra.mxu0 %v3179
        %v3429 = vpop.f32.mrf.mxu0
        %v3430 = vadd.f32 %v3257, %v3429
        %3431 = vmatmul.f32.gmra.mxu0 %v3180
        %v3432 = vpop.f32.mrf.mxu0
        %v3433 = vadd.f32 %v3257, %v3432
        %3434 = vmatmul.f32.gmra.mxu0 %v3181
        %v3435 = vpop.f32.mrf.mxu0
        %v3436 = vadd.f32 %v3257, %v3435
        %3437 = vmatmul.f32.gmra.mxu0 %v3182
        %v3438 = vpop.f32.mrf.mxu0
        %v3439 = vadd.f32 %v3257, %v3438
        %3440 = vmatmul.f32.gmra.mxu0 %v3183
        %v3441 = vpop.f32.mrf.mxu0
        %v3442 = vadd.f32 %v3257, %v3441
        %3443 = vmatmul.f32.gmra.mxu0 %v3184
        %v3444 = vpop.f32.mrf.mxu0
        %v3445 = vadd.f32 %v3257, %v3444
        %3446 = vmatmul.f32.gmra.mxu0 %v3185
        %v3447 = vpop.f32.mrf.mxu0
        %v3448 = vadd.f32 %v3257, %v3447
        %3449 = vmatmul.f32.gmra.mxu0 %v3186
        %v3450 = vpop.f32.mrf.mxu0
        %v3451 = vadd.f32 %v3257, %v3450
        %3452 = vmatmul.f32.gmra.mxu0 %v3187
        %v3453 = vpop.f32.mrf.mxu0
        %v3454 = vadd.f32 %v3257, %v3453
        %3455 = vmatmul.f32.gmra.mxu0 %v3188
        %v3456 = vpop.f32.mrf.mxu0
        %v3457 = vadd.f32 %v3257, %v3456
        %3458 = vmatmul.f32.gmra.mxu0 %v3189
        %v3459 = vpop.f32.mrf.mxu0
        %v3460 = vadd.f32 %v3257, %v3459
        %3461 = vmatmul.f32.gmra.mxu0 %v3190
        %v3462 = vpop.f32.mrf.mxu0
        %v3463 = vadd.f32 %v3257, %v3462
        %3464 = vmatmul.f32.gmra.mxu0 %v3191
        %v3465 = vpop.f32.mrf.mxu0
        %v3466 = vadd.f32 %v3257, %v3465
        %3467 = vmatmul.f32.gmra.mxu0 %v3192
        %v3468 = vpop.f32.mrf.mxu0
        %v3469 = vadd.f32 %v3257, %v3468
        %3470 = vmatmul.f32.gmra.mxu0 %v3193
        %v3471 = vpop.f32.mrf.mxu0
        %v3472 = vadd.f32 %v3257, %v3471
        %3473 = vmatmul.f32.gmra.mxu0 %v3194
        %v3474 = vpop.f32.mrf.mxu0
        %v3475 = vadd.f32 %v3257, %v3474
        %3476 = vmatmul.f32.gmra.mxu0 %v3195
        %v3477 = vpop.f32.mrf.mxu0
        %v3478 = vadd.f32 %v3257, %v3477
        %3479 = vmatmul.f32.gmra.mxu0 %v3196
        %v3480 = vpop.f32.mrf.mxu0
        %v3481 = vadd.f32 %v3257, %v3480
        %3482 = vmatmul.f32.gmra.mxu0 %v3197
        %v3483 = vpop.f32.mrf.mxu0
        %v3484 = vadd.f32 %v3257, %v3483
        %3485 = vmatmul.f32.gmra.mxu0 %v3198
        %v3486 = vpop.f32.mrf.mxu0
        %v3487 = vadd.f32 %v3257, %v3486
        %3488 = vmatmul.f32.gmra.mxu0 %v3199
        %v3489 = vpop.f32.mrf.mxu0
        %v3490 = vadd.f32 %v3257, %v3489
        %3491 = vmatmul.f32.gmra.mxu0 %v3200
        %v3492 = vpop.f32.mrf.mxu0
        %v3493 = vadd.f32 %v3257, %v3492
        %3494 = vmatmul.f32.gmra.mxu0 %v3201
        %v3495 = vpop.f32.mrf.mxu0
        %v3496 = vadd.f32 %v3257, %v3495
        %3497 = vmatmul.f32.gmra.mxu0 %v3202
        %v3498 = vpop.f32.mrf.mxu0
        %v3499 = vadd.f32 %v3257, %v3498
        %3500 = vmatmul.f32.gmra.mxu0 %v3203
        %v3501 = vpop.f32.mrf.mxu0
        %v3502 = vadd.f32 %v3257, %v3501
        %3503 = vmatmul.f32.gmra.mxu0 %v3204
        %v3504 = vpop.f32.mrf.mxu0
        %v3505 = vadd.f32 %v3257, %v3504
        %3506 = vmatmul.f32.gmra.mxu0 %v3205
        %v3507 = vpop.f32.mrf.mxu0
        %v3508 = vadd.f32 %v3257, %v3507
        %3509 = vmatmul.f32.gmra.mxu0 %v3206
        %v3510 = vpop.f32.mrf.mxu0
        %v3511 = vadd.f32 %v3257, %v3510
        %3512 = vmatmul.f32.gmra.mxu0 %v3207
        %v3513 = vpop.f32.mrf.mxu0
        %v3514 = vadd.f32 %v3257, %v3513
        %3515 = vmatmul.f32.gmra.mxu0 %v3208
        %v3516 = vpop.f32.mrf.mxu0
        %v3517 = vadd.f32 %v3257, %v3516
        %3518 = vmatmul.f32.gmra.mxu0 %v3209
        %v3519 = vpop.f32.mrf.mxu0
        %v3520 = vadd.f32 %v3257, %v3519
        %3521 = vmatmul.f32.gmra.mxu0 %v3210
        %v3522 = vpop.f32.mrf.mxu0
        %v3523 = vadd.f32 %v3257, %v3522
        %3524 = vmatmul.f32.gmra.mxu0 %v3211
        %v3525 = vpop.f32.mrf.mxu0
        %v3526 = vadd.f32 %v3257, %v3525
        %3527 = vmatmul.f32.gmra.mxu0 %v3212
        %v3528 = vpop.f32.mrf.mxu0
        %v3529 = vadd.f32 %v3257, %v3528
        %3530 = vmatmul.f32.gmra.mxu0 %v3213
        %v3531 = vpop.f32.mrf.mxu0
        %v3532 = vadd.f32 %v3257, %v3531
        %3533 = vmatmul.f32.gmra.mxu0 %v3214
        %v3534 = vpop.f32.mrf.mxu0
        %v3535 = vadd.f32 %v3257, %v3534
        %3536 = vmatmul.f32.gmra.mxu0 %v3215
        %v3537 = vpop.f32.mrf.mxu0
        %v3538 = vadd.f32 %v3257, %v3537
        %3539 = vmatmul.f32.gmra.mxu0 %v3216
        %v3540 = vpop.f32.mrf.mxu0
        %v3541 = vadd.f32 %v3257, %v3540
        %3542 = vmatmul.f32.gmra.mxu0 %v3217
        %v3543 = vpop.f32.mrf.mxu0
        %v3544 = vadd.f32 %v3257, %v3543
        %3545 = vmatmul.f32.gmra.mxu0 %v3218
        %v3546 = vpop.f32.mrf.mxu0
        %v3547 = vadd.f32 %v3257, %v3546
        %3548 = vmatmul.f32.gmra.mxu0 %v3219
        %v3549 = vpop.f32.mrf.mxu0
        %v3550 = vadd.f32 %v3257, %v3549
        %3551 = vmatmul.f32.gmra.mxu0 %v3220
        %v3552 = vpop.f32.mrf.mxu0
        %v3553 = vadd.f32 %v3257, %v3552
        %3554 = vmatmul.f32.gmra.mxu0 %v3221
        %v3555 = vpop.f32.mrf.mxu0
        %v3556 = vadd.f32 %v3257, %v3555
        %3557 = vmatmul.f32.gmra.mxu0 %v3222
        %v3558 = vpop.f32.mrf.mxu0
        %v3559 = vadd.f32 %v3257, %v3558
        %3560 = vmatmul.f32.gmra.mxu0 %v3223
        %v3561 = vpop.f32.mrf.mxu0
        %v3562 = vadd.f32 %v3257, %v3561
        %3563 = vmatmul.f32.gmra.mxu0 %v3224
        %v3564 = vpop.f32.mrf.mxu0
        %v3565 = vadd.f32 %v3257, %v3564
        %3566 = vmatmul.f32.gmra.mxu0 %v3225
        %v3567 = vpop.f32.mrf.mxu0
        %v3568 = vadd.f32 %v3257, %v3567
        %3569 = vmatmul.f32.gmra.mxu0 %v3226
        %v3570 = vpop.f32.mrf.mxu0
        %v3571 = vadd.f32 %v3257, %v3570
        %3572 = vmatmul.f32.gmra.mxu0 %v3227
        %v3573 = vpop.f32.mrf.mxu0
        %v3574 = vadd.f32 %v3257, %v3573
        %3575 = vmatmul.f32.gmra.mxu0 %v3228
        %v3576 = vpop.f32.mrf.mxu0
        %v3577 = vadd.f32 %v3257, %v3576
        %3578 = vmatmul.f32.gmra.mxu0 %v3229
        %v3579 = vpop.f32.mrf.mxu0
        %v3580 = vadd.f32 %v3257, %v3579
        %3581 = vmatmul.f32.gmra.mxu0 %v3230
        %v3582 = vpop.f32.mrf.mxu0
        %v3583 = vadd.f32 %v3257, %v3582
        %3584 = vmatmul.f32.gmra.mxu0 %v3231
        %v3585 = vpop.f32.mrf.mxu0
        %v3586 = vadd.f32 %v3257, %v3585
        %3587 = vmatmul.f32.gmra.mxu0 %v3232
        %v3588 = vpop.f32.mrf.mxu0
        %v3589 = vadd.f32 %v3257, %v3588
        %3590 = vmatmul.f32.gmra.mxu0 %v3233
        %v3591 = vpop.f32.mrf.mxu0
        %v3592 = vadd.f32 %v3257, %v3591
        %3593 = vmatmul.f32.gmra.mxu0 %v3234
        %v3594 = vpop.f32.mrf.mxu0
        %v3595 = vadd.f32 %v3257, %v3594
        %3596 = vmatmul.f32.gmra.mxu0 %v3235
        %v3597 = vpop.f32.mrf.mxu0
        %v3598 = vadd.f32 %v3257, %v3597
        %3599 = vmatmul.f32.gmra.mxu0 %v3236
        %v3600 = vpop.f32.mrf.mxu0
        %v3601 = vadd.f32 %v3257, %v3600
        %3602 = vmatmul.f32.gmra.mxu0 %v3237
        %v3603 = vpop.f32.mrf.mxu0
        %v3604 = vadd.f32 %v3257, %v3603
        %3605 = vmatmul.f32.gmra.mxu0 %v3238
        %v3606 = vpop.f32.mrf.mxu0
        %v3607 = vadd.f32 %v3257, %v3606
        %3608 = vmatmul.f32.gmra.mxu0 %v3239
        %v3609 = vpop.f32.mrf.mxu0
        %v3610 = vadd.f32 %v3257, %v3609
        %3611 = vmatmul.f32.gmra.mxu0 %v3240
        %v3612 = vpop.f32.mrf.mxu0
        %v3613 = vadd.f32 %v3257, %v3612
        %3614 = vmatmul.f32.gmra.mxu0 %v3241
        %v3615 = vpop.f32.mrf.mxu0
        %v3616 = vadd.f32 %v3257, %v3615
        %3617 = vmatmul.f32.gmra.mxu0 %v3242
        %v3618 = vpop.f32.mrf.mxu0
        %v3619 = vadd.f32 %v3257, %v3618
        %3620 = vmatmul.f32.gmra.mxu0 %v3243
        %v3621 = vpop.f32.mrf.mxu0
        %v3622 = vadd.f32 %v3257, %v3621
        %3623 = vmatmul.f32.gmra.mxu0 %v3244
        %v3624 = vpop.f32.mrf.mxu0
        %v3625 = vadd.f32 %v3257, %v3624
        %3626 = vmatmul.f32.gmra.mxu0 %v3245
        %v3627 = vpop.f32.mrf.mxu0
        %v3628 = vadd.f32 %v3257, %v3627
        %3629 = vmatmul.f32.gmra.mxu0 %v3246
        %v3630 = vpop.f32.mrf.mxu0
        %v3631 = vadd.f32 %v3257, %v3630
        %3632 = vmatmul.f32.gmra.mxu0 %v3247
        %v3633 = vpop.f32.mrf.mxu0
        %v3634 = vadd.f32 %v3257, %v3633
        %3635 = vmatmul.f32.gmra.mxu0 %v3248
        %v3636 = vpop.f32.mrf.mxu0
        %v3637 = vadd.f32 %v3257, %v3636
        %3638 = vmatmul.f32.gmra.mxu0 %v3249
        %v3639 = vpop.f32.mrf.mxu0
        %v3640 = vadd.f32 %v3257, %v3639
        %3641 = vmatmul.f32.gmra.mxu0 %v3250
        %v3642 = vpop.f32.mrf.mxu0
        %v3643 = vadd.f32 %v3257, %v3642
        %3644 = vmatmul.f32.gmra.mxu0 %v3251
        %v3645 = vpop.f32.mrf.mxu0
        %v3646 = vadd.f32 %v3257, %v3645
        %3647 = vmatmul.f32.gmra.mxu0 %v3252
        %v3648 = vpop.f32.mrf.mxu0
        %v3649 = vadd.f32 %v3257, %v3648
        %3650 = vmatmul.f32.gmra.mxu0 %v3253
        %v3651 = vpop.f32.mrf.mxu0
        %v3652 = vadd.f32 %v3257, %v3651
        %3653 = vmatmul.f32.gmra.mxu0 %v3254
        %v3654 = vpop.f32.mrf.mxu0
        %v3655 = vadd.f32 %v3257, %v3654
        %3656 = vmatmul.f32.gmra.mxu0 %v3255
        %v3657 = vpop.f32.mrf.mxu0
        %v3658 = vadd.f32 %v3257, %v3657
        %3659 = vdwg.mxu0
        %v3660 = vlaneseq
        %v3661 = vshrl.u32 %v3660, 7
        %v3662 = vadd.s32 %v3661, 8
        %v3663 = vadd.s32 %v3661, 16
        %v3664 = vadd.s32 %v3661, 24
        %v3665 = vadd.s32 %v3661, 32
        %v3666 = vadd.s32 %v3661, 40
        %v3667 = vadd.s32 %v3661, 48
        %v3668 = vadd.s32 %v3661, 56
        %v3669 = vadd.s32 %v3661, 64
        %v3670 = vadd.s32 %v3661, 72
        %v3671 = vadd.s32 %v3661, 80
        %v3672 = vadd.s32 %v3661, 88
        %v3673 = vadd.s32 %v3661, 96
        %v3674 = vadd.s32 %v3661, 104
        %v3675 = vadd.s32 %v3661, 112
        %v3676 = vadd.s32 %v3661, 120
        %v3677 = vlaneseq
        %v3678 = vand.u32 %v3677, 127
        %vm3679 = vcmp.eq.s32.totalorder %v3661, %v3678
        %vm3680 = vcmp.eq.s32.totalorder %v3662, %v3678
        %vm3681 = vcmp.eq.s32.totalorder %v3663, %v3678
        %vm3682 = vcmp.eq.s32.totalorder %v3664, %v3678
        %vm3683 = vcmp.eq.s32.totalorder %v3665, %v3678
        %vm3684 = vcmp.eq.s32.totalorder %v3666, %v3678
        %vm3685 = vcmp.eq.s32.totalorder %v3667, %v3678
        %vm3686 = vcmp.eq.s32.totalorder %v3668, %v3678
        %vm3687 = vcmp.eq.s32.totalorder %v3669, %v3678
        %vm3688 = vcmp.eq.s32.totalorder %v3670, %v3678
        %vm3689 = vcmp.eq.s32.totalorder %v3671, %v3678
        %vm3690 = vcmp.eq.s32.totalorder %v3672, %v3678
        %vm3691 = vcmp.eq.s32.totalorder %v3673, %v3678
        %vm3692 = vcmp.eq.s32.totalorder %v3674, %v3678
        %vm3693 = vcmp.eq.s32.totalorder %v3675, %v3678
        %vm3694 = vcmp.eq.s32.totalorder %v3676, %v3678
        %v3695 = vsel %vm3679, %v3277, 0.0
        %v3696 = vsel %vm3680, %v3280, 0.0
        %v3697 = vsel %vm3681, %v3283, 0.0
        %v3698 = vsel %vm3682, %v3286, 0.0
        %v3699 = vsel %vm3683, %v3289, 0.0
        %v3700 = vsel %vm3684, %v3292, 0.0
        %v3701 = vsel %vm3685, %v3295, 0.0
        %v3702 = vsel %vm3686, %v3298, 0.0
        %v3703 = vsel %vm3687, %v3301, 0.0
        %v3704 = vsel %vm3688, %v3304, 0.0
        %v3705 = vsel %vm3689, %v3307, 0.0
        %v3706 = vsel %vm3690, %v3310, 0.0
        %v3707 = vsel %vm3691, %v3313, 0.0
        %v3708 = vsel %vm3692, %v3316, 0.0
        %v3709 = vsel %vm3693, %v3319, 0.0
        %v3710 = vsel %vm3694, %v3322, 0.0
        %v3711 = vsel %vm3679, %v3325, 0.0
        %v3712 = vsel %vm3680, %v3328, 0.0
        %v3713 = vsel %vm3681, %v3331, 0.0
        %v3714 = vsel %vm3682, %v3334, 0.0
        %v3715 = vsel %vm3683, %v3337, 0.0
        %v3716 = vsel %vm3684, %v3340, 0.0
        %v3717 = vsel %vm3685, %v3343, 0.0
        %v3718 = vsel %vm3686, %v3346, 0.0
        %v3719 = vsel %vm3687, %v3349, 0.0
        %v3720 = vsel %vm3688, %v3352, 0.0
        %v3721 = vsel %vm3689, %v3355, 0.0
        %v3722 = vsel %vm3690, %v3358, 0.0
        %v3723 = vsel %vm3691, %v3361, 0.0
        %v3724 = vsel %vm3692, %v3364, 0.0
        %v3725 = vsel %vm3693, %v3367, 0.0
        %v3726 = vsel %vm3694, %v3370, 0.0
        %v3727 = vsel %vm3679, %v3373, 0.0
        %v3728 = vsel %vm3680, %v3376, 0.0
        %v3729 = vsel %vm3681, %v3379, 0.0
        %v3730 = vsel %vm3682, %v3382, 0.0
        %v3731 = vsel %vm3683, %v3385, 0.0
        %v3732 = vsel %vm3684, %v3388, 0.0
        %v3733 = vsel %vm3685, %v3391, 0.0
        %v3734 = vsel %vm3686, %v3394, 0.0
        %v3735 = vsel %vm3687, %v3397, 0.0
        %v3736 = vsel %vm3688, %v3400, 0.0
        %v3737 = vsel %vm3689, %v3403, 0.0
        %v3738 = vsel %vm3690, %v3406, 0.0
        %v3739 = vsel %vm3691, %v3409, 0.0
        %v3740 = vsel %vm3692, %v3412, 0.0
        %v3741 = vsel %vm3693, %v3415, 0.0
        %v3742 = vsel %vm3694, %v3418, 0.0
        %v3743 = vsel %vm3679, %v3421, 0.0
        %v3744 = vsel %vm3680, %v3424, 0.0
        %v3745 = vsel %vm3681, %v3427, 0.0
        %v3746 = vsel %vm3682, %v3430, 0.0
        %v3747 = vsel %vm3683, %v3433, 0.0
        %v3748 = vsel %vm3684, %v3436, 0.0
        %v3749 = vsel %vm3685, %v3439, 0.0
        %v3750 = vsel %vm3686, %v3442, 0.0
        %v3751 = vsel %vm3687, %v3445, 0.0
        %v3752 = vsel %vm3688, %v3448, 0.0
        %v3753 = vsel %vm3689, %v3451, 0.0
        %v3754 = vsel %vm3690, %v3454, 0.0
        %v3755 = vsel %vm3691, %v3457, 0.0
        %v3756 = vsel %vm3692, %v3460, 0.0
        %v3757 = vsel %vm3693, %v3463, 0.0
        %v3758 = vsel %vm3694, %v3466, 0.0
        %v3759 = vsel %vm3679, %v3469, 0.0
        %v3760 = vsel %vm3680, %v3472, 0.0
        %v3761 = vsel %vm3681, %v3475, 0.0
        %v3762 = vsel %vm3682, %v3478, 0.0
        %v3763 = vsel %vm3683, %v3481, 0.0
        %v3764 = vsel %vm3684, %v3484, 0.0
        %v3765 = vsel %vm3685, %v3487, 0.0
        %v3766 = vsel %vm3686, %v3490, 0.0
        %v3767 = vsel %vm3687, %v3493, 0.0
        %v3768 = vsel %vm3688, %v3496, 0.0
        %v3769 = vsel %vm3689, %v3499, 0.0
        %v3770 = vsel %vm3690, %v3502, 0.0
        %v3771 = vsel %vm3691, %v3505, 0.0
        %v3772 = vsel %vm3692, %v3508, 0.0
        %v3773 = vsel %vm3693, %v3511, 0.0
        %v3774 = vsel %vm3694, %v3514, 0.0
        %v3775 = vsel %vm3679, %v3517, 0.0
        %v3776 = vsel %vm3680, %v3520, 0.0
        %v3777 = vsel %vm3681, %v3523, 0.0
        %v3778 = vsel %vm3682, %v3526, 0.0
        %v3779 = vsel %vm3683, %v3529, 0.0
        %v3780 = vsel %vm3684, %v3532, 0.0
        %v3781 = vsel %vm3685, %v3535, 0.0
        %v3782 = vsel %vm3686, %v3538, 0.0
        %v3783 = vsel %vm3687, %v3541, 0.0
        %v3784 = vsel %vm3688, %v3544, 0.0
        %v3785 = vsel %vm3689, %v3547, 0.0
        %v3786 = vsel %vm3690, %v3550, 0.0
        %v3787 = vsel %vm3691, %v3553, 0.0
        %v3788 = vsel %vm3692, %v3556, 0.0
        %v3789 = vsel %vm3693, %v3559, 0.0
        %v3790 = vsel %vm3694, %v3562, 0.0
        %v3791 = vsel %vm3679, %v3565, 0.0
        %v3792 = vsel %vm3680, %v3568, 0.0
        %v3793 = vsel %vm3681, %v3571, 0.0
        %v3794 = vsel %vm3682, %v3574, 0.0
        %v3795 = vsel %vm3683, %v3577, 0.0
        %v3796 = vsel %vm3684, %v3580, 0.0
        %v3797 = vsel %vm3685, %v3583, 0.0
        %v3798 = vsel %vm3686, %v3586, 0.0
        %v3799 = vsel %vm3687, %v3589, 0.0
        %v3800 = vsel %vm3688, %v3592, 0.0
        %v3801 = vsel %vm3689, %v3595, 0.0
        %v3802 = vsel %vm3690, %v3598, 0.0
        %v3803 = vsel %vm3691, %v3601, 0.0
        %v3804 = vsel %vm3692, %v3604, 0.0
        %v3805 = vsel %vm3693, %v3607, 0.0
        %v3806 = vsel %vm3694, %v3610, 0.0
        %v3807 = vsel %vm3679, %v3613, 0.0
        %v3808 = vsel %vm3680, %v3616, 0.0
        %v3809 = vsel %vm3681, %v3619, 0.0
        %v3810 = vsel %vm3682, %v3622, 0.0
        %v3811 = vsel %vm3683, %v3625, 0.0
        %v3812 = vsel %vm3684, %v3628, 0.0
        %v3813 = vsel %vm3685, %v3631, 0.0
        %v3814 = vsel %vm3686, %v3634, 0.0
        %v3815 = vsel %vm3687, %v3637, 0.0
        %v3816 = vsel %vm3688, %v3640, 0.0
        %v3817 = vsel %vm3689, %v3643, 0.0
        %v3818 = vsel %vm3690, %v3646, 0.0
        %v3819 = vsel %vm3691, %v3649, 0.0
        %v3820 = vsel %vm3692, %v3652, 0.0
        %v3821 = vsel %vm3693, %v3655, 0.0
        %v3822 = vsel %vm3694, %v3658, 0.0
        %3823 = vadd.xlane.f32.xlu0 %v3695
        %v3824 = vpop.xlane.xlu0 %3823
        %3825 = vadd.xlane.f32.xlu0 %v3696
        %v3826 = vpop.xlane.xlu0 %3825
        %3827 = vadd.xlane.f32.xlu0 %v3697
        %v3828 = vpop.xlane.xlu0 %3827
        %3829 = vadd.xlane.f32.xlu0 %v3698
        %v3830 = vpop.xlane.xlu0 %3829
        %3831 = vadd.xlane.f32.xlu0 %v3699
        %v3832 = vpop.xlane.xlu0 %3831
        %3833 = vadd.xlane.f32.xlu0 %v3700
        %v3834 = vpop.xlane.xlu0 %3833
        %3835 = vadd.xlane.f32.xlu0 %v3701
        %v3836 = vpop.xlane.xlu0 %3835
        %3837 = vadd.xlane.f32.xlu0 %v3702
        %v3838 = vpop.xlane.xlu0 %3837
        %3839 = vadd.xlane.f32.xlu0 %v3703
        %v3840 = vpop.xlane.xlu0 %3839
        %3841 = vadd.xlane.f32.xlu0 %v3704
        %v3842 = vpop.xlane.xlu0 %3841
        %3843 = vadd.xlane.f32.xlu0 %v3705
        %v3844 = vpop.xlane.xlu0 %3843
        %3845 = vadd.xlane.f32.xlu0 %v3706
        %v3846 = vpop.xlane.xlu0 %3845
        %3847 = vadd.xlane.f32.xlu0 %v3707
        %v3848 = vpop.xlane.xlu0 %3847
        %3849 = vadd.xlane.f32.xlu0 %v3708
        %v3850 = vpop.xlane.xlu0 %3849
        %3851 = vadd.xlane.f32.xlu0 %v3709
        %v3852 = vpop.xlane.xlu0 %3851
        %3853 = vadd.xlane.f32.xlu0 %v3710
        %v3854 = vpop.xlane.xlu0 %3853
        %3855 = vadd.xlane.f32.xlu0 %v3711
        %v3856 = vpop.xlane.xlu0 %3855
        %3857 = vadd.xlane.f32.xlu0 %v3712
        %v3858 = vpop.xlane.xlu0 %3857
        %3859 = vadd.xlane.f32.xlu0 %v3713
        %v3860 = vpop.xlane.xlu0 %3859
        %3861 = vadd.xlane.f32.xlu0 %v3714
        %v3862 = vpop.xlane.xlu0 %3861
        %3863 = vadd.xlane.f32.xlu0 %v3715
        %v3864 = vpop.xlane.xlu0 %3863
        %3865 = vadd.xlane.f32.xlu0 %v3716
        %v3866 = vpop.xlane.xlu0 %3865
        %3867 = vadd.xlane.f32.xlu0 %v3717
        %v3868 = vpop.xlane.xlu0 %3867
        %3869 = vadd.xlane.f32.xlu0 %v3718
        %v3870 = vpop.xlane.xlu0 %3869
        %3871 = vadd.xlane.f32.xlu0 %v3719
        %v3872 = vpop.xlane.xlu0 %3871
        %3873 = vadd.xlane.f32.xlu0 %v3720
        %v3874 = vpop.xlane.xlu0 %3873
        %3875 = vadd.xlane.f32.xlu0 %v3721
        %v3876 = vpop.xlane.xlu0 %3875
        %3877 = vadd.xlane.f32.xlu0 %v3722
        %v3878 = vpop.xlane.xlu0 %3877
        %3879 = vadd.xlane.f32.xlu0 %v3723
        %v3880 = vpop.xlane.xlu0 %3879
        %3881 = vadd.xlane.f32.xlu0 %v3724
        %v3882 = vpop.xlane.xlu0 %3881
        %3883 = vadd.xlane.f32.xlu0 %v3725
        %v3884 = vpop.xlane.xlu0 %3883
        %3885 = vadd.xlane.f32.xlu0 %v3726
        %v3886 = vpop.xlane.xlu0 %3885
        %3887 = vadd.xlane.f32.xlu0 %v3727
        %v3888 = vpop.xlane.xlu0 %3887
        %3889 = vadd.xlane.f32.xlu0 %v3728
        %v3890 = vpop.xlane.xlu0 %3889
        %3891 = vadd.xlane.f32.xlu0 %v3729
        %v3892 = vpop.xlane.xlu0 %3891
        %3893 = vadd.xlane.f32.xlu0 %v3730
        %v3894 = vpop.xlane.xlu0 %3893
        %3895 = vadd.xlane.f32.xlu0 %v3731
        %v3896 = vpop.xlane.xlu0 %3895
        %3897 = vadd.xlane.f32.xlu0 %v3732
        %v3898 = vpop.xlane.xlu0 %3897
        %3899 = vadd.xlane.f32.xlu0 %v3733
        %v3900 = vpop.xlane.xlu0 %3899
        %3901 = vadd.xlane.f32.xlu0 %v3734
        %v3902 = vpop.xlane.xlu0 %3901
        %3903 = vadd.xlane.f32.xlu0 %v3735
        %v3904 = vpop.xlane.xlu0 %3903
        %3905 = vadd.xlane.f32.xlu0 %v3736
        %v3906 = vpop.xlane.xlu0 %3905
        %3907 = vadd.xlane.f32.xlu0 %v3737
        %v3908 = vpop.xlane.xlu0 %3907
        %3909 = vadd.xlane.f32.xlu0 %v3738
        %v3910 = vpop.xlane.xlu0 %3909
        %3911 = vadd.xlane.f32.xlu0 %v3739
        %v3912 = vpop.xlane.xlu0 %3911
        %3913 = vadd.xlane.f32.xlu0 %v3740
        %v3914 = vpop.xlane.xlu0 %3913
        %3915 = vadd.xlane.f32.xlu0 %v3741
        %v3916 = vpop.xlane.xlu0 %3915
        %3917 = vadd.xlane.f32.xlu0 %v3742
        %v3918 = vpop.xlane.xlu0 %3917
        %3919 = vadd.xlane.f32.xlu0 %v3743
        %v3920 = vpop.xlane.xlu0 %3919
        %3921 = vadd.xlane.f32.xlu0 %v3744
        %v3922 = vpop.xlane.xlu0 %3921
        %3923 = vadd.xlane.f32.xlu0 %v3745
        %v3924 = vpop.xlane.xlu0 %3923
        %3925 = vadd.xlane.f32.xlu0 %v3746
        %v3926 = vpop.xlane.xlu0 %3925
        %3927 = vadd.xlane.f32.xlu0 %v3747
        %v3928 = vpop.xlane.xlu0 %3927
        %3929 = vadd.xlane.f32.xlu0 %v3748
        %v3930 = vpop.xlane.xlu0 %3929
        %3931 = vadd.xlane.f32.xlu0 %v3749
        %v3932 = vpop.xlane.xlu0 %3931
        %3933 = vadd.xlane.f32.xlu0 %v3750
        %v3934 = vpop.xlane.xlu0 %3933
        %3935 = vadd.xlane.f32.xlu0 %v3751
        %v3936 = vpop.xlane.xlu0 %3935
        %3937 = vadd.xlane.f32.xlu0 %v3752
        %v3938 = vpop.xlane.xlu0 %3937
        %3939 = vadd.xlane.f32.xlu0 %v3753
        %v3940 = vpop.xlane.xlu0 %3939
        %3941 = vadd.xlane.f32.xlu0 %v3754
        %v3942 = vpop.xlane.xlu0 %3941
        %3943 = vadd.xlane.f32.xlu0 %v3755
        %v3944 = vpop.xlane.xlu0 %3943
        %3945 = vadd.xlane.f32.xlu0 %v3756
        %v3946 = vpop.xlane.xlu0 %3945
        %3947 = vadd.xlane.f32.xlu0 %v3757
        %v3948 = vpop.xlane.xlu0 %3947
        %3949 = vadd.xlane.f32.xlu0 %v3758
        %v3950 = vpop.xlane.xlu0 %3949
        %3951 = vadd.xlane.f32.xlu0 %v3759
        %v3952 = vpop.xlane.xlu0 %3951
        %3953 = vadd.xlane.f32.xlu0 %v3760
        %v3954 = vpop.xlane.xlu0 %3953
        %3955 = vadd.xlane.f32.xlu0 %v3761
        %v3956 = vpop.xlane.xlu0 %3955
        %3957 = vadd.xlane.f32.xlu0 %v3762
        %v3958 = vpop.xlane.xlu0 %3957
        %3959 = vadd.xlane.f32.xlu0 %v3763
        %v3960 = vpop.xlane.xlu0 %3959
        %3961 = vadd.xlane.f32.xlu0 %v3764
        %v3962 = vpop.xlane.xlu0 %3961
        %3963 = vadd.xlane.f32.xlu0 %v3765
        %v3964 = vpop.xlane.xlu0 %3963
        %3965 = vadd.xlane.f32.xlu0 %v3766
        %v3966 = vpop.xlane.xlu0 %3965
        %3967 = vadd.xlane.f32.xlu0 %v3767
        %v3968 = vpop.xlane.xlu0 %3967
        %3969 = vadd.xlane.f32.xlu0 %v3768
        %v3970 = vpop.xlane.xlu0 %3969
        %3971 = vadd.xlane.f32.xlu0 %v3769
        %v3972 = vpop.xlane.xlu0 %3971
        %3973 = vadd.xlane.f32.xlu0 %v3770
        %v3974 = vpop.xlane.xlu0 %3973
        %3975 = vadd.xlane.f32.xlu0 %v3771
        %v3976 = vpop.xlane.xlu0 %3975
        %3977 = vadd.xlane.f32.xlu0 %v3772
        %v3978 = vpop.xlane.xlu0 %3977
        %3979 = vadd.xlane.f32.xlu0 %v3773
        %v3980 = vpop.xlane.xlu0 %3979
        %3981 = vadd.xlane.f32.xlu0 %v3774
        %v3982 = vpop.xlane.xlu0 %3981
        %3983 = vadd.xlane.f32.xlu0 %v3775
        %v3984 = vpop.xlane.xlu0 %3983
        %3985 = vadd.xlane.f32.xlu0 %v3776
        %v3986 = vpop.xlane.xlu0 %3985
        %3987 = vadd.xlane.f32.xlu0 %v3777
        %v3988 = vpop.xlane.xlu0 %3987
        %3989 = vadd.xlane.f32.xlu0 %v3778
        %v3990 = vpop.xlane.xlu0 %3989
        %3991 = vadd.xlane.f32.xlu0 %v3779
        %v3992 = vpop.xlane.xlu0 %3991
        %3993 = vadd.xlane.f32.xlu0 %v3780
        %v3994 = vpop.xlane.xlu0 %3993
        %3995 = vadd.xlane.f32.xlu0 %v3781
        %v3996 = vpop.xlane.xlu0 %3995
        %3997 = vadd.xlane.f32.xlu0 %v3782
        %v3998 = vpop.xlane.xlu0 %3997
        %3999 = vadd.xlane.f32.xlu0 %v3783
        %v4000 = vpop.xlane.xlu0 %3999
        %4001 = vadd.xlane.f32.xlu0 %v3784
        %v4002 = vpop.xlane.xlu0 %4001
        %4003 = vadd.xlane.f32.xlu0 %v3785
        %v4004 = vpop.xlane.xlu0 %4003
        %4005 = vadd.xlane.f32.xlu0 %v3786
        %v4006 = vpop.xlane.xlu0 %4005
        %4007 = vadd.xlane.f32.xlu0 %v3787
        %v4008 = vpop.xlane.xlu0 %4007
        %4009 = vadd.xlane.f32.xlu0 %v3788
        %v4010 = vpop.xlane.xlu0 %4009
        %4011 = vadd.xlane.f32.xlu0 %v3789
        %v4012 = vpop.xlane.xlu0 %4011
        %4013 = vadd.xlane.f32.xlu0 %v3790
        %v4014 = vpop.xlane.xlu0 %4013
        %4015 = vadd.xlane.f32.xlu0 %v3791
        %v4016 = vpop.xlane.xlu0 %4015
        %4017 = vadd.xlane.f32.xlu0 %v3792
        %v4018 = vpop.xlane.xlu0 %4017
        %4019 = vadd.xlane.f32.xlu0 %v3793
        %v4020 = vpop.xlane.xlu0 %4019
        %4021 = vadd.xlane.f32.xlu0 %v3794
        %v4022 = vpop.xlane.xlu0 %4021
        %4023 = vadd.xlane.f32.xlu0 %v3795
        %v4024 = vpop.xlane.xlu0 %4023
        %4025 = vadd.xlane.f32.xlu0 %v3796
        %v4026 = vpop.xlane.xlu0 %4025
        %4027 = vadd.xlane.f32.xlu0 %v3797
        %v4028 = vpop.xlane.xlu0 %4027
        %4029 = vadd.xlane.f32.xlu0 %v3798
        %v4030 = vpop.xlane.xlu0 %4029
        %4031 = vadd.xlane.f32.xlu0 %v3799
        %v4032 = vpop.xlane.xlu0 %4031
        %4033 = vadd.xlane.f32.xlu0 %v3800
        %v4034 = vpop.xlane.xlu0 %4033
        %4035 = vadd.xlane.f32.xlu0 %v3801
        %v4036 = vpop.xlane.xlu0 %4035
        %4037 = vadd.xlane.f32.xlu0 %v3802
        %v4038 = vpop.xlane.xlu0 %4037
        %4039 = vadd.xlane.f32.xlu0 %v3803
        %v4040 = vpop.xlane.xlu0 %4039
        %4041 = vadd.xlane.f32.xlu0 %v3804
        %v4042 = vpop.xlane.xlu0 %4041
        %4043 = vadd.xlane.f32.xlu0 %v3805
        %v4044 = vpop.xlane.xlu0 %4043
        %4045 = vadd.xlane.f32.xlu0 %v3806
        %v4046 = vpop.xlane.xlu0 %4045
        %4047 = vadd.xlane.f32.xlu0 %v3807
        %v4048 = vpop.xlane.xlu0 %4047
        %4049 = vadd.xlane.f32.xlu0 %v3808
        %v4050 = vpop.xlane.xlu0 %4049
        %4051 = vadd.xlane.f32.xlu0 %v3809
        %v4052 = vpop.xlane.xlu0 %4051
        %4053 = vadd.xlane.f32.xlu0 %v3810
        %v4054 = vpop.xlane.xlu0 %4053
        %4055 = vadd.xlane.f32.xlu0 %v3811
        %v4056 = vpop.xlane.xlu0 %4055
        %4057 = vadd.xlane.f32.xlu0 %v3812
        %v4058 = vpop.xlane.xlu0 %4057
        %4059 = vadd.xlane.f32.xlu0 %v3813
        %v4060 = vpop.xlane.xlu0 %4059
        %4061 = vadd.xlane.f32.xlu0 %v3814
        %v4062 = vpop.xlane.xlu0 %4061
        %4063 = vadd.xlane.f32.xlu0 %v3815
        %v4064 = vpop.xlane.xlu0 %4063
        %4065 = vadd.xlane.f32.xlu0 %v3816
        %v4066 = vpop.xlane.xlu0 %4065
        %4067 = vadd.xlane.f32.xlu0 %v3817
        %v4068 = vpop.xlane.xlu0 %4067
        %4069 = vadd.xlane.f32.xlu0 %v3818
        %v4070 = vpop.xlane.xlu0 %4069
        %4071 = vadd.xlane.f32.xlu0 %v3819
        %v4072 = vpop.xlane.xlu0 %4071
        %4073 = vadd.xlane.f32.xlu0 %v3820
        %v4074 = vpop.xlane.xlu0 %4073
        %4075 = vadd.xlane.f32.xlu0 %v3821
        %v4076 = vpop.xlane.xlu0 %4075
        %4077 = vadd.xlane.f32.xlu0 %v3822
        %v4078 = vpop.xlane.xlu0 %4077
        %4079 = vmax.xlane.f32.xlu0 %v3277
        %v4080 = vpop.xlane.xlu0 %4079
        %4081 = vmax.xlane.f32.xlu0 %v3280
        %v4082 = vpop.xlane.xlu0 %4081
        %4083 = vmax.xlane.f32.xlu0 %v3283
        %v4084 = vpop.xlane.xlu0 %4083
        %4085 = vmax.xlane.f32.xlu0 %v3286
        %v4086 = vpop.xlane.xlu0 %4085
        %4087 = vmax.xlane.f32.xlu0 %v3289
        %v4088 = vpop.xlane.xlu0 %4087
        %4089 = vmax.xlane.f32.xlu0 %v3292
        %v4090 = vpop.xlane.xlu0 %4089
        %4091 = vmax.xlane.f32.xlu0 %v3295
        %v4092 = vpop.xlane.xlu0 %4091
        %4093 = vmax.xlane.f32.xlu0 %v3298
        %v4094 = vpop.xlane.xlu0 %4093
        %4095 = vmax.xlane.f32.xlu0 %v3301
        %v4096 = vpop.xlane.xlu0 %4095
        %4097 = vmax.xlane.f32.xlu0 %v3304
        %v4098 = vpop.xlane.xlu0 %4097
        %4099 = vmax.xlane.f32.xlu0 %v3307
        %v4100 = vpop.xlane.xlu0 %4099
        %4101 = vmax.xlane.f32.xlu0 %v3310
        %v4102 = vpop.xlane.xlu0 %4101
        %4103 = vmax.xlane.f32.xlu0 %v3313
        %v4104 = vpop.xlane.xlu0 %4103
        %4105 = vmax.xlane.f32.xlu0 %v3316
        %v4106 = vpop.xlane.xlu0 %4105
        %4107 = vmax.xlane.f32.xlu0 %v3319
        %v4108 = vpop.xlane.xlu0 %4107
        %4109 = vmax.xlane.f32.xlu0 %v3322
        %v4110 = vpop.xlane.xlu0 %4109
        %4111 = vmax.xlane.f32.xlu0 %v3325
        %v4112 = vpop.xlane.xlu0 %4111
        %4113 = vmax.xlane.f32.xlu0 %v3328
        %v4114 = vpop.xlane.xlu0 %4113
        %4115 = vmax.xlane.f32.xlu0 %v3331
        %v4116 = vpop.xlane.xlu0 %4115
        %4117 = vmax.xlane.f32.xlu0 %v3334
        %v4118 = vpop.xlane.xlu0 %4117
        %4119 = vmax.xlane.f32.xlu0 %v3337
        %v4120 = vpop.xlane.xlu0 %4119
        %4121 = vmax.xlane.f32.xlu0 %v3340
        %v4122 = vpop.xlane.xlu0 %4121
        %4123 = vmax.xlane.f32.xlu0 %v3343
        %v4124 = vpop.xlane.xlu0 %4123
        %4125 = vmax.xlane.f32.xlu0 %v3346
        %v4126 = vpop.xlane.xlu0 %4125
        %4127 = vmax.xlane.f32.xlu0 %v3349
        %v4128 = vpop.xlane.xlu0 %4127
        %4129 = vmax.xlane.f32.xlu0 %v3352
        %v4130 = vpop.xlane.xlu0 %4129
        %4131 = vmax.xlane.f32.xlu0 %v3355
        %v4132 = vpop.xlane.xlu0 %4131
        %4133 = vmax.xlane.f32.xlu0 %v3358
        %v4134 = vpop.xlane.xlu0 %4133
        %4135 = vmax.xlane.f32.xlu0 %v3361
        %v4136 = vpop.xlane.xlu0 %4135
        %4137 = vmax.xlane.f32.xlu0 %v3364
        %v4138 = vpop.xlane.xlu0 %4137
        %4139 = vmax.xlane.f32.xlu0 %v3367
        %v4140 = vpop.xlane.xlu0 %4139
        %4141 = vmax.xlane.f32.xlu0 %v3370
        %v4142 = vpop.xlane.xlu0 %4141
        %4143 = vmax.xlane.f32.xlu0 %v3373
        %v4144 = vpop.xlane.xlu0 %4143
        %4145 = vmax.xlane.f32.xlu0 %v3376
        %v4146 = vpop.xlane.xlu0 %4145
        %4147 = vmax.xlane.f32.xlu0 %v3379
        %v4148 = vpop.xlane.xlu0 %4147
        %4149 = vmax.xlane.f32.xlu0 %v3382
        %v4150 = vpop.xlane.xlu0 %4149
        %4151 = vmax.xlane.f32.xlu0 %v3385
        %v4152 = vpop.xlane.xlu0 %4151
        %4153 = vmax.xlane.f32.xlu0 %v3388
        %v4154 = vpop.xlane.xlu0 %4153
        %4155 = vmax.xlane.f32.xlu0 %v3391
        %v4156 = vpop.xlane.xlu0 %4155
        %4157 = vmax.xlane.f32.xlu0 %v3394
        %v4158 = vpop.xlane.xlu0 %4157
        %4159 = vmax.xlane.f32.xlu0 %v3397
        %v4160 = vpop.xlane.xlu0 %4159
        %4161 = vmax.xlane.f32.xlu0 %v3400
        %v4162 = vpop.xlane.xlu0 %4161
        %4163 = vmax.xlane.f32.xlu0 %v3403
        %v4164 = vpop.xlane.xlu0 %4163
        %4165 = vmax.xlane.f32.xlu0 %v3406
        %v4166 = vpop.xlane.xlu0 %4165
        %4167 = vmax.xlane.f32.xlu0 %v3409
        %v4168 = vpop.xlane.xlu0 %4167
        %4169 = vmax.xlane.f32.xlu0 %v3412
        %v4170 = vpop.xlane.xlu0 %4169
        %4171 = vmax.xlane.f32.xlu0 %v3415
        %v4172 = vpop.xlane.xlu0 %4171
        %4173 = vmax.xlane.f32.xlu0 %v3418
        %v4174 = vpop.xlane.xlu0 %4173
        %4175 = vmax.xlane.f32.xlu0 %v3421
        %v4176 = vpop.xlane.xlu0 %4175
        %4177 = vmax.xlane.f32.xlu0 %v3424
        %v4178 = vpop.xlane.xlu0 %4177
        %4179 = vmax.xlane.f32.xlu0 %v3427
        %v4180 = vpop.xlane.xlu0 %4179
        %4181 = vmax.xlane.f32.xlu0 %v3430
        %v4182 = vpop.xlane.xlu0 %4181
        %4183 = vmax.xlane.f32.xlu0 %v3433
        %v4184 = vpop.xlane.xlu0 %4183
        %4185 = vmax.xlane.f32.xlu0 %v3436
        %v4186 = vpop.xlane.xlu0 %4185
        %4187 = vmax.xlane.f32.xlu0 %v3439
        %v4188 = vpop.xlane.xlu0 %4187
        %4189 = vmax.xlane.f32.xlu0 %v3442
        %v4190 = vpop.xlane.xlu0 %4189
        %4191 = vmax.xlane.f32.xlu0 %v3445
        %v4192 = vpop.xlane.xlu0 %4191
        %4193 = vmax.xlane.f32.xlu0 %v3448
        %v4194 = vpop.xlane.xlu0 %4193
        %4195 = vmax.xlane.f32.xlu0 %v3451
        %v4196 = vpop.xlane.xlu0 %4195
        %4197 = vmax.xlane.f32.xlu0 %v3454
        %v4198 = vpop.xlane.xlu0 %4197
        %4199 = vmax.xlane.f32.xlu0 %v3457
        %v4200 = vpop.xlane.xlu0 %4199
        %4201 = vmax.xlane.f32.xlu0 %v3460
        %v4202 = vpop.xlane.xlu0 %4201
        %4203 = vmax.xlane.f32.xlu0 %v3463
        %v4204 = vpop.xlane.xlu0 %4203
        %4205 = vmax.xlane.f32.xlu0 %v3466
        %v4206 = vpop.xlane.xlu0 %4205
        %4207 = vmax.xlane.f32.xlu0 %v3469
        %v4208 = vpop.xlane.xlu0 %4207
        %4209 = vmax.xlane.f32.xlu0 %v3472
        %v4210 = vpop.xlane.xlu0 %4209
        %4211 = vmax.xlane.f32.xlu0 %v3475
        %v4212 = vpop.xlane.xlu0 %4211
        %4213 = vmax.xlane.f32.xlu0 %v3478
        %v4214 = vpop.xlane.xlu0 %4213
        %4215 = vmax.xlane.f32.xlu0 %v3481
        %v4216 = vpop.xlane.xlu0 %4215
        %4217 = vmax.xlane.f32.xlu0 %v3484
        %v4218 = vpop.xlane.xlu0 %4217
        %4219 = vmax.xlane.f32.xlu0 %v3487
        %v4220 = vpop.xlane.xlu0 %4219
        %4221 = vmax.xlane.f32.xlu0 %v3490
        %v4222 = vpop.xlane.xlu0 %4221
        %4223 = vmax.xlane.f32.xlu0 %v3493
        %v4224 = vpop.xlane.xlu0 %4223
        %4225 = vmax.xlane.f32.xlu0 %v3496
        %v4226 = vpop.xlane.xlu0 %4225
        %4227 = vmax.xlane.f32.xlu0 %v3499
        %v4228 = vpop.xlane.xlu0 %4227
        %4229 = vmax.xlane.f32.xlu0 %v3502
        %v4230 = vpop.xlane.xlu0 %4229
        %4231 = vmax.xlane.f32.xlu0 %v3505
        %v4232 = vpop.xlane.xlu0 %4231
        %4233 = vmax.xlane.f32.xlu0 %v3508
        %v4234 = vpop.xlane.xlu0 %4233
        %4235 = vmax.xlane.f32.xlu0 %v3511
        %v4236 = vpop.xlane.xlu0 %4235
        %4237 = vmax.xlane.f32.xlu0 %v3514
        %v4238 = vpop.xlane.xlu0 %4237
        %4239 = vmax.xlane.f32.xlu0 %v3517
        %v4240 = vpop.xlane.xlu0 %4239
        %4241 = vmax.xlane.f32.xlu0 %v3520
        %v4242 = vpop.xlane.xlu0 %4241
        %4243 = vmax.xlane.f32.xlu0 %v3523
        %v4244 = vpop.xlane.xlu0 %4243
        %4245 = vmax.xlane.f32.xlu0 %v3526
        %v4246 = vpop.xlane.xlu0 %4245
        %4247 = vmax.xlane.f32.xlu0 %v3529
        %v4248 = vpop.xlane.xlu0 %4247
        %4249 = vmax.xlane.f32.xlu0 %v3532
        %v4250 = vpop.xlane.xlu0 %4249
        %4251 = vmax.xlane.f32.xlu0 %v3535
        %v4252 = vpop.xlane.xlu0 %4251
        %4253 = vmax.xlane.f32.xlu0 %v3538
        %v4254 = vpop.xlane.xlu0 %4253
        %4255 = vmax.xlane.f32.xlu0 %v3541
        %v4256 = vpop.xlane.xlu0 %4255
        %4257 = vmax.xlane.f32.xlu0 %v3544
        %v4258 = vpop.xlane.xlu0 %4257
        %4259 = vmax.xlane.f32.xlu0 %v3547
        %v4260 = vpop.xlane.xlu0 %4259
        %4261 = vmax.xlane.f32.xlu0 %v3550
        %v4262 = vpop.xlane.xlu0 %4261
        %4263 = vmax.xlane.f32.xlu0 %v3553
        %v4264 = vpop.xlane.xlu0 %4263
        %4265 = vmax.xlane.f32.xlu0 %v3556
        %v4266 = vpop.xlane.xlu0 %4265
        %4267 = vmax.xlane.f32.xlu0 %v3559
        %v4268 = vpop.xlane.xlu0 %4267
        %4269 = vmax.xlane.f32.xlu0 %v3562
        %v4270 = vpop.xlane.xlu0 %4269
        %4271 = vmax.xlane.f32.xlu0 %v3565
        %v4272 = vpop.xlane.xlu0 %4271
        %4273 = vmax.xlane.f32.xlu0 %v3568
        %v4274 = vpop.xlane.xlu0 %4273
        %4275 = vmax.xlane.f32.xlu0 %v3571
        %v4276 = vpop.xlane.xlu0 %4275
        %4277 = vmax.xlane.f32.xlu0 %v3574
        %v4278 = vpop.xlane.xlu0 %4277
        %4279 = vmax.xlane.f32.xlu0 %v3577
        %v4280 = vpop.xlane.xlu0 %4279
        %4281 = vmax.xlane.f32.xlu0 %v3580
        %v4282 = vpop.xlane.xlu0 %4281
        %4283 = vmax.xlane.f32.xlu0 %v3583
        %v4284 = vpop.xlane.xlu0 %4283
        %4285 = vmax.xlane.f32.xlu0 %v3586
        %v4286 = vpop.xlane.xlu0 %4285
        %4287 = vmax.xlane.f32.xlu0 %v3589
        %v4288 = vpop.xlane.xlu0 %4287
        %4289 = vmax.xlane.f32.xlu0 %v3592
        %v4290 = vpop.xlane.xlu0 %4289
        %4291 = vmax.xlane.f32.xlu0 %v3595
        %v4292 = vpop.xlane.xlu0 %4291
        %4293 = vmax.xlane.f32.xlu0 %v3598
        %v4294 = vpop.xlane.xlu0 %4293
        %4295 = vmax.xlane.f32.xlu0 %v3601
        %v4296 = vpop.xlane.xlu0 %4295
        %4297 = vmax.xlane.f32.xlu0 %v3604
        %v4298 = vpop.xlane.xlu0 %4297
        %4299 = vmax.xlane.f32.xlu0 %v3607
        %v4300 = vpop.xlane.xlu0 %4299
        %4301 = vmax.xlane.f32.xlu0 %v3610
        %v4302 = vpop.xlane.xlu0 %4301
        %4303 = vmax.xlane.f32.xlu0 %v3613
        %v4304 = vpop.xlane.xlu0 %4303
        %4305 = vmax.xlane.f32.xlu0 %v3616
        %v4306 = vpop.xlane.xlu0 %4305
        %4307 = vmax.xlane.f32.xlu0 %v3619
        %v4308 = vpop.xlane.xlu0 %4307
        %4309 = vmax.xlane.f32.xlu0 %v3622
        %v4310 = vpop.xlane.xlu0 %4309
        %4311 = vmax.xlane.f32.xlu0 %v3625
        %v4312 = vpop.xlane.xlu0 %4311
        %4313 = vmax.xlane.f32.xlu0 %v3628
        %v4314 = vpop.xlane.xlu0 %4313
        %4315 = vmax.xlane.f32.xlu0 %v3631
        %v4316 = vpop.xlane.xlu0 %4315
        %4317 = vmax.xlane.f32.xlu0 %v3634
        %v4318 = vpop.xlane.xlu0 %4317
        %4319 = vmax.xlane.f32.xlu0 %v3637
        %v4320 = vpop.xlane.xlu0 %4319
        %4321 = vmax.xlane.f32.xlu0 %v3640
        %v4322 = vpop.xlane.xlu0 %4321
        %4323 = vmax.xlane.f32.xlu0 %v3643
        %v4324 = vpop.xlane.xlu0 %4323
        %4325 = vmax.xlane.f32.xlu0 %v3646
        %v4326 = vpop.xlane.xlu0 %4325
        %4327 = vmax.xlane.f32.xlu0 %v3649
        %v4328 = vpop.xlane.xlu0 %4327
        %4329 = vmax.xlane.f32.xlu0 %v3652
        %v4330 = vpop.xlane.xlu0 %4329
        %4331 = vmax.xlane.f32.xlu0 %v3655
        %v4332 = vpop.xlane.xlu0 %4331
        %4333 = vmax.xlane.f32.xlu0 %v3658
        %v4334 = vpop.xlane.xlu0 %4333
        %v4335 = vsub.f32 %v3277, %v4080
        %v4336 = vsub.f32 %v3280, %v4082
        %v4337 = vsub.f32 %v3283, %v4084
        %v4338 = vsub.f32 %v3286, %v4086
        %v4339 = vsub.f32 %v3289, %v4088
        %v4340 = vsub.f32 %v3292, %v4090
        %v4341 = vsub.f32 %v3295, %v4092
        %v4342 = vsub.f32 %v3298, %v4094
        %v4343 = vsub.f32 %v3301, %v4096
        %v4344 = vsub.f32 %v3304, %v4098
        %v4345 = vsub.f32 %v3307, %v4100
        %v4346 = vsub.f32 %v3310, %v4102
        %v4347 = vsub.f32 %v3313, %v4104
        %v4348 = vsub.f32 %v3316, %v4106
        %v4349 = vsub.f32 %v3319, %v4108
        %v4350 = vsub.f32 %v3322, %v4110
        %v4351 = vsub.f32 %v3325, %v4112
        %v4352 = vsub.f32 %v3328, %v4114
        %v4353 = vsub.f32 %v3331, %v4116
        %v4354 = vsub.f32 %v3334, %v4118
        %v4355 = vsub.f32 %v3337, %v4120
        %v4356 = vsub.f32 %v3340, %v4122
        %v4357 = vsub.f32 %v3343, %v4124
        %v4358 = vsub.f32 %v3346, %v4126
        %v4359 = vsub.f32 %v3349, %v4128
        %v4360 = vsub.f32 %v3352, %v4130
        %v4361 = vsub.f32 %v3355, %v4132
        %v4362 = vsub.f32 %v3358, %v4134
        %v4363 = vsub.f32 %v3361, %v4136
        %v4364 = vsub.f32 %v3364, %v4138
        %v4365 = vsub.f32 %v3367, %v4140
        %v4366 = vsub.f32 %v3370, %v4142
        %v4367 = vsub.f32 %v3373, %v4144
        %v4368 = vsub.f32 %v3376, %v4146
        %v4369 = vsub.f32 %v3379, %v4148
        %v4370 = vsub.f32 %v3382, %v4150
        %v4371 = vsub.f32 %v3385, %v4152
        %v4372 = vsub.f32 %v3388, %v4154
        %v4373 = vsub.f32 %v3391, %v4156
        %v4374 = vsub.f32 %v3394, %v4158
        %v4375 = vsub.f32 %v3397, %v4160
        %v4376 = vsub.f32 %v3400, %v4162
        %v4377 = vsub.f32 %v3403, %v4164
        %v4378 = vsub.f32 %v3406, %v4166
        %v4379 = vsub.f32 %v3409, %v4168
        %v4380 = vsub.f32 %v3412, %v4170
        %v4381 = vsub.f32 %v3415, %v4172
        %v4382 = vsub.f32 %v3418, %v4174
        %v4383 = vsub.f32 %v3421, %v4176
        %v4384 = vsub.f32 %v3424, %v4178
        %v4385 = vsub.f32 %v3427, %v4180
        %v4386 = vsub.f32 %v3430, %v4182
        %v4387 = vsub.f32 %v3433, %v4184
        %v4388 = vsub.f32 %v3436, %v4186
        %v4389 = vsub.f32 %v3439, %v4188
        %v4390 = vsub.f32 %v3442, %v4190
        %v4391 = vsub.f32 %v3445, %v4192
        %v4392 = vsub.f32 %v3448, %v4194
        %v4393 = vsub.f32 %v3451, %v4196
        %v4394 = vsub.f32 %v3454, %v4198
        %v4395 = vsub.f32 %v3457, %v4200
        %v4396 = vsub.f32 %v3460, %v4202
        %v4397 = vsub.f32 %v3463, %v4204
        %v4398 = vsub.f32 %v3466, %v4206
        %v4399 = vsub.f32 %v3469, %v4208
        %v4400 = vsub.f32 %v3472, %v4210
        %v4401 = vsub.f32 %v3475, %v4212
        %v4402 = vsub.f32 %v3478, %v4214
        %v4403 = vsub.f32 %v3481, %v4216
        %v4404 = vsub.f32 %v3484, %v4218
        %v4405 = vsub.f32 %v3487, %v4220
        %v4406 = vsub.f32 %v3490, %v4222
        %v4407 = vsub.f32 %v3493, %v4224
        %v4408 = vsub.f32 %v3496, %v4226
        %v4409 = vsub.f32 %v3499, %v4228
        %v4410 = vsub.f32 %v3502, %v4230
        %v4411 = vsub.f32 %v3505, %v4232
        %v4412 = vsub.f32 %v3508, %v4234
        %v4413 = vsub.f32 %v3511, %v4236
        %v4414 = vsub.f32 %v3514, %v4238
        %v4415 = vsub.f32 %v3517, %v4240
        %v4416 = vsub.f32 %v3520, %v4242
        %v4417 = vsub.f32 %v3523, %v4244
        %v4418 = vsub.f32 %v3526, %v4246
        %v4419 = vsub.f32 %v3529, %v4248
        %v4420 = vsub.f32 %v3532, %v4250
        %v4421 = vsub.f32 %v3535, %v4252
        %v4422 = vsub.f32 %v3538, %v4254
        %v4423 = vsub.f32 %v3541, %v4256
        %v4424 = vsub.f32 %v3544, %v4258
        %v4425 = vsub.f32 %v3547, %v4260
        %v4426 = vsub.f32 %v3550, %v4262
        %v4427 = vsub.f32 %v3553, %v4264
        %v4428 = vsub.f32 %v3556, %v4266
        %v4429 = vsub.f32 %v3559, %v4268
        %v4430 = vsub.f32 %v3562, %v4270
        %v4431 = vsub.f32 %v3565, %v4272
        %v4432 = vsub.f32 %v3568, %v4274
        %v4433 = vsub.f32 %v3571, %v4276
        %v4434 = vsub.f32 %v3574, %v4278
        %v4435 = vsub.f32 %v3577, %v4280
        %v4436 = vsub.f32 %v3580, %v4282
        %v4437 = vsub.f32 %v3583, %v4284
        %v4438 = vsub.f32 %v3586, %v4286
        %v4439 = vsub.f32 %v3589, %v4288
        %v4440 = vsub.f32 %v3592, %v4290
        %v4441 = vsub.f32 %v3595, %v4292
        %v4442 = vsub.f32 %v3598, %v4294
        %v4443 = vsub.f32 %v3601, %v4296
        %v4444 = vsub.f32 %v3604, %v4298
        %v4445 = vsub.f32 %v3607, %v4300
        %v4446 = vsub.f32 %v3610, %v4302
        %v4447 = vsub.f32 %v3613, %v4304
        %v4448 = vsub.f32 %v3616, %v4306
        %v4449 = vsub.f32 %v3619, %v4308
        %v4450 = vsub.f32 %v3622, %v4310
        %v4451 = vsub.f32 %v3625, %v4312
        %v4452 = vsub.f32 %v3628, %v4314
        %v4453 = vsub.f32 %v3631, %v4316
        %v4454 = vsub.f32 %v3634, %v4318
        %v4455 = vsub.f32 %v3637, %v4320
        %v4456 = vsub.f32 %v3640, %v4322
        %v4457 = vsub.f32 %v3643, %v4324
        %v4458 = vsub.f32 %v3646, %v4326
        %v4459 = vsub.f32 %v3649, %v4328
        %v4460 = vsub.f32 %v3652, %v4330
        %v4461 = vsub.f32 %v3655, %v4332
        %v4462 = vsub.f32 %v3658, %v4334
        %v4463 = vmul.f32 %v4335, 1.442695
        %v4464 = vpow.pop %v4463
        %v4465 = vmul.f32 %v4336, 1.442695
        %v4466 = vpow.pop %v4465
        %v4467 = vmul.f32 %v4337, 1.442695
        %v4468 = vpow.pop %v4467
        %v4469 = vmul.f32 %v4338, 1.442695
        %v4470 = vpow.pop %v4469
        %v4471 = vmul.f32 %v4339, 1.442695
        %v4472 = vpow.pop %v4471
        %v4473 = vmul.f32 %v4340, 1.442695
        %v4474 = vpow.pop %v4473
        %v4475 = vmul.f32 %v4341, 1.442695
        %v4476 = vpow.pop %v4475
        %v4477 = vmul.f32 %v4342, 1.442695
        %v4478 = vpow.pop %v4477
        %v4479 = vmul.f32 %v4343, 1.442695
        %v4480 = vpow.pop %v4479
        %v4481 = vmul.f32 %v4344, 1.442695
        %v4482 = vpow.pop %v4481
        %v4483 = vmul.f32 %v4345, 1.442695
        %v4484 = vpow.pop %v4483
        %v4485 = vmul.f32 %v4346, 1.442695
        %v4486 = vpow.pop %v4485
        %v4487 = vmul.f32 %v4347, 1.442695
        %v4488 = vpow.pop %v4487
        %v4489 = vmul.f32 %v4348, 1.442695
        %v4490 = vpow.pop %v4489
        %v4491 = vmul.f32 %v4349, 1.442695
        %v4492 = vpow.pop %v4491
        %v4493 = vmul.f32 %v4350, 1.442695
        %v4494 = vpow.pop %v4493
        %v4495 = vmul.f32 %v4351, 1.442695
        %v4496 = vpow.pop %v4495
        %v4497 = vmul.f32 %v4352, 1.442695
        %v4498 = vpow.pop %v4497
        %v4499 = vmul.f32 %v4353, 1.442695
        %v4500 = vpow.pop %v4499
        %v4501 = vmul.f32 %v4354, 1.442695
        %v4502 = vpow.pop %v4501
        %v4503 = vmul.f32 %v4355, 1.442695
        %v4504 = vpow.pop %v4503
        %v4505 = vmul.f32 %v4356, 1.442695
        %v4506 = vpow.pop %v4505
        %v4507 = vmul.f32 %v4357, 1.442695
        %v4508 = vpow.pop %v4507
        %v4509 = vmul.f32 %v4358, 1.442695
        %v4510 = vpow.pop %v4509
        %v4511 = vmul.f32 %v4359, 1.442695
        %v4512 = vpow.pop %v4511
        %v4513 = vmul.f32 %v4360, 1.442695
        %v4514 = vpow.pop %v4513
        %v4515 = vmul.f32 %v4361, 1.442695
        %v4516 = vpow.pop %v4515
        %v4517 = vmul.f32 %v4362, 1.442695
        %v4518 = vpow.pop %v4517
        %v4519 = vmul.f32 %v4363, 1.442695
        %v4520 = vpow.pop %v4519
        %v4521 = vmul.f32 %v4364, 1.442695
        %v4522 = vpow.pop %v4521
        %v4523 = vmul.f32 %v4365, 1.442695
        %v4524 = vpow.pop %v4523
        %v4525 = vmul.f32 %v4366, 1.442695
        %v4526 = vpow.pop %v4525
        %v4527 = vmul.f32 %v4367, 1.442695
        %v4528 = vpow.pop %v4527
        %v4529 = vmul.f32 %v4368, 1.442695
        %v4530 = vpow.pop %v4529
        %v4531 = vmul.f32 %v4369, 1.442695
        %v4532 = vpow.pop %v4531
        %v4533 = vmul.f32 %v4370, 1.442695
        %v4534 = vpow.pop %v4533
        %v4535 = vmul.f32 %v4371, 1.442695
        %v4536 = vpow.pop %v4535
        %v4537 = vmul.f32 %v4372, 1.442695
        %v4538 = vpow.pop %v4537
        %v4539 = vmul.f32 %v4373, 1.442695
        %v4540 = vpow.pop %v4539
        %v4541 = vmul.f32 %v4374, 1.442695
        %v4542 = vpow.pop %v4541
        %v4543 = vmul.f32 %v4375, 1.442695
        %v4544 = vpow.pop %v4543
        %v4545 = vmul.f32 %v4376, 1.442695
        %v4546 = vpow.pop %v4545
        %v4547 = vmul.f32 %v4377, 1.442695
        %v4548 = vpow.pop %v4547
        %v4549 = vmul.f32 %v4378, 1.442695
        %v4550 = vpow.pop %v4549
        %v4551 = vmul.f32 %v4379, 1.442695
        %v4552 = vpow.pop %v4551
        %v4553 = vmul.f32 %v4380, 1.442695
        %v4554 = vpow.pop %v4553
        %v4555 = vmul.f32 %v4381, 1.442695
        %v4556 = vpow.pop %v4555
        %v4557 = vmul.f32 %v4382, 1.442695
        %v4558 = vpow.pop %v4557
        %v4559 = vmul.f32 %v4383, 1.442695
        %v4560 = vpow.pop %v4559
        %v4561 = vmul.f32 %v4384, 1.442695
        %v4562 = vpow.pop %v4561
        %v4563 = vmul.f32 %v4385, 1.442695
        %v4564 = vpow.pop %v4563
        %v4565 = vmul.f32 %v4386, 1.442695
        %v4566 = vpow.pop %v4565
        %v4567 = vmul.f32 %v4387, 1.442695
        %v4568 = vpow.pop %v4567
        %v4569 = vmul.f32 %v4388, 1.442695
        %v4570 = vpow.pop %v4569
        %v4571 = vmul.f32 %v4389, 1.442695
        %v4572 = vpow.pop %v4571
        %v4573 = vmul.f32 %v4390, 1.442695
        %v4574 = vpow.pop %v4573
        %v4575 = vmul.f32 %v4391, 1.442695
        %v4576 = vpow.pop %v4575
        %v4577 = vmul.f32 %v4392, 1.442695
        %v4578 = vpow.pop %v4577
        %v4579 = vmul.f32 %v4393, 1.442695
        %v4580 = vpow.pop %v4579
        %v4581 = vmul.f32 %v4394, 1.442695
        %v4582 = vpow.pop %v4581
        %v4583 = vmul.f32 %v4395, 1.442695
        %v4584 = vpow.pop %v4583
        %v4585 = vmul.f32 %v4396, 1.442695
        %v4586 = vpow.pop %v4585
        %v4587 = vmul.f32 %v4397, 1.442695
        %v4588 = vpow.pop %v4587
        %v4589 = vmul.f32 %v4398, 1.442695
        %v4590 = vpow.pop %v4589
        %v4591 = vmul.f32 %v4399, 1.442695
        %v4592 = vpow.pop %v4591
        %v4593 = vmul.f32 %v4400, 1.442695
        %v4594 = vpow.pop %v4593
        %v4595 = vmul.f32 %v4401, 1.442695
        %v4596 = vpow.pop %v4595
        %v4597 = vmul.f32 %v4402, 1.442695
        %v4598 = vpow.pop %v4597
        %v4599 = vmul.f32 %v4403, 1.442695
        %v4600 = vpow.pop %v4599
        %v4601 = vmul.f32 %v4404, 1.442695
        %v4602 = vpow.pop %v4601
        %v4603 = vmul.f32 %v4405, 1.442695
        %v4604 = vpow.pop %v4603
        %v4605 = vmul.f32 %v4406, 1.442695
        %v4606 = vpow.pop %v4605
        %v4607 = vmul.f32 %v4407, 1.442695
        %v4608 = vpow.pop %v4607
        %v4609 = vmul.f32 %v4408, 1.442695
        %v4610 = vpow.pop %v4609
        %v4611 = vmul.f32 %v4409, 1.442695
        %v4612 = vpow.pop %v4611
        %v4613 = vmul.f32 %v4410, 1.442695
        %v4614 = vpow.pop %v4613
        %v4615 = vmul.f32 %v4411, 1.442695
        %v4616 = vpow.pop %v4615
        %v4617 = vmul.f32 %v4412, 1.442695
        %v4618 = vpow.pop %v4617
        %v4619 = vmul.f32 %v4413, 1.442695
        %v4620 = vpow.pop %v4619
        %v4621 = vmul.f32 %v4414, 1.442695
        %v4622 = vpow.pop %v4621
        %v4623 = vmul.f32 %v4415, 1.442695
        %v4624 = vpow.pop %v4623
        %v4625 = vmul.f32 %v4416, 1.442695
        %v4626 = vpow.pop %v4625
        %v4627 = vmul.f32 %v4417, 1.442695
        %v4628 = vpow.pop %v4627
        %v4629 = vmul.f32 %v4418, 1.442695
        %v4630 = vpow.pop %v4629
        %v4631 = vmul.f32 %v4419, 1.442695
        %v4632 = vpow.pop %v4631
        %v4633 = vmul.f32 %v4420, 1.442695
        %v4634 = vpow.pop %v4633
        %v4635 = vmul.f32 %v4421, 1.442695
        %v4636 = vpow.pop %v4635
        %v4637 = vmul.f32 %v4422, 1.442695
        %v4638 = vpow.pop %v4637
        %v4639 = vmul.f32 %v4423, 1.442695
        %v4640 = vpow.pop %v4639
        %v4641 = vmul.f32 %v4424, 1.442695
        %v4642 = vpow.pop %v4641
        %v4643 = vmul.f32 %v4425, 1.442695
        %v4644 = vpow.pop %v4643
        %v4645 = vmul.f32 %v4426, 1.442695
        %v4646 = vpow.pop %v4645
        %v4647 = vmul.f32 %v4427, 1.442695
        %v4648 = vpow.pop %v4647
        %v4649 = vmul.f32 %v4428, 1.442695
        %v4650 = vpow.pop %v4649
        %v4651 = vmul.f32 %v4429, 1.442695
        %v4652 = vpow.pop %v4651
        %v4653 = vmul.f32 %v4430, 1.442695
        %v4654 = vpow.pop %v4653
        %v4655 = vmul.f32 %v4431, 1.442695
        %v4656 = vpow.pop %v4655
        %v4657 = vmul.f32 %v4432, 1.442695
        %v4658 = vpow.pop %v4657
        %v4659 = vmul.f32 %v4433, 1.442695
        %v4660 = vpow.pop %v4659
        %v4661 = vmul.f32 %v4434, 1.442695
        %v4662 = vpow.pop %v4661
        %v4663 = vmul.f32 %v4435, 1.442695
        %v4664 = vpow.pop %v4663
        %v4665 = vmul.f32 %v4436, 1.442695
        %v4666 = vpow.pop %v4665
        %v4667 = vmul.f32 %v4437, 1.442695
        %v4668 = vpow.pop %v4667
        %v4669 = vmul.f32 %v4438, 1.442695
        %v4670 = vpow.pop %v4669
        %v4671 = vmul.f32 %v4439, 1.442695
        %v4672 = vpow.pop %v4671
        %v4673 = vmul.f32 %v4440, 1.442695
        %v4674 = vpow.pop %v4673
        %v4675 = vmul.f32 %v4441, 1.442695
        %v4676 = vpow.pop %v4675
        %v4677 = vmul.f32 %v4442, 1.442695
        %v4678 = vpow.pop %v4677
        %v4679 = vmul.f32 %v4443, 1.442695
        %v4680 = vpow.pop %v4679
        %v4681 = vmul.f32 %v4444, 1.442695
        %v4682 = vpow.pop %v4681
        %v4683 = vmul.f32 %v4445, 1.442695
        %v4684 = vpow.pop %v4683
        %v4685 = vmul.f32 %v4446, 1.442695
        %v4686 = vpow.pop %v4685
        %v4687 = vmul.f32 %v4447, 1.442695
        %v4688 = vpow.pop %v4687
        %v4689 = vmul.f32 %v4448, 1.442695
        %v4690 = vpow.pop %v4689
        %v4691 = vmul.f32 %v4449, 1.442695
        %v4692 = vpow.pop %v4691
        %v4693 = vmul.f32 %v4450, 1.442695
        %v4694 = vpow.pop %v4693
        %v4695 = vmul.f32 %v4451, 1.442695
        %v4696 = vpow.pop %v4695
        %v4697 = vmul.f32 %v4452, 1.442695
        %v4698 = vpow.pop %v4697
        %v4699 = vmul.f32 %v4453, 1.442695
        %v4700 = vpow.pop %v4699
        %v4701 = vmul.f32 %v4454, 1.442695
        %v4702 = vpow.pop %v4701
        %v4703 = vmul.f32 %v4455, 1.442695
        %v4704 = vpow.pop %v4703
        %v4705 = vmul.f32 %v4456, 1.442695
        %v4706 = vpow.pop %v4705
        %v4707 = vmul.f32 %v4457, 1.442695
        %v4708 = vpow.pop %v4707
        %v4709 = vmul.f32 %v4458, 1.442695
        %v4710 = vpow.pop %v4709
        %v4711 = vmul.f32 %v4459, 1.442695
        %v4712 = vpow.pop %v4711
        %v4713 = vmul.f32 %v4460, 1.442695
        %v4714 = vpow.pop %v4713
        %v4715 = vmul.f32 %v4461, 1.442695
        %v4716 = vpow.pop %v4715
        %v4717 = vmul.f32 %v4462, 1.442695
        %v4718 = vpow.pop %v4717
        %4719 = vadd.xlane.f32.xlu0 %v4464
        %v4720 = vpop.xlane.xlu0 %4719
        %4721 = vadd.xlane.f32.xlu0 %v4466
        %v4722 = vpop.xlane.xlu0 %4721
        %4723 = vadd.xlane.f32.xlu0 %v4468
        %v4724 = vpop.xlane.xlu0 %4723
        %4725 = vadd.xlane.f32.xlu0 %v4470
        %v4726 = vpop.xlane.xlu0 %4725
        %4727 = vadd.xlane.f32.xlu0 %v4472
        %v4728 = vpop.xlane.xlu0 %4727
        %4729 = vadd.xlane.f32.xlu0 %v4474
        %v4730 = vpop.xlane.xlu0 %4729
        %4731 = vadd.xlane.f32.xlu0 %v4476
        %v4732 = vpop.xlane.xlu0 %4731
        %4733 = vadd.xlane.f32.xlu0 %v4478
        %v4734 = vpop.xlane.xlu0 %4733
        %4735 = vadd.xlane.f32.xlu0 %v4480
        %v4736 = vpop.xlane.xlu0 %4735
        %4737 = vadd.xlane.f32.xlu0 %v4482
        %v4738 = vpop.xlane.xlu0 %4737
        %4739 = vadd.xlane.f32.xlu0 %v4484
        %v4740 = vpop.xlane.xlu0 %4739
        %4741 = vadd.xlane.f32.xlu0 %v4486
        %v4742 = vpop.xlane.xlu0 %4741
        %4743 = vadd.xlane.f32.xlu0 %v4488
        %v4744 = vpop.xlane.xlu0 %4743
        %4745 = vadd.xlane.f32.xlu0 %v4490
        %v4746 = vpop.xlane.xlu0 %4745
        %4747 = vadd.xlane.f32.xlu0 %v4492
        %v4748 = vpop.xlane.xlu0 %4747
        %4749 = vadd.xlane.f32.xlu0 %v4494
        %v4750 = vpop.xlane.xlu0 %4749
        %4751 = vadd.xlane.f32.xlu0 %v4496
        %v4752 = vpop.xlane.xlu0 %4751
        %4753 = vadd.xlane.f32.xlu0 %v4498
        %v4754 = vpop.xlane.xlu0 %4753
        %4755 = vadd.xlane.f32.xlu0 %v4500
        %v4756 = vpop.xlane.xlu0 %4755
        %4757 = vadd.xlane.f32.xlu0 %v4502
        %v4758 = vpop.xlane.xlu0 %4757
        %4759 = vadd.xlane.f32.xlu0 %v4504
        %v4760 = vpop.xlane.xlu0 %4759
        %4761 = vadd.xlane.f32.xlu0 %v4506
        %v4762 = vpop.xlane.xlu0 %4761
        %4763 = vadd.xlane.f32.xlu0 %v4508
        %v4764 = vpop.xlane.xlu0 %4763
        %4765 = vadd.xlane.f32.xlu0 %v4510
        %v4766 = vpop.xlane.xlu0 %4765
        %4767 = vadd.xlane.f32.xlu0 %v4512
        %v4768 = vpop.xlane.xlu0 %4767
        %4769 = vadd.xlane.f32.xlu0 %v4514
        %v4770 = vpop.xlane.xlu0 %4769
        %4771 = vadd.xlane.f32.xlu0 %v4516
        %v4772 = vpop.xlane.xlu0 %4771
        %4773 = vadd.xlane.f32.xlu0 %v4518
        %v4774 = vpop.xlane.xlu0 %4773
        %4775 = vadd.xlane.f32.xlu0 %v4520
        %v4776 = vpop.xlane.xlu0 %4775
        %4777 = vadd.xlane.f32.xlu0 %v4522
        %v4778 = vpop.xlane.xlu0 %4777
        %4779 = vadd.xlane.f32.xlu0 %v4524
        %v4780 = vpop.xlane.xlu0 %4779
        %4781 = vadd.xlane.f32.xlu0 %v4526
        %v4782 = vpop.xlane.xlu0 %4781
        %4783 = vadd.xlane.f32.xlu0 %v4528
        %v4784 = vpop.xlane.xlu0 %4783
        %4785 = vadd.xlane.f32.xlu0 %v4530
        %v4786 = vpop.xlane.xlu0 %4785
        %4787 = vadd.xlane.f32.xlu0 %v4532
        %v4788 = vpop.xlane.xlu0 %4787
        %4789 = vadd.xlane.f32.xlu0 %v4534
        %v4790 = vpop.xlane.xlu0 %4789
        %4791 = vadd.xlane.f32.xlu0 %v4536
        %v4792 = vpop.xlane.xlu0 %4791
        %4793 = vadd.xlane.f32.xlu0 %v4538
        %v4794 = vpop.xlane.xlu0 %4793
        %4795 = vadd.xlane.f32.xlu0 %v4540
        %v4796 = vpop.xlane.xlu0 %4795
        %4797 = vadd.xlane.f32.xlu0 %v4542
        %v4798 = vpop.xlane.xlu0 %4797
        %4799 = vadd.xlane.f32.xlu0 %v4544
        %v4800 = vpop.xlane.xlu0 %4799
        %4801 = vadd.xlane.f32.xlu0 %v4546
        %v4802 = vpop.xlane.xlu0 %4801
        %4803 = vadd.xlane.f32.xlu0 %v4548
        %v4804 = vpop.xlane.xlu0 %4803
        %4805 = vadd.xlane.f32.xlu0 %v4550
        %v4806 = vpop.xlane.xlu0 %4805
        %4807 = vadd.xlane.f32.xlu0 %v4552
        %v4808 = vpop.xlane.xlu0 %4807
        %4809 = vadd.xlane.f32.xlu0 %v4554
        %v4810 = vpop.xlane.xlu0 %4809
        %4811 = vadd.xlane.f32.xlu0 %v4556
        %v4812 = vpop.xlane.xlu0 %4811
        %4813 = vadd.xlane.f32.xlu0 %v4558
        %v4814 = vpop.xlane.xlu0 %4813
        %4815 = vadd.xlane.f32.xlu0 %v4560
        %v4816 = vpop.xlane.xlu0 %4815
        %4817 = vadd.xlane.f32.xlu0 %v4562
        %v4818 = vpop.xlane.xlu0 %4817
        %4819 = vadd.xlane.f32.xlu0 %v4564
        %v4820 = vpop.xlane.xlu0 %4819
        %4821 = vadd.xlane.f32.xlu0 %v4566
        %v4822 = vpop.xlane.xlu0 %4821
        %4823 = vadd.xlane.f32.xlu0 %v4568
        %v4824 = vpop.xlane.xlu0 %4823
        %4825 = vadd.xlane.f32.xlu0 %v4570
        %v4826 = vpop.xlane.xlu0 %4825
        %4827 = vadd.xlane.f32.xlu0 %v4572
        %v4828 = vpop.xlane.xlu0 %4827
        %4829 = vadd.xlane.f32.xlu0 %v4574
        %v4830 = vpop.xlane.xlu0 %4829
        %4831 = vadd.xlane.f32.xlu0 %v4576
        %v4832 = vpop.xlane.xlu0 %4831
        %4833 = vadd.xlane.f32.xlu0 %v4578
        %v4834 = vpop.xlane.xlu0 %4833
        %4835 = vadd.xlane.f32.xlu0 %v4580
        %v4836 = vpop.xlane.xlu0 %4835
        %4837 = vadd.xlane.f32.xlu0 %v4582
        %v4838 = vpop.xlane.xlu0 %4837
        %4839 = vadd.xlane.f32.xlu0 %v4584
        %v4840 = vpop.xlane.xlu0 %4839
        %4841 = vadd.xlane.f32.xlu0 %v4586
        %v4842 = vpop.xlane.xlu0 %4841
        %4843 = vadd.xlane.f32.xlu0 %v4588
        %v4844 = vpop.xlane.xlu0 %4843
        %4845 = vadd.xlane.f32.xlu0 %v4590
        %v4846 = vpop.xlane.xlu0 %4845
        %4847 = vadd.xlane.f32.xlu0 %v4592
        %v4848 = vpop.xlane.xlu0 %4847
        %4849 = vadd.xlane.f32.xlu0 %v4594
        %v4850 = vpop.xlane.xlu0 %4849
        %4851 = vadd.xlane.f32.xlu0 %v4596
        %v4852 = vpop.xlane.xlu0 %4851
        %4853 = vadd.xlane.f32.xlu0 %v4598
        %v4854 = vpop.xlane.xlu0 %4853
        %4855 = vadd.xlane.f32.xlu0 %v4600
        %v4856 = vpop.xlane.xlu0 %4855
        %4857 = vadd.xlane.f32.xlu0 %v4602
        %v4858 = vpop.xlane.xlu0 %4857
        %4859 = vadd.xlane.f32.xlu0 %v4604
        %v4860 = vpop.xlane.xlu0 %4859
        %4861 = vadd.xlane.f32.xlu0 %v4606
        %v4862 = vpop.xlane.xlu0 %4861
        %4863 = vadd.xlane.f32.xlu0 %v4608
        %v4864 = vpop.xlane.xlu0 %4863
        %4865 = vadd.xlane.f32.xlu0 %v4610
        %v4866 = vpop.xlane.xlu0 %4865
        %4867 = vadd.xlane.f32.xlu0 %v4612
        %v4868 = vpop.xlane.xlu0 %4867
        %4869 = vadd.xlane.f32.xlu0 %v4614
        %v4870 = vpop.xlane.xlu0 %4869
        %4871 = vadd.xlane.f32.xlu0 %v4616
        %v4872 = vpop.xlane.xlu0 %4871
        %4873 = vadd.xlane.f32.xlu0 %v4618
        %v4874 = vpop.xlane.xlu0 %4873
        %4875 = vadd.xlane.f32.xlu0 %v4620
        %v4876 = vpop.xlane.xlu0 %4875
        %4877 = vadd.xlane.f32.xlu0 %v4622
        %v4878 = vpop.xlane.xlu0 %4877
        %4879 = vadd.xlane.f32.xlu0 %v4624
        %v4880 = vpop.xlane.xlu0 %4879
        %4881 = vadd.xlane.f32.xlu0 %v4626
        %v4882 = vpop.xlane.xlu0 %4881
        %4883 = vadd.xlane.f32.xlu0 %v4628
        %v4884 = vpop.xlane.xlu0 %4883
        %4885 = vadd.xlane.f32.xlu0 %v4630
        %v4886 = vpop.xlane.xlu0 %4885
        %4887 = vadd.xlane.f32.xlu0 %v4632
        %v4888 = vpop.xlane.xlu0 %4887
        %4889 = vadd.xlane.f32.xlu0 %v4634
        %v4890 = vpop.xlane.xlu0 %4889
        %4891 = vadd.xlane.f32.xlu0 %v4636
        %v4892 = vpop.xlane.xlu0 %4891
        %4893 = vadd.xlane.f32.xlu0 %v4638
        %v4894 = vpop.xlane.xlu0 %4893
        %4895 = vadd.xlane.f32.xlu0 %v4640
        %v4896 = vpop.xlane.xlu0 %4895
        %4897 = vadd.xlane.f32.xlu0 %v4642
        %v4898 = vpop.xlane.xlu0 %4897
        %4899 = vadd.xlane.f32.xlu0 %v4644
        %v4900 = vpop.xlane.xlu0 %4899
        %4901 = vadd.xlane.f32.xlu0 %v4646
        %v4902 = vpop.xlane.xlu0 %4901
        %4903 = vadd.xlane.f32.xlu0 %v4648
        %v4904 = vpop.xlane.xlu0 %4903
        %4905 = vadd.xlane.f32.xlu0 %v4650
        %v4906 = vpop.xlane.xlu0 %4905
        %4907 = vadd.xlane.f32.xlu0 %v4652
        %v4908 = vpop.xlane.xlu0 %4907
        %4909 = vadd.xlane.f32.xlu0 %v4654
        %v4910 = vpop.xlane.xlu0 %4909
        %4911 = vadd.xlane.f32.xlu0 %v4656
        %v4912 = vpop.xlane.xlu0 %4911
        %4913 = vadd.xlane.f32.xlu0 %v4658
        %v4914 = vpop.xlane.xlu0 %4913
        %4915 = vadd.xlane.f32.xlu0 %v4660
        %v4916 = vpop.xlane.xlu0 %4915
        %4917 = vadd.xlane.f32.xlu0 %v4662
        %v4918 = vpop.xlane.xlu0 %4917
        %4919 = vadd.xlane.f32.xlu0 %v4664
        %v4920 = vpop.xlane.xlu0 %4919
        %4921 = vadd.xlane.f32.xlu0 %v4666
        %v4922 = vpop.xlane.xlu0 %4921
        %4923 = vadd.xlane.f32.xlu0 %v4668
        %v4924 = vpop.xlane.xlu0 %4923
        %4925 = vadd.xlane.f32.xlu0 %v4670
        %v4926 = vpop.xlane.xlu0 %4925
        %4927 = vadd.xlane.f32.xlu0 %v4672
        %v4928 = vpop.xlane.xlu0 %4927
        %4929 = vadd.xlane.f32.xlu0 %v4674
        %v4930 = vpop.xlane.xlu0 %4929
        %4931 = vadd.xlane.f32.xlu0 %v4676
        %v4932 = vpop.xlane.xlu0 %4931
        %4933 = vadd.xlane.f32.xlu0 %v4678
        %v4934 = vpop.xlane.xlu0 %4933
        %4935 = vadd.xlane.f32.xlu0 %v4680
        %v4936 = vpop.xlane.xlu0 %4935
        %4937 = vadd.xlane.f32.xlu0 %v4682
        %v4938 = vpop.xlane.xlu0 %4937
        %4939 = vadd.xlane.f32.xlu0 %v4684
        %v4940 = vpop.xlane.xlu0 %4939
        %4941 = vadd.xlane.f32.xlu0 %v4686
        %v4942 = vpop.xlane.xlu0 %4941
        %4943 = vadd.xlane.f32.xlu0 %v4688
        %v4944 = vpop.xlane.xlu0 %4943
        %4945 = vadd.xlane.f32.xlu0 %v4690
        %v4946 = vpop.xlane.xlu0 %4945
        %4947 = vadd.xlane.f32.xlu0 %v4692
        %v4948 = vpop.xlane.xlu0 %4947
        %4949 = vadd.xlane.f32.xlu0 %v4694
        %v4950 = vpop.xlane.xlu0 %4949
        %4951 = vadd.xlane.f32.xlu0 %v4696
        %v4952 = vpop.xlane.xlu0 %4951
        %4953 = vadd.xlane.f32.xlu0 %v4698
        %v4954 = vpop.xlane.xlu0 %4953
        %4955 = vadd.xlane.f32.xlu0 %v4700
        %v4956 = vpop.xlane.xlu0 %4955
        %4957 = vadd.xlane.f32.xlu0 %v4702
        %v4958 = vpop.xlane.xlu0 %4957
        %4959 = vadd.xlane.f32.xlu0 %v4704
        %v4960 = vpop.xlane.xlu0 %4959
        %4961 = vadd.xlane.f32.xlu0 %v4706
        %v4962 = vpop.xlane.xlu0 %4961
        %4963 = vadd.xlane.f32.xlu0 %v4708
        %v4964 = vpop.xlane.xlu0 %4963
        %4965 = vadd.xlane.f32.xlu0 %v4710
        %v4966 = vpop.xlane.xlu0 %4965
        %4967 = vadd.xlane.f32.xlu0 %v4712
        %v4968 = vpop.xlane.xlu0 %4967
        %4969 = vadd.xlane.f32.xlu0 %v4714
        %v4970 = vpop.xlane.xlu0 %4969
        %4971 = vadd.xlane.f32.xlu0 %v4716
        %v4972 = vpop.xlane.xlu0 %4971
        %4973 = vadd.xlane.f32.xlu0 %v4718
        %v4974 = vpop.xlane.xlu0 %4973
        %v4975 = vsub.f32 %v3824, %v4080
        %v4976 = vsub.f32 %v3826, %v4082
        %v4977 = vsub.f32 %v3828, %v4084
        %v4978 = vsub.f32 %v3830, %v4086
        %v4979 = vsub.f32 %v3832, %v4088
        %v4980 = vsub.f32 %v3834, %v4090
        %v4981 = vsub.f32 %v3836, %v4092
        %v4982 = vsub.f32 %v3838, %v4094
        %v4983 = vsub.f32 %v3840, %v4096
        %v4984 = vsub.f32 %v3842, %v4098
        %v4985 = vsub.f32 %v3844, %v4100
        %v4986 = vsub.f32 %v3846, %v4102
        %v4987 = vsub.f32 %v3848, %v4104
        %v4988 = vsub.f32 %v3850, %v4106
        %v4989 = vsub.f32 %v3852, %v4108
        %v4990 = vsub.f32 %v3854, %v4110
        %v4991 = vsub.f32 %v3856, %v4112
        %v4992 = vsub.f32 %v3858, %v4114
        %v4993 = vsub.f32 %v3860, %v4116
        %v4994 = vsub.f32 %v3862, %v4118
        %v4995 = vsub.f32 %v3864, %v4120
        %v4996 = vsub.f32 %v3866, %v4122
        %v4997 = vsub.f32 %v3868, %v4124
        %v4998 = vsub.f32 %v3870, %v4126
        %v4999 = vsub.f32 %v3872, %v4128
        %v5000 = vsub.f32 %v3874, %v4130
        %v5001 = vsub.f32 %v3876, %v4132
        %v5002 = vsub.f32 %v3878, %v4134
        %v5003 = vsub.f32 %v3880, %v4136
        %v5004 = vsub.f32 %v3882, %v4138
        %v5005 = vsub.f32 %v3884, %v4140
        %v5006 = vsub.f32 %v3886, %v4142
        %v5007 = vsub.f32 %v3888, %v4144
        %v5008 = vsub.f32 %v3890, %v4146
        %v5009 = vsub.f32 %v3892, %v4148
        %v5010 = vsub.f32 %v3894, %v4150
        %v5011 = vsub.f32 %v3896, %v4152
        %v5012 = vsub.f32 %v3898, %v4154
        %v5013 = vsub.f32 %v3900, %v4156
        %v5014 = vsub.f32 %v3902, %v4158
        %v5015 = vsub.f32 %v3904, %v4160
        %v5016 = vsub.f32 %v3906, %v4162
        %v5017 = vsub.f32 %v3908, %v4164
        %v5018 = vsub.f32 %v3910, %v4166
        %v5019 = vsub.f32 %v3912, %v4168
        %v5020 = vsub.f32 %v3914, %v4170
        %v5021 = vsub.f32 %v3916, %v4172
        %v5022 = vsub.f32 %v3918, %v4174
        %v5023 = vsub.f32 %v3920, %v4176
        %v5024 = vsub.f32 %v3922, %v4178
        %v5025 = vsub.f32 %v3924, %v4180
        %v5026 = vsub.f32 %v3926, %v4182
        %v5027 = vsub.f32 %v3928, %v4184
        %v5028 = vsub.f32 %v3930, %v4186
        %v5029 = vsub.f32 %v3932, %v4188
        %v5030 = vsub.f32 %v3934, %v4190
        %v5031 = vsub.f32 %v3936, %v4192
        %v5032 = vsub.f32 %v3938, %v4194
        %v5033 = vsub.f32 %v3940, %v4196
        %v5034 = vsub.f32 %v3942, %v4198
        %v5035 = vsub.f32 %v3944, %v4200
        %v5036 = vsub.f32 %v3946, %v4202
        %v5037 = vsub.f32 %v3948, %v4204
        %v5038 = vsub.f32 %v3950, %v4206
        %v5039 = vsub.f32 %v3952, %v4208
        %v5040 = vsub.f32 %v3954, %v4210
        %v5041 = vsub.f32 %v3956, %v4212
        %v5042 = vsub.f32 %v3958, %v4214
        %v5043 = vsub.f32 %v3960, %v4216
        %v5044 = vsub.f32 %v3962, %v4218
        %v5045 = vsub.f32 %v3964, %v4220
        %v5046 = vsub.f32 %v3966, %v4222
        %v5047 = vsub.f32 %v3968, %v4224
        %v5048 = vsub.f32 %v3970, %v4226
        %v5049 = vsub.f32 %v3972, %v4228
        %v5050 = vsub.f32 %v3974, %v4230
        %v5051 = vsub.f32 %v3976, %v4232
        %v5052 = vsub.f32 %v3978, %v4234
        %v5053 = vsub.f32 %v3980, %v4236
        %v5054 = vsub.f32 %v3982, %v4238
        %v5055 = vsub.f32 %v3984, %v4240
        %v5056 = vsub.f32 %v3986, %v4242
        %v5057 = vsub.f32 %v3988, %v4244
        %v5058 = vsub.f32 %v3990, %v4246
        %v5059 = vsub.f32 %v3992, %v4248
        %v5060 = vsub.f32 %v3994, %v4250
        %v5061 = vsub.f32 %v3996, %v4252
        %v5062 = vsub.f32 %v3998, %v4254
        %v5063 = vsub.f32 %v4000, %v4256
        %v5064 = vsub.f32 %v4002, %v4258
        %v5065 = vsub.f32 %v4004, %v4260
        %v5066 = vsub.f32 %v4006, %v4262
        %v5067 = vsub.f32 %v4008, %v4264
        %v5068 = vsub.f32 %v4010, %v4266
        %v5069 = vsub.f32 %v4012, %v4268
        %v5070 = vsub.f32 %v4014, %v4270
        %v5071 = vsub.f32 %v4016, %v4272
        %v5072 = vsub.f32 %v4018, %v4274
        %v5073 = vsub.f32 %v4020, %v4276
        %v5074 = vsub.f32 %v4022, %v4278
        %v5075 = vsub.f32 %v4024, %v4280
        %v5076 = vsub.f32 %v4026, %v4282
        %v5077 = vsub.f32 %v4028, %v4284
        %v5078 = vsub.f32 %v4030, %v4286
        %v5079 = vsub.f32 %v4032, %v4288
        %v5080 = vsub.f32 %v4034, %v4290
        %v5081 = vsub.f32 %v4036, %v4292
        %v5082 = vsub.f32 %v4038, %v4294
        %v5083 = vsub.f32 %v4040, %v4296
        %v5084 = vsub.f32 %v4042, %v4298
        %v5085 = vsub.f32 %v4044, %v4300
        %v5086 = vsub.f32 %v4046, %v4302
        %v5087 = vsub.f32 %v4048, %v4304
        %v5088 = vsub.f32 %v4050, %v4306
        %v5089 = vsub.f32 %v4052, %v4308
        %v5090 = vsub.f32 %v4054, %v4310
        %v5091 = vsub.f32 %v4056, %v4312
        %v5092 = vsub.f32 %v4058, %v4314
        %v5093 = vsub.f32 %v4060, %v4316
        %v5094 = vsub.f32 %v4062, %v4318
        %v5095 = vsub.f32 %v4064, %v4320
        %v5096 = vsub.f32 %v4066, %v4322
        %v5097 = vsub.f32 %v4068, %v4324
        %v5098 = vsub.f32 %v4070, %v4326
        %v5099 = vsub.f32 %v4072, %v4328
        %v5100 = vsub.f32 %v4074, %v4330
        %v5101 = vsub.f32 %v4076, %v4332
        %v5102 = vsub.f32 %v4078, %v4334
        %v5103 = vmul.f32 %v4975, 1.442695
        %v5104 = vpow.pop %v5103
        %v5105 = vmul.f32 %v4976, 1.442695
        %v5106 = vpow.pop %v5105
        %v5107 = vmul.f32 %v4977, 1.442695
        %v5108 = vpow.pop %v5107
        %v5109 = vmul.f32 %v4978, 1.442695
        %v5110 = vpow.pop %v5109
        %v5111 = vmul.f32 %v4979, 1.442695
        %v5112 = vpow.pop %v5111
        %v5113 = vmul.f32 %v4980, 1.442695
        %v5114 = vpow.pop %v5113
        %v5115 = vmul.f32 %v4981, 1.442695
        %v5116 = vpow.pop %v5115
        %v5117 = vmul.f32 %v4982, 1.442695
        %v5118 = vpow.pop %v5117
        %v5119 = vmul.f32 %v4983, 1.442695
        %v5120 = vpow.pop %v5119
        %v5121 = vmul.f32 %v4984, 1.442695
        %v5122 = vpow.pop %v5121
        %v5123 = vmul.f32 %v4985, 1.442695
        %v5124 = vpow.pop %v5123
        %v5125 = vmul.f32 %v4986, 1.442695
        %v5126 = vpow.pop %v5125
        %v5127 = vmul.f32 %v4987, 1.442695
        %v5128 = vpow.pop %v5127
        %v5129 = vmul.f32 %v4988, 1.442695
        %v5130 = vpow.pop %v5129
        %v5131 = vmul.f32 %v4989, 1.442695
        %v5132 = vpow.pop %v5131
        %v5133 = vmul.f32 %v4990, 1.442695
        %v5134 = vpow.pop %v5133
        %v5135 = vmul.f32 %v4991, 1.442695
        %v5136 = vpow.pop %v5135
        %v5137 = vmul.f32 %v4992, 1.442695
        %v5138 = vpow.pop %v5137
        %v5139 = vmul.f32 %v4993, 1.442695
        %v5140 = vpow.pop %v5139
        %v5141 = vmul.f32 %v4994, 1.442695
        %v5142 = vpow.pop %v5141
        %v5143 = vmul.f32 %v4995, 1.442695
        %v5144 = vpow.pop %v5143
        %v5145 = vmul.f32 %v4996, 1.442695
        %v5146 = vpow.pop %v5145
        %v5147 = vmul.f32 %v4997, 1.442695
        %v5148 = vpow.pop %v5147
        %v5149 = vmul.f32 %v4998, 1.442695
        %v5150 = vpow.pop %v5149
        %v5151 = vmul.f32 %v4999, 1.442695
        %v5152 = vpow.pop %v5151
        %v5153 = vmul.f32 %v5000, 1.442695
        %v5154 = vpow.pop %v5153
        %v5155 = vmul.f32 %v5001, 1.442695
        %v5156 = vpow.pop %v5155
        %v5157 = vmul.f32 %v5002, 1.442695
        %v5158 = vpow.pop %v5157
        %v5159 = vmul.f32 %v5003, 1.442695
        %v5160 = vpow.pop %v5159
        %v5161 = vmul.f32 %v5004, 1.442695
        %v5162 = vpow.pop %v5161
        %v5163 = vmul.f32 %v5005, 1.442695
        %v5164 = vpow.pop %v5163
        %v5165 = vmul.f32 %v5006, 1.442695
        %v5166 = vpow.pop %v5165
        %v5167 = vmul.f32 %v5007, 1.442695
        %v5168 = vpow.pop %v5167
        %v5169 = vmul.f32 %v5008, 1.442695
        %v5170 = vpow.pop %v5169
        %v5171 = vmul.f32 %v5009, 1.442695
        %v5172 = vpow.pop %v5171
        %v5173 = vmul.f32 %v5010, 1.442695
        %v5174 = vpow.pop %v5173
        %v5175 = vmul.f32 %v5011, 1.442695
        %v5176 = vpow.pop %v5175
        %v5177 = vmul.f32 %v5012, 1.442695
        %v5178 = vpow.pop %v5177
        %v5179 = vmul.f32 %v5013, 1.442695
        %v5180 = vpow.pop %v5179
        %v5181 = vmul.f32 %v5014, 1.442695
        %v5182 = vpow.pop %v5181
        %v5183 = vmul.f32 %v5015, 1.442695
        %v5184 = vpow.pop %v5183
        %v5185 = vmul.f32 %v5016, 1.442695
        %v5186 = vpow.pop %v5185
        %v5187 = vmul.f32 %v5017, 1.442695
        %v5188 = vpow.pop %v5187
        %v5189 = vmul.f32 %v5018, 1.442695
        %v5190 = vpow.pop %v5189
        %v5191 = vmul.f32 %v5019, 1.442695
        %v5192 = vpow.pop %v5191
        %v5193 = vmul.f32 %v5020, 1.442695
        %v5194 = vpow.pop %v5193
        %v5195 = vmul.f32 %v5021, 1.442695
        %v5196 = vpow.pop %v5195
        %v5197 = vmul.f32 %v5022, 1.442695
        %v5198 = vpow.pop %v5197
        %v5199 = vmul.f32 %v5023, 1.442695
        %v5200 = vpow.pop %v5199
        %v5201 = vmul.f32 %v5024, 1.442695
        %v5202 = vpow.pop %v5201
        %v5203 = vmul.f32 %v5025, 1.442695
        %v5204 = vpow.pop %v5203
        %v5205 = vmul.f32 %v5026, 1.442695
        %v5206 = vpow.pop %v5205
        %v5207 = vmul.f32 %v5027, 1.442695
        %v5208 = vpow.pop %v5207
        %v5209 = vmul.f32 %v5028, 1.442695
        %v5210 = vpow.pop %v5209
        %v5211 = vmul.f32 %v5029, 1.442695
        %v5212 = vpow.pop %v5211
        %v5213 = vmul.f32 %v5030, 1.442695
        %v5214 = vpow.pop %v5213
        %v5215 = vmul.f32 %v5031, 1.442695
        %v5216 = vpow.pop %v5215
        %v5217 = vmul.f32 %v5032, 1.442695
        %v5218 = vpow.pop %v5217
        %v5219 = vmul.f32 %v5033, 1.442695
        %v5220 = vpow.pop %v5219
        %v5221 = vmul.f32 %v5034, 1.442695
        %v5222 = vpow.pop %v5221
        %v5223 = vmul.f32 %v5035, 1.442695
        %v5224 = vpow.pop %v5223
        %v5225 = vmul.f32 %v5036, 1.442695
        %v5226 = vpow.pop %v5225
        %v5227 = vmul.f32 %v5037, 1.442695
        %v5228 = vpow.pop %v5227
        %v5229 = vmul.f32 %v5038, 1.442695
        %v5230 = vpow.pop %v5229
        %v5231 = vmul.f32 %v5039, 1.442695
        %v5232 = vpow.pop %v5231
        %v5233 = vmul.f32 %v5040, 1.442695
        %v5234 = vpow.pop %v5233
        %v5235 = vmul.f32 %v5041, 1.442695
        %v5236 = vpow.pop %v5235
        %v5237 = vmul.f32 %v5042, 1.442695
        %v5238 = vpow.pop %v5237
        %v5239 = vmul.f32 %v5043, 1.442695
        %v5240 = vpow.pop %v5239
        %v5241 = vmul.f32 %v5044, 1.442695
        %v5242 = vpow.pop %v5241
        %v5243 = vmul.f32 %v5045, 1.442695
        %v5244 = vpow.pop %v5243
        %v5245 = vmul.f32 %v5046, 1.442695
        %v5246 = vpow.pop %v5245
        %v5247 = vmul.f32 %v5047, 1.442695
        %v5248 = vpow.pop %v5247
        %v5249 = vmul.f32 %v5048, 1.442695
        %v5250 = vpow.pop %v5249
        %v5251 = vmul.f32 %v5049, 1.442695
        %v5252 = vpow.pop %v5251
        %v5253 = vmul.f32 %v5050, 1.442695
        %v5254 = vpow.pop %v5253
        %v5255 = vmul.f32 %v5051, 1.442695
        %v5256 = vpow.pop %v5255
        %v5257 = vmul.f32 %v5052, 1.442695
        %v5258 = vpow.pop %v5257
        %v5259 = vmul.f32 %v5053, 1.442695
        %v5260 = vpow.pop %v5259
        %v5261 = vmul.f32 %v5054, 1.442695
        %v5262 = vpow.pop %v5261
        %v5263 = vmul.f32 %v5055, 1.442695
        %v5264 = vpow.pop %v5263
        %v5265 = vmul.f32 %v5056, 1.442695
        %v5266 = vpow.pop %v5265
        %v5267 = vmul.f32 %v5057, 1.442695
        %v5268 = vpow.pop %v5267
        %v5269 = vmul.f32 %v5058, 1.442695
        %v5270 = vpow.pop %v5269
        %v5271 = vmul.f32 %v5059, 1.442695
        %v5272 = vpow.pop %v5271
        %v5273 = vmul.f32 %v5060, 1.442695
        %v5274 = vpow.pop %v5273
        %v5275 = vmul.f32 %v5061, 1.442695
        %v5276 = vpow.pop %v5275
        %v5277 = vmul.f32 %v5062, 1.442695
        %v5278 = vpow.pop %v5277
        %v5279 = vmul.f32 %v5063, 1.442695
        %v5280 = vpow.pop %v5279
        %v5281 = vmul.f32 %v5064, 1.442695
        %v5282 = vpow.pop %v5281
        %v5283 = vmul.f32 %v5065, 1.442695
        %v5284 = vpow.pop %v5283
        %v5285 = vmul.f32 %v5066, 1.442695
        %v5286 = vpow.pop %v5285
        %v5287 = vmul.f32 %v5067, 1.442695
        %v5288 = vpow.pop %v5287
        %v5289 = vmul.f32 %v5068, 1.442695
        %v5290 = vpow.pop %v5289
        %v5291 = vmul.f32 %v5069, 1.442695
        %v5292 = vpow.pop %v5291
        %v5293 = vmul.f32 %v5070, 1.442695
        %v5294 = vpow.pop %v5293
        %v5295 = vmul.f32 %v5071, 1.442695
        %v5296 = vpow.pop %v5295
        %v5297 = vmul.f32 %v5072, 1.442695
        %v5298 = vpow.pop %v5297
        %v5299 = vmul.f32 %v5073, 1.442695
        %v5300 = vpow.pop %v5299
        %v5301 = vmul.f32 %v5074, 1.442695
        %v5302 = vpow.pop %v5301
        %v5303 = vmul.f32 %v5075, 1.442695
        %v5304 = vpow.pop %v5303
        %v5305 = vmul.f32 %v5076, 1.442695
        %v5306 = vpow.pop %v5305
        %v5307 = vmul.f32 %v5077, 1.442695
        %v5308 = vpow.pop %v5307
        %v5309 = vmul.f32 %v5078, 1.442695
        %v5310 = vpow.pop %v5309
        %v5311 = vmul.f32 %v5079, 1.442695
        %v5312 = vpow.pop %v5311
        %v5313 = vmul.f32 %v5080, 1.442695
        %v5314 = vpow.pop %v5313
        %v5315 = vmul.f32 %v5081, 1.442695
        %v5316 = vpow.pop %v5315
        %v5317 = vmul.f32 %v5082, 1.442695
        %v5318 = vpow.pop %v5317
        %v5319 = vmul.f32 %v5083, 1.442695
        %v5320 = vpow.pop %v5319
        %v5321 = vmul.f32 %v5084, 1.442695
        %v5322 = vpow.pop %v5321
        %v5323 = vmul.f32 %v5085, 1.442695
        %v5324 = vpow.pop %v5323
        %v5325 = vmul.f32 %v5086, 1.442695
        %v5326 = vpow.pop %v5325
        %v5327 = vmul.f32 %v5087, 1.442695
        %v5328 = vpow.pop %v5327
        %v5329 = vmul.f32 %v5088, 1.442695
        %v5330 = vpow.pop %v5329
        %v5331 = vmul.f32 %v5089, 1.442695
        %v5332 = vpow.pop %v5331
        %v5333 = vmul.f32 %v5090, 1.442695
        %v5334 = vpow.pop %v5333
        %v5335 = vmul.f32 %v5091, 1.442695
        %v5336 = vpow.pop %v5335
        %v5337 = vmul.f32 %v5092, 1.442695
        %v5338 = vpow.pop %v5337
        %v5339 = vmul.f32 %v5093, 1.442695
        %v5340 = vpow.pop %v5339
        %v5341 = vmul.f32 %v5094, 1.442695
        %v5342 = vpow.pop %v5341
        %v5343 = vmul.f32 %v5095, 1.442695
        %v5344 = vpow.pop %v5343
        %v5345 = vmul.f32 %v5096, 1.442695
        %v5346 = vpow.pop %v5345
        %v5347 = vmul.f32 %v5097, 1.442695
        %v5348 = vpow.pop %v5347
        %v5349 = vmul.f32 %v5098, 1.442695
        %v5350 = vpow.pop %v5349
        %v5351 = vmul.f32 %v5099, 1.442695
        %v5352 = vpow.pop %v5351
        %v5353 = vmul.f32 %v5100, 1.442695
        %v5354 = vpow.pop %v5353
        %v5355 = vmul.f32 %v5101, 1.442695
        %v5356 = vpow.pop %v5355
        %v5357 = vmul.f32 %v5102, 1.442695
        %v5358 = vpow.pop %v5357
        %v5359 = vrcp.pop %v4720
        %v5360 = vrcp.pop %v4722
        %v5361 = vrcp.pop %v4724
        %v5362 = vrcp.pop %v4726
        %v5363 = vrcp.pop %v4728
        %v5364 = vrcp.pop %v4730
        %v5365 = vrcp.pop %v4732
        %v5366 = vrcp.pop %v4734
        %v5367 = vrcp.pop %v4736
        %v5368 = vrcp.pop %v4738
        %v5369 = vrcp.pop %v4740
        %v5370 = vrcp.pop %v4742
        %v5371 = vrcp.pop %v4744
        %v5372 = vrcp.pop %v4746
        %v5373 = vrcp.pop %v4748
        %v5374 = vrcp.pop %v4750
        %v5375 = vrcp.pop %v4752
        %v5376 = vrcp.pop %v4754
        %v5377 = vrcp.pop %v4756
        %v5378 = vrcp.pop %v4758
        %v5379 = vrcp.pop %v4760
        %v5380 = vrcp.pop %v4762
        %v5381 = vrcp.pop %v4764
        %v5382 = vrcp.pop %v4766
        %v5383 = vrcp.pop %v4768
        %v5384 = vrcp.pop %v4770
        %v5385 = vrcp.pop %v4772
        %v5386 = vrcp.pop %v4774
        %v5387 = vrcp.pop %v4776
        %v5388 = vrcp.pop %v4778
        %v5389 = vrcp.pop %v4780
        %v5390 = vrcp.pop %v4782
        %v5391 = vrcp.pop %v4784
        %v5392 = vrcp.pop %v4786
        %v5393 = vrcp.pop %v4788
        %v5394 = vrcp.pop %v4790
        %v5395 = vrcp.pop %v4792
        %v5396 = vrcp.pop %v4794
        %v5397 = vrcp.pop %v4796
        %v5398 = vrcp.pop %v4798
        %v5399 = vrcp.pop %v4800
        %v5400 = vrcp.pop %v4802
        %v5401 = vrcp.pop %v4804
        %v5402 = vrcp.pop %v4806
        %v5403 = vrcp.pop %v4808
        %v5404 = vrcp.pop %v4810
        %v5405 = vrcp.pop %v4812
        %v5406 = vrcp.pop %v4814
        %v5407 = vrcp.pop %v4816
        %v5408 = vrcp.pop %v4818
        %v5409 = vrcp.pop %v4820
        %v5410 = vrcp.pop %v4822
        %v5411 = vrcp.pop %v4824
        %v5412 = vrcp.pop %v4826
        %v5413 = vrcp.pop %v4828
        %v5414 = vrcp.pop %v4830
        %v5415 = vrcp.pop %v4832
        %v5416 = vrcp.pop %v4834
        %v5417 = vrcp.pop %v4836
        %v5418 = vrcp.pop %v4838
        %v5419 = vrcp.pop %v4840
        %v5420 = vrcp.pop %v4842
        %v5421 = vrcp.pop %v4844
        %v5422 = vrcp.pop %v4846
        %v5423 = vrcp.pop %v4848
        %v5424 = vrcp.pop %v4850
        %v5425 = vrcp.pop %v4852
        %v5426 = vrcp.pop %v4854
        %v5427 = vrcp.pop %v4856
        %v5428 = vrcp.pop %v4858
        %v5429 = vrcp.pop %v4860
        %v5430 = vrcp.pop %v4862
        %v5431 = vrcp.pop %v4864
        %v5432 = vrcp.pop %v4866
        %v5433 = vrcp.pop %v4868
        %v5434 = vrcp.pop %v4870
        %v5435 = vrcp.pop %v4872
        %v5436 = vrcp.pop %v4874
        %v5437 = vrcp.pop %v4876
        %v5438 = vrcp.pop %v4878
        %v5439 = vrcp.pop %v4880
        %v5440 = vrcp.pop %v4882
        %v5441 = vrcp.pop %v4884
        %v5442 = vrcp.pop %v4886
        %v5443 = vrcp.pop %v4888
        %v5444 = vrcp.pop %v4890
        %v5445 = vrcp.pop %v4892
        %v5446 = vrcp.pop %v4894
        %v5447 = vrcp.pop %v4896
        %v5448 = vrcp.pop %v4898
        %v5449 = vrcp.pop %v4900
        %v5450 = vrcp.pop %v4902
        %v5451 = vrcp.pop %v4904
        %v5452 = vrcp.pop %v4906
        %v5453 = vrcp.pop %v4908
        %v5454 = vrcp.pop %v4910
        %v5455 = vrcp.pop %v4912
        %v5456 = vrcp.pop %v4914
        %v5457 = vrcp.pop %v4916
        %v5458 = vrcp.pop %v4918
        %v5459 = vrcp.pop %v4920
        %v5460 = vrcp.pop %v4922
        %v5461 = vrcp.pop %v4924
        %v5462 = vrcp.pop %v4926
        %v5463 = vrcp.pop %v4928
        %v5464 = vrcp.pop %v4930
        %v5465 = vrcp.pop %v4932
        %v5466 = vrcp.pop %v4934
        %v5467 = vrcp.pop %v4936
        %v5468 = vrcp.pop %v4938
        %v5469 = vrcp.pop %v4940
        %v5470 = vrcp.pop %v4942
        %v5471 = vrcp.pop %v4944
        %v5472 = vrcp.pop %v4946
        %v5473 = vrcp.pop %v4948
        %v5474 = vrcp.pop %v4950
        %v5475 = vrcp.pop %v4952
        %v5476 = vrcp.pop %v4954
        %v5477 = vrcp.pop %v4956
        %v5478 = vrcp.pop %v4958
        %v5479 = vrcp.pop %v4960
        %v5480 = vrcp.pop %v4962
        %v5481 = vrcp.pop %v4964
        %v5482 = vrcp.pop %v4966
        %v5483 = vrcp.pop %v4968
        %v5484 = vrcp.pop %v4970
        %v5485 = vrcp.pop %v4972
        %v5486 = vrcp.pop %v4974
        %v5487 = vmul.f32 %v5104, %v5359
        %v5488 = vmul.f32 %v5106, %v5360
        %v5489 = vmul.f32 %v5108, %v5361
        %v5490 = vmul.f32 %v5110, %v5362
        %v5491 = vmul.f32 %v5112, %v5363
        %v5492 = vmul.f32 %v5114, %v5364
        %v5493 = vmul.f32 %v5116, %v5365
        %v5494 = vmul.f32 %v5118, %v5366
        %v5495 = vmul.f32 %v5120, %v5367
        %v5496 = vmul.f32 %v5122, %v5368
        %v5497 = vmul.f32 %v5124, %v5369
        %v5498 = vmul.f32 %v5126, %v5370
        %v5499 = vmul.f32 %v5128, %v5371
        %v5500 = vmul.f32 %v5130, %v5372
        %v5501 = vmul.f32 %v5132, %v5373
        %v5502 = vmul.f32 %v5134, %v5374
        %v5503 = vmul.f32 %v5136, %v5375
        %v5504 = vmul.f32 %v5138, %v5376
        %v5505 = vmul.f32 %v5140, %v5377
        %v5506 = vmul.f32 %v5142, %v5378
        %v5507 = vmul.f32 %v5144, %v5379
        %v5508 = vmul.f32 %v5146, %v5380
        %v5509 = vmul.f32 %v5148, %v5381
        %v5510 = vmul.f32 %v5150, %v5382
        %v5511 = vmul.f32 %v5152, %v5383
        %v5512 = vmul.f32 %v5154, %v5384
        %v5513 = vmul.f32 %v5156, %v5385
        %v5514 = vmul.f32 %v5158, %v5386
        %v5515 = vmul.f32 %v5160, %v5387
        %v5516 = vmul.f32 %v5162, %v5388
        %v5517 = vmul.f32 %v5164, %v5389
        %v5518 = vmul.f32 %v5166, %v5390
        %v5519 = vmul.f32 %v5168, %v5391
        %v5520 = vmul.f32 %v5170, %v5392
        %v5521 = vmul.f32 %v5172, %v5393
        %v5522 = vmul.f32 %v5174, %v5394
        %v5523 = vmul.f32 %v5176, %v5395
        %v5524 = vmul.f32 %v5178, %v5396
        %v5525 = vmul.f32 %v5180, %v5397
        %v5526 = vmul.f32 %v5182, %v5398
        %v5527 = vmul.f32 %v5184, %v5399
        %v5528 = vmul.f32 %v5186, %v5400
        %v5529 = vmul.f32 %v5188, %v5401
        %v5530 = vmul.f32 %v5190, %v5402
        %v5531 = vmul.f32 %v5192, %v5403
        %v5532 = vmul.f32 %v5194, %v5404
        %v5533 = vmul.f32 %v5196, %v5405
        %v5534 = vmul.f32 %v5198, %v5406
        %v5535 = vmul.f32 %v5200, %v5407
        %v5536 = vmul.f32 %v5202, %v5408
        %v5537 = vmul.f32 %v5204, %v5409
        %v5538 = vmul.f32 %v5206, %v5410
        %v5539 = vmul.f32 %v5208, %v5411
        %v5540 = vmul.f32 %v5210, %v5412
        %v5541 = vmul.f32 %v5212, %v5413
        %v5542 = vmul.f32 %v5214, %v5414
        %v5543 = vmul.f32 %v5216, %v5415
        %v5544 = vmul.f32 %v5218, %v5416
        %v5545 = vmul.f32 %v5220, %v5417
        %v5546 = vmul.f32 %v5222, %v5418
        %v5547 = vmul.f32 %v5224, %v5419
        %v5548 = vmul.f32 %v5226, %v5420
        %v5549 = vmul.f32 %v5228, %v5421
        %v5550 = vmul.f32 %v5230, %v5422
        %v5551 = vmul.f32 %v5232, %v5423
        %v5552 = vmul.f32 %v5234, %v5424
        %v5553 = vmul.f32 %v5236, %v5425
        %v5554 = vmul.f32 %v5238, %v5426
        %v5555 = vmul.f32 %v5240, %v5427
        %v5556 = vmul.f32 %v5242, %v5428
        %v5557 = vmul.f32 %v5244, %v5429
        %v5558 = vmul.f32 %v5246, %v5430
        %v5559 = vmul.f32 %v5248, %v5431
        %v5560 = vmul.f32 %v5250, %v5432
        %v5561 = vmul.f32 %v5252, %v5433
        %v5562 = vmul.f32 %v5254, %v5434
        %v5563 = vmul.f32 %v5256, %v5435
        %v5564 = vmul.f32 %v5258, %v5436
        %v5565 = vmul.f32 %v5260, %v5437
        %v5566 = vmul.f32 %v5262, %v5438
        %v5567 = vmul.f32 %v5264, %v5439
        %v5568 = vmul.f32 %v5266, %v5440
        %v5569 = vmul.f32 %v5268, %v5441
        %v5570 = vmul.f32 %v5270, %v5442
        %v5571 = vmul.f32 %v5272, %v5443
        %v5572 = vmul.f32 %v5274, %v5444
        %v5573 = vmul.f32 %v5276, %v5445
        %v5574 = vmul.f32 %v5278, %v5446
        %v5575 = vmul.f32 %v5280, %v5447
        %v5576 = vmul.f32 %v5282, %v5448
        %v5577 = vmul.f32 %v5284, %v5449
        %v5578 = vmul.f32 %v5286, %v5450
        %v5579 = vmul.f32 %v5288, %v5451
        %v5580 = vmul.f32 %v5290, %v5452
        %v5581 = vmul.f32 %v5292, %v5453
        %v5582 = vmul.f32 %v5294, %v5454
        %v5583 = vmul.f32 %v5296, %v5455
        %v5584 = vmul.f32 %v5298, %v5456
        %v5585 = vmul.f32 %v5300, %v5457
        %v5586 = vmul.f32 %v5302, %v5458
        %v5587 = vmul.f32 %v5304, %v5459
        %v5588 = vmul.f32 %v5306, %v5460
        %v5589 = vmul.f32 %v5308, %v5461
        %v5590 = vmul.f32 %v5310, %v5462
        %v5591 = vmul.f32 %v5312, %v5463
        %v5592 = vmul.f32 %v5314, %v5464
        %v5593 = vmul.f32 %v5316, %v5465
        %v5594 = vmul.f32 %v5318, %v5466
        %v5595 = vmul.f32 %v5320, %v5467
        %v5596 = vmul.f32 %v5322, %v5468
        %v5597 = vmul.f32 %v5324, %v5469
        %v5598 = vmul.f32 %v5326, %v5470
        %v5599 = vmul.f32 %v5328, %v5471
        %v5600 = vmul.f32 %v5330, %v5472
        %v5601 = vmul.f32 %v5332, %v5473
        %v5602 = vmul.f32 %v5334, %v5474
        %v5603 = vmul.f32 %v5336, %v5475
        %v5604 = vmul.f32 %v5338, %v5476
        %v5605 = vmul.f32 %v5340, %v5477
        %v5606 = vmul.f32 %v5342, %v5478
        %v5607 = vmul.f32 %v5344, %v5479
        %v5608 = vmul.f32 %v5346, %v5480
        %v5609 = vmul.f32 %v5348, %v5481
        %v5610 = vmul.f32 %v5350, %v5482
        %v5611 = vmul.f32 %v5352, %v5483
        %v5612 = vmul.f32 %v5354, %v5484
        %v5613 = vmul.f32 %v5356, %v5485
        %v5614 = vmul.f32 %v5358, %v5486
        %v5743 = vperm.slane %v5487, %v3678
        %v5744 = vadd.s32 %v3678, 4294967288
        %v5745 = vperm.slane %v5488, %v5744
        %vm5746 = vcmask 130112
        %v5747 = vsel %vm5746, %v5745, %v5743
        %v5748 = vadd.s32 %v3678, 4294967280
        %v5749 = vperm.slane %v5489, %v5748
        %vm5750 = vcmask 195712
        %v5751 = vsel %vm5750, %v5749, %v5747
        %v5752 = vadd.s32 %v3678, 4294967272
        %v5753 = vperm.slane %v5490, %v5752
        %vm5754 = vcmask 261312
        %v5755 = vsel %vm5754, %v5753, %v5751
        %v5756 = vadd.s32 %v3678, 4294967264
        %v5757 = vperm.slane %v5491, %v5756
        %vm5758 = vcmask 326912
        %v5759 = vsel %vm5758, %v5757, %v5755
        %v5760 = vadd.s32 %v3678, 4294967256
        %v5761 = vperm.slane %v5492, %v5760
        %vm5762 = vcmask 392512
        %v5763 = vsel %vm5762, %v5761, %v5759
        %v5764 = vadd.s32 %v3678, 4294967248
        %v5765 = vperm.slane %v5493, %v5764
        %vm5766 = vcmask 458112
        %v5767 = vsel %vm5766, %v5765, %v5763
        %v5768 = vadd.s32 %v3678, 4294967240
        %v5769 = vperm.slane %v5494, %v5768
        %vm5770 = vcmask 523712
        %v5771 = vsel %vm5770, %v5769, %v5767
        %v5772 = vadd.s32 %v3678, 4294967232
        %v5773 = vperm.slane %v5495, %v5772
        %vm5774 = vcmask 589312
        %v5775 = vsel %vm5774, %v5773, %v5771
        %v5776 = vadd.s32 %v3678, 4294967224
        %v5777 = vperm.slane %v5496, %v5776
        %vm5778 = vcmask 654912
        %v5779 = vsel %vm5778, %v5777, %v5775
        %v5780 = vadd.s32 %v3678, 4294967216
        %v5781 = vperm.slane %v5497, %v5780
        %vm5782 = vcmask 720512
        %v5783 = vsel %vm5782, %v5781, %v5779
        %v5784 = vadd.s32 %v3678, 4294967208
        %v5785 = vperm.slane %v5498, %v5784
        %vm5786 = vcmask 786112
        %v5787 = vsel %vm5786, %v5785, %v5783
        %v5788 = vadd.s32 %v3678, 4294967200
        %v5789 = vperm.slane %v5499, %v5788
        %vm5790 = vcmask 851712
        %v5791 = vsel %vm5790, %v5789, %v5787
        %v5792 = vadd.s32 %v3678, 4294967192
        %v5793 = vperm.slane %v5500, %v5792
        %vm5794 = vcmask 917312
        %v5795 = vsel %vm5794, %v5793, %v5791
        %v5796 = vadd.s32 %v3678, 4294967184
        %v5797 = vperm.slane %v5501, %v5796
        %vm5798 = vcmask 982912
        %v5799 = vsel %vm5798, %v5797, %v5795
        %v5800 = vadd.s32 %v3678, 4294967176
        %v5801 = vperm.slane %v5502, %v5800
        %vm5802 = vcmask 1048512
        %v5803 = vsel %vm5802, %v5801, %v5799
        %v5804 = vperm.slane %v5503, %v3678
        %v5805 = vperm.slane %v5504, %v5744
        %v5806 = vsel %vm5746, %v5805, %v5804
        %v5807 = vperm.slane %v5505, %v5748
        %v5808 = vsel %vm5750, %v5807, %v5806
        %v5809 = vperm.slane %v5506, %v5752
        %v5810 = vsel %vm5754, %v5809, %v5808
        %v5811 = vperm.slane %v5507, %v5756
        %v5812 = vsel %vm5758, %v5811, %v5810
        %v5813 = vperm.slane %v5508, %v5760
        %v5814 = vsel %vm5762, %v5813, %v5812
        %v5815 = vperm.slane %v5509, %v5764
        %v5816 = vsel %vm5766, %v5815, %v5814
        %v5817 = vperm.slane %v5510, %v5768
        %v5818 = vsel %vm5770, %v5817, %v5816
        %v5819 = vperm.slane %v5511, %v5772
        %v5820 = vsel %vm5774, %v5819, %v5818
        %v5821 = vperm.slane %v5512, %v5776
        %v5822 = vsel %vm5778, %v5821, %v5820
        %v5823 = vperm.slane %v5513, %v5780
        %v5824 = vsel %vm5782, %v5823, %v5822
        %v5825 = vperm.slane %v5514, %v5784
        %v5826 = vsel %vm5786, %v5825, %v5824
        %v5827 = vperm.slane %v5515, %v5788
        %v5828 = vsel %vm5790, %v5827, %v5826
        %v5829 = vperm.slane %v5516, %v5792
        %v5830 = vsel %vm5794, %v5829, %v5828
        %v5831 = vperm.slane %v5517, %v5796
        %v5832 = vsel %vm5798, %v5831, %v5830
        %v5833 = vperm.slane %v5518, %v5800
        %v5834 = vsel %vm5802, %v5833, %v5832
        %v5835 = vperm.slane %v5519, %v3678
        %v5836 = vperm.slane %v5520, %v5744
        %v5837 = vsel %vm5746, %v5836, %v5835
        %v5838 = vperm.slane %v5521, %v5748
        %v5839 = vsel %vm5750, %v5838, %v5837
        %v5840 = vperm.slane %v5522, %v5752
        %v5841 = vsel %vm5754, %v5840, %v5839
        %v5842 = vperm.slane %v5523, %v5756
        %v5843 = vsel %vm5758, %v5842, %v5841
        %v5844 = vperm.slane %v5524, %v5760
        %v5845 = vsel %vm5762, %v5844, %v5843
        %v5846 = vperm.slane %v5525, %v5764
        %v5847 = vsel %vm5766, %v5846, %v5845
        %v5848 = vperm.slane %v5526, %v5768
        %v5849 = vsel %vm5770, %v5848, %v5847
        %v5850 = vperm.slane %v5527, %v5772
        %v5851 = vsel %vm5774, %v5850, %v5849
        %v5852 = vperm.slane %v5528, %v5776
        %v5853 = vsel %vm5778, %v5852, %v5851
        %v5854 = vperm.slane %v5529, %v5780
        %v5855 = vsel %vm5782, %v5854, %v5853
        %v5856 = vperm.slane %v5530, %v5784
        %v5857 = vsel %vm5786, %v5856, %v5855
        %v5858 = vperm.slane %v5531, %v5788
        %v5859 = vsel %vm5790, %v5858, %v5857
        %v5860 = vperm.slane %v5532, %v5792
        %v5861 = vsel %vm5794, %v5860, %v5859
        %v5862 = vperm.slane %v5533, %v5796
        %v5863 = vsel %vm5798, %v5862, %v5861
        %v5864 = vperm.slane %v5534, %v5800
        %v5865 = vsel %vm5802, %v5864, %v5863
        %v5866 = vperm.slane %v5535, %v3678
        %v5867 = vperm.slane %v5536, %v5744
        %v5868 = vsel %vm5746, %v5867, %v5866
        %v5869 = vperm.slane %v5537, %v5748
        %v5870 = vsel %vm5750, %v5869, %v5868
        %v5871 = vperm.slane %v5538, %v5752
        %v5872 = vsel %vm5754, %v5871, %v5870
        %v5873 = vperm.slane %v5539, %v5756
        %v5874 = vsel %vm5758, %v5873, %v5872
        %v5875 = vperm.slane %v5540, %v5760
        %v5876 = vsel %vm5762, %v5875, %v5874
        %v5877 = vperm.slane %v5541, %v5764
        %v5878 = vsel %vm5766, %v5877, %v5876
        %v5879 = vperm.slane %v5542, %v5768
        %v5880 = vsel %vm5770, %v5879, %v5878
        %v5881 = vperm.slane %v5543, %v5772
        %v5882 = vsel %vm5774, %v5881, %v5880
        %v5883 = vperm.slane %v5544, %v5776
        %v5884 = vsel %vm5778, %v5883, %v5882
        %v5885 = vperm.slane %v5545, %v5780
        %v5886 = vsel %vm5782, %v5885, %v5884
        %v5887 = vperm.slane %v5546, %v5784
        %v5888 = vsel %vm5786, %v5887, %v5886
        %v5889 = vperm.slane %v5547, %v5788
        %v5890 = vsel %vm5790, %v5889, %v5888
        %v5891 = vperm.slane %v5548, %v5792
        %v5892 = vsel %vm5794, %v5891, %v5890
        %v5893 = vperm.slane %v5549, %v5796
        %v5894 = vsel %vm5798, %v5893, %v5892
        %v5895 = vperm.slane %v5550, %v5800
        %v5896 = vsel %vm5802, %v5895, %v5894
        %v5897 = vperm.slane %v5551, %v3678
        %v5898 = vperm.slane %v5552, %v5744
        %v5899 = vsel %vm5746, %v5898, %v5897
        %v5900 = vperm.slane %v5553, %v5748
        %v5901 = vsel %vm5750, %v5900, %v5899
        %v5902 = vperm.slane %v5554, %v5752
        %v5903 = vsel %vm5754, %v5902, %v5901
        %v5904 = vperm.slane %v5555, %v5756
        %v5905 = vsel %vm5758, %v5904, %v5903
        %v5906 = vperm.slane %v5556, %v5760
        %v5907 = vsel %vm5762, %v5906, %v5905
        %v5908 = vperm.slane %v5557, %v5764
        %v5909 = vsel %vm5766, %v5908, %v5907
        %v5910 = vperm.slane %v5558, %v5768
        %v5911 = vsel %vm5770, %v5910, %v5909
        %v5912 = vperm.slane %v5559, %v5772
        %v5913 = vsel %vm5774, %v5912, %v5911
        %v5914 = vperm.slane %v5560, %v5776
        %v5915 = vsel %vm5778, %v5914, %v5913
        %v5916 = vperm.slane %v5561, %v5780
        %v5917 = vsel %vm5782, %v5916, %v5915
        %v5918 = vperm.slane %v5562, %v5784
        %v5919 = vsel %vm5786, %v5918, %v5917
        %v5920 = vperm.slane %v5563, %v5788
        %v5921 = vsel %vm5790, %v5920, %v5919
        %v5922 = vperm.slane %v5564, %v5792
        %v5923 = vsel %vm5794, %v5922, %v5921
        %v5924 = vperm.slane %v5565, %v5796
        %v5925 = vsel %vm5798, %v5924, %v5923
        %v5926 = vperm.slane %v5566, %v5800
        %v5927 = vsel %vm5802, %v5926, %v5925
        %v5928 = vperm.slane %v5567, %v3678
        %v5929 = vperm.slane %v5568, %v5744
        %v5930 = vsel %vm5746, %v5929, %v5928
        %v5931 = vperm.slane %v5569, %v5748
        %v5932 = vsel %vm5750, %v5931, %v5930
        %v5933 = vperm.slane %v5570, %v5752
        %v5934 = vsel %vm5754, %v5933, %v5932
        %v5935 = vperm.slane %v5571, %v5756
        %v5936 = vsel %vm5758, %v5935, %v5934
        %v5937 = vperm.slane %v5572, %v5760
        %v5938 = vsel %vm5762, %v5937, %v5936
        %v5939 = vperm.slane %v5573, %v5764
        %v5940 = vsel %vm5766, %v5939, %v5938
        %v5941 = vperm.slane %v5574, %v5768
        %v5942 = vsel %vm5770, %v5941, %v5940
        %v5943 = vperm.slane %v5575, %v5772
        %v5944 = vsel %vm5774, %v5943, %v5942
        %v5945 = vperm.slane %v5576, %v5776
        %v5946 = vsel %vm5778, %v5945, %v5944
        %v5947 = vperm.slane %v5577, %v5780
        %v5948 = vsel %vm5782, %v5947, %v5946
        %v5949 = vperm.slane %v5578, %v5784
        %v5950 = vsel %vm5786, %v5949, %v5948
        %v5951 = vperm.slane %v5579, %v5788
        %v5952 = vsel %vm5790, %v5951, %v5950
        %v5953 = vperm.slane %v5580, %v5792
        %v5954 = vsel %vm5794, %v5953, %v5952
        %v5955 = vperm.slane %v5581, %v5796
        %v5956 = vsel %vm5798, %v5955, %v5954
        %v5957 = vperm.slane %v5582, %v5800
        %v5958 = vsel %vm5802, %v5957, %v5956
        %v5959 = vperm.slane %v5583, %v3678
        %v5960 = vperm.slane %v5584, %v5744
        %v5961 = vsel %vm5746, %v5960, %v5959
        %v5962 = vperm.slane %v5585, %v5748
        %v5963 = vsel %vm5750, %v5962, %v5961
        %v5964 = vperm.slane %v5586, %v5752
        %v5965 = vsel %vm5754, %v5964, %v5963
        %v5966 = vperm.slane %v5587, %v5756
        %v5967 = vsel %vm5758, %v5966, %v5965
        %v5968 = vperm.slane %v5588, %v5760
        %v5969 = vsel %vm5762, %v5968, %v5967
        %v5970 = vperm.slane %v5589, %v5764
        %v5971 = vsel %vm5766, %v5970, %v5969
        %v5972 = vperm.slane %v5590, %v5768
        %v5973 = vsel %vm5770, %v5972, %v5971
        %v5974 = vperm.slane %v5591, %v5772
        %v5975 = vsel %vm5774, %v5974, %v5973
        %v5976 = vperm.slane %v5592, %v5776
        %v5977 = vsel %vm5778, %v5976, %v5975
        %v5978 = vperm.slane %v5593, %v5780
        %v5979 = vsel %vm5782, %v5978, %v5977
        %v5980 = vperm.slane %v5594, %v5784
        %v5981 = vsel %vm5786, %v5980, %v5979
        %v5982 = vperm.slane %v5595, %v5788
        %v5983 = vsel %vm5790, %v5982, %v5981
        %v5984 = vperm.slane %v5596, %v5792
        %v5985 = vsel %vm5794, %v5984, %v5983
        %v5986 = vperm.slane %v5597, %v5796
        %v5987 = vsel %vm5798, %v5986, %v5985
        %v5988 = vperm.slane %v5598, %v5800
        %v5989 = vsel %vm5802, %v5988, %v5987
        %v5990 = vperm.slane %v5599, %v3678
        %v5991 = vperm.slane %v5600, %v5744
        %v5992 = vsel %vm5746, %v5991, %v5990
        %v5993 = vperm.slane %v5601, %v5748
        %v5994 = vsel %vm5750, %v5993, %v5992
        %v5995 = vperm.slane %v5602, %v5752
        %v5996 = vsel %vm5754, %v5995, %v5994
        %v5997 = vperm.slane %v5603, %v5756
        %v5998 = vsel %vm5758, %v5997, %v5996
        %v5999 = vperm.slane %v5604, %v5760
        %v6000 = vsel %vm5762, %v5999, %v5998
        %v6001 = vperm.slane %v5605, %v5764
        %v6002 = vsel %vm5766, %v6001, %v6000
        %v6003 = vperm.slane %v5606, %v5768
        %v6004 = vsel %vm5770, %v6003, %v6002
        %v6005 = vperm.slane %v5607, %v5772
        %v6006 = vsel %vm5774, %v6005, %v6004
        %v6007 = vperm.slane %v5608, %v5776
        %v6008 = vsel %vm5778, %v6007, %v6006
        %v6009 = vperm.slane %v5609, %v5780
        %v6010 = vsel %vm5782, %v6009, %v6008
        %v6011 = vperm.slane %v5610, %v5784
        %v6012 = vsel %vm5786, %v6011, %v6010
        %v6013 = vperm.slane %v5611, %v5788
        %v6014 = vsel %vm5790, %v6013, %v6012
        %v6015 = vperm.slane %v5612, %v5792
        %v6016 = vsel %vm5794, %v6015, %v6014
        %v6017 = vperm.slane %v5613, %v5796
        %v6018 = vsel %vm5798, %v6017, %v6016
        %v6019 = vperm.slane %v5614, %v5800
        %v6020 = vsel %vm5802, %v6019, %v6018
        %vm6021 = vcmask 1041409
        %v6022 = vsel %vm6021, %v5834, %v5803
        %vm6023 = vcmask 1042434
        %v6024 = vsel %vm6023, %v5865, %v6022
        %vm6025 = vcmask 1043459
        %v6026 = vsel %vm6025, %v5896, %v6024
        %vm6027 = vcmask 1044484
        %v6028 = vsel %vm6027, %v5927, %v6026
        %vm6029 = vcmask 1045509
        %v6030 = vsel %vm6029, %v5958, %v6028
        %vm6031 = vcmask 1046534
        %v6032 = vsel %vm6031, %v5989, %v6030
        %vm6033 = vcmask 1047559
        %v6034 = vsel %vm6033, %v6020, %v6032
        %6036 = vst [vmem:[%s289] sm:$0xff] %v6034
        %s6037 = sand.u32 %s182, 1
        %s6038 = scalar_lea.sflag [#allocation4], %s6037
        %s6039 = sand.u32 %s182, 1
        %s6040 = smul.addr %s6039, 8
        %s6041 = scalar_lea.vmem [#allocation5], %s6040
        // Predicated region
        $region53: #{tpu_custom_call.1} parent=47 // pred_check
          %p6042 = pneg %p192
        $region54: #{tpu_custom_call.1} parent=47 // pred_check_branch
          %6044 = sbr.rel (%p6042) target = $region56
        $region55: #{tpu_custom_call.1} parent=47 // pred_region
          %6046 = vsyncadd %s6038, 0
          %s6047 = smul.addr %s22, 8
          %s6048 = scalar_lea.hbm %s7, %s6047
          %s6050 = sshll.u32 %s6041, 4
          %s6051 = int_to_ptr.vmem [resolvable:$true] %s6050
          %s6052 = sshll.u32 %s6048, 4
          %s6053 = int_to_ptr.hbm [resolvable:$true] %s6052
          %6055 = dma.vmem_to_hbm [thread:$0]  %s6051, 128, %s6053, %s6038
        $region56: #{tpu_custom_call.1} parent=47 // pred_fallthru
          _
      $region48: #{tpu_custom_call.1} parent=5 // pred_fallthru
        _
      %p6056 = scmp.le.s32.totalorder 2, %s17
      // Predicated region
      $region57: #{tpu_custom_call.1} parent=5 // pred_check
        %p6057 = pneg %p6056
      $region58: #{tpu_custom_call.1} parent=5 // pred_check_branch
        %6059 = sbr.rel (%p6057) target = $region60
      $region59: #{tpu_custom_call.1} parent=5 // pred_region
        %s6060 = ssub.s32 %s17, 2
        // Predicated region
        $region61: #{tpu_custom_call.1} parent=59 // pred_check
          %p6061 = pneg %p198
        $region62: #{tpu_custom_call.1} parent=59 // pred_check_branch
          %6063 = sbr.rel (%p6061) target = $region64
        $region63: #{tpu_custom_call.1} parent=59 // pred_region
          %s6064 = sand.u32 %s183, 1
          %s6065 = scalar_lea.sflag [#allocation4], %s6064
          %s6066 = sand.u32 %s183, 1
          %s6067 = smul.addr %s6066, 8
          %s6068 = scalar_lea.vmem [#allocation5], %s6067
          %6070 = dma.done %s6065, 128
        $region64: #{tpu_custom_call.1} parent=59 // pred_fallthru
          _
      $region60: #{tpu_custom_call.1} parent=5 // pred_fallthru
        _
    $region6: #{tpu_custom_call.1} parent=1 // loop_footer
      %s21 = sadd.s32 1, %s17
    $region7: #{tpu_custom_call.1} parent=1 // loop_footer_branch
      %16 = sbr.rel target = $region3
    $region8: #{tpu_custom_call.1} parent=1 // loop_exit
      _
    %6071 = vsyncpa [#allocation3], 1
    %s6072 = scalar_lea.sflag [#allocation3], 1
    %6073 = vsyncpa %s6072, 1
    %6074 = vsyncpa [#allocation4], 1
    %s6075 = scalar_lea.sflag [#allocation4], 1
    %6076 = vsyncpa %s6075, 1

</llo_original>
